<compile_context>
chip_gen: v5e
topology: v5e:2x2
jax: 0.10.0
libtpu: 0.0.40
codegen_flags: <defaults>
</compile_context>

<pallas_src>
import functools

import jax
import jax.numpy as jnp
from jax.experimental import pallas as pl
from jax.experimental.pallas import tpu as pltpu


def _silu(x):
    return x * jax.nn.sigmoid(x)


# ---------------------------------------------------------------------------
# Fused MBConv kernel: one grid step == one image.
# ---------------------------------------------------------------------------
def _mbconv_kernel(x_ref, w_exp_ref, b_exp_ref, w_dw_ref, b_dw_ref,
                   w_se1_ref, b_se1_ref, w_se2_ref, b_se2_ref,
                   w_red_ref, b_red_ref, o_ref, pad_ref,
                   *, H, W, k, pad, has_expand, skip):
    HW = H * W
    Cexp = w_dw_ref.shape[-1]

    x2d = x_ref[...].astype(jnp.float32)                     # (HW, Cin), lane-dense

    # ---- expand_pw: 1x1 conv (BN scale folded into weight) + bias + SiLU -----------
    if has_expand:
        e = jnp.dot(x2d, w_exp_ref[...], preferred_element_type=jnp.float32)
        e = _silu(e + b_exp_ref[...])                        # (HW, Cexp)
    else:
        e = x2d                                              # expansion_factor == 1

    # ---- depthwise KxK conv (stride 1, 'same') via VMEM halo scratch ----------------
    # The padded activation lives entirely in VMEM (no HBM pad pass).
    pad_ref[...] = jnp.zeros_like(pad_ref)
    pad_ref[pad:pad + H, pad:pad + W, :] = e.reshape(H, W, Cexp)
    wk = w_dw_ref[...]                                       # (k, k, Cexp), BN folded
    acc = jnp.zeros((H, W, Cexp), jnp.float32)
    for dh in range(k):
        for dw in range(k):
            acc = acc + pad_ref[dh:dh + H, dw:dw + W, :] * wk[dh, dw].reshape(1, 1, Cexp)
    d = _silu(acc + b_dw_ref[...].reshape(1, 1, Cexp)).reshape(HW, Cexp)

    # ---- squeeze & excitation (fused epilogue, no HBM round trip) -------------------
    pooled = jnp.sum(d, axis=0, keepdims=True) * (1.0 / HW)                 # (1, Cexp)
    h = _silu(jnp.dot(pooled, w_se1_ref[...],
                      preferred_element_type=jnp.float32) + b_se1_ref[...])
    g = jax.nn.sigmoid(jnp.dot(h, w_se2_ref[...],
                               preferred_element_type=jnp.float32) + b_se2_ref[...])
    d = d * g                                                                # gate

    # ---- reduce_pw: 1x1 conv + folded BN (no activation) + fused residual -----------
    y = jnp.dot(d, w_red_ref[...], preferred_element_type=jnp.float32) + b_red_ref[...]
    if skip:
        y = y + x2d                                          # residual (input already resident)
    o_ref[...] = y.astype(o_ref.dtype)


# ---------------------------------------------------------------------------
# Wrapper: NHWC core + NCHW PyTorch-parity interface
# ---------------------------------------------------------------------------
def _full_spec(arr):
    nd = arr.ndim
    return pl.BlockSpec(arr.shape, lambda n, _nd=nd: (0,) * _nd)


def mbconv_forward_nhwc(x_nhwc, p, *, expansion, k, stride=1):
    assert stride == 1  # TODO(synk): strided depthwise path not implemented
    N, H, W, c_in = x_nhwc.shape
    pad = (k - 1) // 2
    HW = H * W
    Cexp = p["w_dw"].shape[-1]
    Cout = p["w_red"].shape[-1]
    has_expand = expansion != 1
    skip = (c_in == Cout and stride == 1)

    x2d = x_nhwc.reshape(N * HW, c_in).astype(jnp.float32)

    kernel = functools.partial(_mbconv_kernel, H=H, W=W, k=k, pad=pad,
                               has_expand=has_expand, skip=skip)

    out2d = pl.pallas_call(
        kernel,
        out_shape=jax.ShapeDtypeStruct((N * HW, Cout), jnp.float32),
        grid=(N,),
        in_specs=[
            pl.BlockSpec((HW, c_in), lambda n: (n, 0)),
            _full_spec(p["w_exp"]), _full_spec(p["b_exp"]),
            _full_spec(p["w_dw"]), _full_spec(p["b_dw"]),
            _full_spec(p["w_se1"]), _full_spec(p["b_se1"]),
            _full_spec(p["w_se2"]), _full_spec(p["b_se2"]),
            _full_spec(p["w_red"]), _full_spec(p["b_red"]),
        ],
        out_specs=pl.BlockSpec((HW, Cout), lambda n: (n, 0)),
        scratch_shapes=[pltpu.VMEM((H + 2 * pad, W + 2 * pad, Cexp), jnp.float32)],
        compiler_params=pltpu.CompilerParams(dimension_semantics=("parallel",)),
    )(x2d, p["w_exp"], p["b_exp"], p["w_dw"], p["b_dw"],
      p["w_se1"], p["b_se1"], p["w_se2"], p["b_se2"],
      p["w_red"], p["b_red"])

    return out2d.reshape(N, H, W, Cout)


def mbconv_forward(x_nchw, p, *, expansion, k, stride=1):
    # PyTorch-parity NCHW interface.
    # TODO(synk): if the surrounding model stays NHWC, call mbconv_forward_nhwc
    # directly and drop both full-tensor transposes.
    x = jnp.transpose(x_nchw, (0, 2, 3, 1))
    y = mbconv_forward_nhwc(x, p, expansion=expansion, k=k, stride=stride)
    return jnp.transpose(y, (0, 3, 1, 2))


# ---------------------------------------------------------------------------
# Parameter init (deterministic synthetic weights; BN scale folded into conv w)
# ---------------------------------------------------------------------------
def _bn_fold(key, c, eps=1e-5):
    k1, k2, k3, k4 = jax.random.split(key, 4)
    gamma = 1.0 + 0.1 * jax.random.normal(k1, (c,), jnp.float32)
    beta = 0.1 * jax.random.normal(k2, (c,), jnp.float32)
    mean = 0.1 * jax.random.normal(k3, (c,), jnp.float32)
    var = jnp.abs(jax.random.normal(k4, (c,), jnp.float32)) + 0.5
    scale = gamma / jnp.sqrt(var + eps)
    bias = beta - mean * scale
    return scale, bias


def init_params(key, n_in, n_out, expansion, k, r):
    expanded = expansion * n_in
    cr = max(1, expanded // r)
    ks = jax.random.split(key, 10)

    def conv_w(kk, shape, fan_in):
        return jax.random.normal(kk, shape, jnp.float32) * (1.0 / jnp.sqrt(fan_in))

    p = {}
    # expand_pw: Conv2d(n_in, expanded, 1, bias=False) + BN + SiLU.  BN scale is folded
    # into the conv weight; only the per-channel bias survives into the kernel.
    s, b = _bn_fold(ks[1], expanded)
    p["w_exp"] = conv_w(ks[0], (n_in, expanded), n_in) * s[None, :]
    p["b_exp"] = b.reshape(1, expanded)
    # depthwise: Conv2d(expanded, expanded, k, groups=expanded, bias=False) + BN + SiLU
    s, b = _bn_fold(ks[3], expanded)
    p["w_dw"] = conv_w(ks[2], (k, k, expanded), k * k) * s[None, None, :]
    p["b_dw"] = b.reshape(1, expanded)
    # SE: Conv2d(expanded, expanded//r, 1) -> SiLU -> Conv2d(expanded//r, expanded, 1) -> sigmoid
    p["w_se1"] = conv_w(ks[4], (expanded, cr), expanded)
    p["b_se1"] = 0.1 * jax.random.normal(ks[5], (1, cr), jnp.float32)
    p["w_se2"] = conv_w(ks[6], (cr, expanded), cr)
    p["b_se2"] = 0.1 * jax.random.normal(ks[7], (1, expanded), jnp.float32)
    # reduce_pw: Conv2d(expanded, n_out, 1, bias=False) + BN (no activation)
    s, b = _bn_fold(ks[9], n_out)
    p["w_red"] = conv_w(ks[8], (expanded, n_out), expanded) * s[None, :]
    p["b_red"] = b.reshape(1, n_out)
    return p


# ---------------------------------------------------------------------------
# Pure-JAX reference (same folded-BN math) for a sanity check
# ---------------------------------------------------------------------------
def _mbconv_reference(x_nchw, p, *, expansion, k):
    x = jnp.transpose(x_nchw, (0, 2, 3, 1)).astype(jnp.float32)
    res = x
    if expansion != 1:
        e = _silu(jnp.einsum('nhwc,cd->nhwd', x, p["w_exp"]) + p["b_exp"].reshape(1, 1, 1, -1))
    else:
        e = x
    pad = (k - 1) // 2
    N, H, W, C = e.shape
    ep = jnp.pad(e, ((0, 0), (pad, pad), (pad, pad), (0, 0)))
    acc = jnp.zeros_like(e)
    for dh in range(k):
        for dw in range(k):
            acc = acc + ep[:, dh:dh + H, dw:dw + W, :] * p["w_dw"][dh, dw].reshape(1, 1, 1, C)
    d = _silu(acc + p["b_dw"].reshape(1, 1, 1, C))
    pooled = d.mean(axis=(1, 2))
    h = _silu(pooled @ p["w_se1"] + p["b_se1"])
    g = jax.nn.sigmoid(h @ p["w_se2"] + p["b_se2"])
    d = d * g[:, None, None, :]
    y = jnp.einsum('nhwc,cd->nhwd', d, p["w_red"]) + p["b_red"].reshape(1, 1, 1, -1)
    if x_nchw.shape[1] == p["w_red"].shape[-1]:
        y = y + res
    return jnp.transpose(y, (0, 3, 1, 2))


if __name__ == "__main__":
    key = jax.random.PRNGKey(0)
    n_in, n_out, expansion, ksize, r = 8, 8, 4, 3, 8
    N, H, W = 2, 16, 16

    k_x, k_p = jax.random.split(key)
    x = jax.random.normal(k_x, (N, n_in, H, W), jnp.float32)   # NCHW, like PyTorch
    params = init_params(k_p, n_in, n_out, expansion, ksize, r)

    fwd = jax.jit(functools.partial(mbconv_forward, expansion=expansion, k=ksize, stride=1))
    out = jax.block_until_ready(fwd(x, params))

    assert out.shape == (N, n_out, H, W)
    assert bool(jnp.all(jnp.isfinite(out)))

    ref = _mbconv_reference(x, params, expansion=expansion, k=ksize)
    assert bool(jnp.allclose(out, ref, atol=5e-2, rtol=5e-2)), \
        f"mismatch vs reference, max abs diff = {float(jnp.max(jnp.abs(out - ref)))}"

    print("KERNEL_OK")
</pallas_src>

<mosaic_0001>
module attributes {stable_mosaic.version = 11 : i64} {
  func.func @_mbconv_kernel(%arg0: i32, %arg1: memref<256x8xf32, #tpu.memory_space<vmem>>, %arg2: memref<8x32xf32, #tpu.memory_space<vmem>>, %arg3: memref<1x32xf32, #tpu.memory_space<vmem>>, %arg4: memref<3x3x32xf32, #tpu.memory_space<vmem>>, %arg5: memref<1x32xf32, #tpu.memory_space<vmem>>, %arg6: memref<32x4xf32, #tpu.memory_space<vmem>>, %arg7: memref<1x4xf32, #tpu.memory_space<vmem>>, %arg8: memref<4x32xf32, #tpu.memory_space<vmem>>, %arg9: memref<1x32xf32, #tpu.memory_space<vmem>>, %arg10: memref<32x8xf32, #tpu.memory_space<vmem>>, %arg11: memref<1x8xf32, #tpu.memory_space<vmem>>, %arg12: memref<256x8xf32, #tpu.memory_space<vmem>>, %arg13: memref<18x18x32xf32, #tpu.memory_space<vmem>>) attributes {dimension_semantics = [#tpu.dimension_semantics<parallel>], iteration_bounds = array<i64: 2>, scalar_prefetch = 0 : i64, scratch_operands = 1 : i64, tpu.core_type = #tpu.core_type<tc>, window_params = [{transform_indices = @transform_0, window_bounds = array<i64: 256, 8>}, {pipeline_mode = #tpu.pipeline_mode<synchronous>, transform_indices = @transform_1, window_bounds = array<i64: 8, 32>}, {pipeline_mode = #tpu.pipeline_mode<synchronous>, transform_indices = @transform_2, window_bounds = array<i64: 1, 32>}, {pipeline_mode = #tpu.pipeline_mode<synchronous>, transform_indices = @transform_3, window_bounds = array<i64: 3, 3, 32>}, {pipeline_mode = #tpu.pipeline_mode<synchronous>, transform_indices = @transform_4, window_bounds = array<i64: 1, 32>}, {pipeline_mode = #tpu.pipeline_mode<synchronous>, transform_indices = @transform_5, window_bounds = array<i64: 32, 4>}, {pipeline_mode = #tpu.pipeline_mode<synchronous>, transform_indices = @transform_6, window_bounds = array<i64: 1, 4>}, {pipeline_mode = #tpu.pipeline_mode<synchronous>, transform_indices = @transform_7, window_bounds = array<i64: 4, 32>}, {pipeline_mode = #tpu.pipeline_mode<synchronous>, transform_indices = @transform_8, window_bounds = array<i64: 1, 32>}, {pipeline_mode = #tpu.pipeline_mode<synchronous>, transform_indices = @transform_9, window_bounds = array<i64: 32, 8>}, {pipeline_mode = #tpu.pipeline_mode<synchronous>, transform_indices = @transform_10, window_bounds = array<i64: 1, 8>}, {transform_indices = @transform_11, window_bounds = array<i64: 256, 8>}]} {
    %c0 = arith.constant 0 : index
    %c0_0 = arith.constant 0 : index
    %0 = vector.load %arg1[%c0, %c0_0] : memref<256x8xf32, #tpu.memory_space<vmem>>, vector<256x8xf32>
    %c0_1 = arith.constant 0 : index
    %c0_2 = arith.constant 0 : index
    %1 = vector.load %arg2[%c0_1, %c0_2] : memref<8x32xf32, #tpu.memory_space<vmem>>, vector<8x32xf32>
    %cst = arith.constant dense<0.000000e+00> : vector<256x32xf32>
    %2 = tpu.matmul %0, %1, %cst {dimension_numbers = #tpu.dot_dimension_numbers<[1], [0], [0], [1], [0, 0, 1, 1], [], []>} : vector<256x8xf32>, vector<8x32xf32>, vector<256x32xf32> -> vector<256x32xf32>
    %c0_3 = arith.constant 0 : index
    %c0_4 = arith.constant 0 : index
    %3 = vector.load %arg3[%c0_3, %c0_4] : memref<1x32xf32, #tpu.memory_space<vmem>>, vector<1x32xf32>
    %4 = vector.broadcast %3 : vector<1x32xf32> to vector<256x32xf32>
    %5 = arith.addf %2, %4 : vector<256x32xf32>
    %6 = arith.negf %5 : vector<256x32xf32>
    %7 = math.exp %6 : vector<256x32xf32>
    %cst_5 = arith.constant 1.000000e+00 : f32
    %8 = vector.broadcast %cst_5 : f32 to vector<256x32xf32>
    %9 = arith.addf %8, %7 : vector<256x32xf32>
    %10 = arith.divf %8, %9 : vector<256x32xf32>
    %11 = arith.mulf %5, %10 : vector<256x32xf32>
    %cst_6 = arith.constant 0.000000e+00 : f32
    %12 = vector.broadcast %cst_6 : f32 to vector<18x18x32xf32>
    %c0_7 = arith.constant 0 : index
    %c0_8 = arith.constant 0 : index
    %c0_9 = arith.constant 0 : index
    %13 = vector.load %arg13[%c0_7, %c0_8, %c0_9] : memref<18x18x32xf32, #tpu.memory_space<vmem>>, vector<18x18x32xf32>
    tpu.vector_store %arg13[%c0_7, %c0_8, %c0_9], %12 {strides = array<i32>} : memref<18x18x32xf32, #tpu.memory_space<vmem>>, vector<18x18x32xf32>,
    %14 = vector.shape_cast %11 : vector<256x32xf32> to vector<16x16x32xf32>
    %c1 = arith.constant 1 : index
    %c1_10 = arith.constant 1 : index
    %c0_11 = arith.constant 0 : index
    %15 = vector.load %arg13[%c1, %c1_10, %c0_11] : memref<18x18x32xf32, #tpu.memory_space<vmem>>, vector<16x16x32xf32>
    tpu.vector_store %arg13[%c1, %c1_10, %c0_11], %14 {strides = array<i32>} : memref<18x18x32xf32, #tpu.memory_space<vmem>>, vector<16x16x32xf32>,
    %c0_12 = arith.constant 0 : index
    %c0_13 = arith.constant 0 : index
    %c0_14 = arith.constant 0 : index
    %16 = vector.load %arg4[%c0_12, %c0_13, %c0_14] : memref<3x3x32xf32, #tpu.memory_space<vmem>>, vector<3x3x32xf32>
    %cst_15 = arith.constant 0.000000e+00 : f32
    %17 = vector.broadcast %cst_15 : f32 to vector<16x16x32xf32>
    %c0_16 = arith.constant 0 : index
    %c0_17 = arith.constant 0 : index
    %c0_18 = arith.constant 0 : index
    %18 = vector.load %arg13[%c0_16, %c0_17, %c0_18] : memref<18x18x32xf32, #tpu.memory_space<vmem>>, vector<16x16x32xf32>
    %19 = vector.extract_strided_slice %16 {offsets = [0, 0, 0], sizes = [1, 1, 32], strides = [1, 1, 1]} : vector<3x3x32xf32> to vector<1x1x32xf32>
    %20 = vector.shape_cast %19 : vector<1x1x32xf32> to vector<32xf32>
    %21 = vector.shape_cast %20 : vector<32xf32> to vector<1x1x32xf32>
    %22 = vector.broadcast %21 : vector<1x1x32xf32> to vector<16x16x32xf32>
    %23 = arith.mulf %18, %22 : vector<16x16x32xf32>
    %24 = arith.addf %17, %23 : vector<16x16x32xf32>
    %c0_19 = arith.constant 0 : index
    %c1_20 = arith.constant 1 : index
    %c0_21 = arith.constant 0 : index
    %25 = vector.load %arg13[%c0_19, %c1_20, %c0_21] : memref<18x18x32xf32, #tpu.memory_space<vmem>>, vector<16x16x32xf32>
    %26 = vector.extract_strided_slice %16 {offsets = [0, 1, 0], sizes = [1, 1, 32], strides = [1, 1, 1]} : vector<3x3x32xf32> to vector<1x1x32xf32>
    %27 = vector.shape_cast %26 : vector<1x1x32xf32> to vector<32xf32>
    %28 = vector.shape_cast %27 : vector<32xf32> to vector<1x1x32xf32>
    %29 = vector.broadcast %28 : vector<1x1x32xf32> to vector<16x16x32xf32>
    %30 = arith.mulf %25, %29 : vector<16x16x32xf32>
    %31 = arith.addf %24, %30 : vector<16x16x32xf32>
    %c0_22 = arith.constant 0 : index
    %c2 = arith.constant 2 : index
    %c0_23 = arith.constant 0 : index
    %32 = vector.load %arg13[%c0_22, %c2, %c0_23] : memref<18x18x32xf32, #tpu.memory_space<vmem>>, vector<16x16x32xf32>
    %33 = vector.extract_strided_slice %16 {offsets = [0, 2, 0], sizes = [1, 1, 32], strides = [1, 1, 1]} : vector<3x3x32xf32> to vector<1x1x32xf32>
    %34 = vector.shape_cast %33 : vector<1x1x32xf32> to vector<32xf32>
    %35 = vector.shape_cast %34 : vector<32xf32> to vector<1x1x32xf32>
    %36 = vector.broadcast %35 : vector<1x1x32xf32> to vector<16x16x32xf32>
    %37 = arith.mulf %32, %36 : vector<16x16x32xf32>
    %38 = arith.addf %31, %37 : vector<16x16x32xf32>
    %c1_24 = arith.constant 1 : index
    %c0_25 = arith.constant 0 : index
    %c0_26 = arith.constant 0 : index
    %39 = vector.load %arg13[%c1_24, %c0_25, %c0_26] : memref<18x18x32xf32, #tpu.memory_space<vmem>>, vector<16x16x32xf32>
    %40 = vector.extract_strided_slice %16 {offsets = [1, 0, 0], sizes = [1, 1, 32], strides = [1, 1, 1]} : vector<3x3x32xf32> to vector<1x1x32xf32>
    %41 = vector.shape_cast %40 : vector<1x1x32xf32> to vector<32xf32>
    %42 = vector.shape_cast %41 : vector<32xf32> to vector<1x1x32xf32>
    %43 = vector.broadcast %42 : vector<1x1x32xf32> to vector<16x16x32xf32>
    %44 = arith.mulf %39, %43 : vector<16x16x32xf32>
    %45 = arith.addf %38, %44 : vector<16x16x32xf32>
    %c1_27 = arith.constant 1 : index
    %c1_28 = arith.constant 1 : index
    %c0_29 = arith.constant 0 : index
    %46 = vector.load %arg13[%c1_27, %c1_28, %c0_29] : memref<18x18x32xf32, #tpu.memory_space<vmem>>, vector<16x16x32xf32>
    %47 = vector.extract_strided_slice %16 {offsets = [1, 1, 0], sizes = [1, 1, 32], strides = [1, 1, 1]} : vector<3x3x32xf32> to vector<1x1x32xf32>
    %48 = vector.shape_cast %47 : vector<1x1x32xf32> to vector<32xf32>
    %49 = vector.shape_cast %48 : vector<32xf32> to vector<1x1x32xf32>
    %50 = vector.broadcast %49 : vector<1x1x32xf32> to vector<16x16x32xf32>
    %51 = arith.mulf %46, %50 : vector<16x16x32xf32>
    %52 = arith.addf %45, %51 : vector<16x16x32xf32>
    %c1_30 = arith.constant 1 : index
    %c2_31 = arith.constant 2 : index
    %c0_32 = arith.constant 0 : index
    %53 = vector.load %arg13[%c1_30, %c2_31, %c0_32] : memref<18x18x32xf32, #tpu.memory_space<vmem>>, vector<16x16x32xf32>
    %54 = vector.extract_strided_slice %16 {offsets = [1, 2, 0], sizes = [1, 1, 32], strides = [1, 1, 1]} : vector<3x3x32xf32> to vector<1x1x32xf32>
    %55 = vector.shape_cast %54 : vector<1x1x32xf32> to vector<32xf32>
    %56 = vector.shape_cast %55 : vector<32xf32> to vector<1x1x32xf32>
    %57 = vector.broadcast %56 : vector<1x1x32xf32> to vector<16x16x32xf32>
    %58 = arith.mulf %53, %57 : vector<16x16x32xf32>
    %59 = arith.addf %52, %58 : vector<16x16x32xf32>
    %c2_33 = arith.constant 2 : index
    %c0_34 = arith.constant 0 : index
    %c0_35 = arith.constant 0 : index
    %60 = vector.load %arg13[%c2_33, %c0_34, %c0_35] : memref<18x18x32xf32, #tpu.memory_space<vmem>>, vector<16x16x32xf32>
    %61 = vector.extract_strided_slice %16 {offsets = [2, 0, 0], sizes = [1, 1, 32], strides = [1, 1, 1]} : vector<3x3x32xf32> to vector<1x1x32xf32>
    %62 = vector.shape_cast %61 : vector<1x1x32xf32> to vector<32xf32>
    %63 = vector.shape_cast %62 : vector<32xf32> to vector<1x1x32xf32>
    %64 = vector.broadcast %63 : vector<1x1x32xf32> to vector<16x16x32xf32>
    %65 = arith.mulf %60, %64 : vector<16x16x32xf32>
    %66 = arith.addf %59, %65 : vector<16x16x32xf32>
    %c2_36 = arith.constant 2 : index
    %c1_37 = arith.constant 1 : index
    %c0_38 = arith.constant 0 : index
    %67 = vector.load %arg13[%c2_36, %c1_37, %c0_38] : memref<18x18x32xf32, #tpu.memory_space<vmem>>, vector<16x16x32xf32>
    %68 = vector.extract_strided_slice %16 {offsets = [2, 1, 0], sizes = [1, 1, 32], strides = [1, 1, 1]} : vector<3x3x32xf32> to vector<1x1x32xf32>
    %69 = vector.shape_cast %68 : vector<1x1x32xf32> to vector<32xf32>
    %70 = vector.shape_cast %69 : vector<32xf32> to vector<1x1x32xf32>
    %71 = vector.broadcast %70 : vector<1x1x32xf32> to vector<16x16x32xf32>
    %72 = arith.mulf %67, %71 : vector<16x16x32xf32>
    %73 = arith.addf %66, %72 : vector<16x16x32xf32>
    %c2_39 = arith.constant 2 : index
    %c2_40 = arith.constant 2 : index
    %c0_41 = arith.constant 0 : index
    %74 = vector.load %arg13[%c2_39, %c2_40, %c0_41] : memref<18x18x32xf32, #tpu.memory_space<vmem>>, vector<16x16x32xf32>
    %75 = vector.extract_strided_slice %16 {offsets = [2, 2, 0], sizes = [1, 1, 32], strides = [1, 1, 1]} : vector<3x3x32xf32> to vector<1x1x32xf32>
    %76 = vector.shape_cast %75 : vector<1x1x32xf32> to vector<32xf32>
    %77 = vector.shape_cast %76 : vector<32xf32> to vector<1x1x32xf32>
    %78 = vector.broadcast %77 : vector<1x1x32xf32> to vector<16x16x32xf32>
    %79 = arith.mulf %74, %78 : vector<16x16x32xf32>
    %80 = arith.addf %73, %79 : vector<16x16x32xf32>
    %c0_42 = arith.constant 0 : index
    %c0_43 = arith.constant 0 : index
    %81 = vector.load %arg5[%c0_42, %c0_43] : memref<1x32xf32, #tpu.memory_space<vmem>>, vector<1x32xf32>
    %82 = vector.shape_cast %81 : vector<1x32xf32> to vector<1x1x32xf32>
    %83 = vector.broadcast %82 : vector<1x1x32xf32> to vector<16x16x32xf32>
    %84 = arith.addf %80, %83 : vector<16x16x32xf32>
    %85 = arith.negf %84 : vector<16x16x32xf32>
    %86 = math.exp %85 : vector<16x16x32xf32>
    %cst_44 = arith.constant 1.000000e+00 : f32
    %87 = vector.broadcast %cst_44 : f32 to vector<16x16x32xf32>
    %88 = arith.addf %87, %86 : vector<16x16x32xf32>
    %89 = arith.divf %87, %88 : vector<16x16x32xf32>
    %90 = arith.mulf %84, %89 : vector<16x16x32xf32>
    %91 = vector.shape_cast %90 : vector<16x16x32xf32> to vector<256x32xf32>
    %cst_45 = arith.constant dense<0.000000e+00> : vector<32xf32>
    %92 = vector.multi_reduction <add>, %91, %cst_45 [0] : vector<256x32xf32> to vector<32xf32>
    %93 = vector.shape_cast %92 : vector<32xf32> to vector<1x32xf32>
    %cst_46 = arith.constant 3.906250e-03 : f32
    %94 = vector.broadcast %cst_46 : f32 to vector<1x32xf32>
    %95 = arith.mulf %93, %94 : vector<1x32xf32>
    %c0_47 = arith.constant 0 : index
    %c0_48 = arith.constant 0 : index
    %96 = vector.load %arg6[%c0_47, %c0_48] : memref<32x4xf32, #tpu.memory_space<vmem>>, vector<32x4xf32>
    %cst_49 = arith.constant dense<0.000000e+00> : vector<1x4xf32>
    %97 = tpu.matmul %95, %96, %cst_49 {dimension_numbers = #tpu.dot_dimension_numbers<[1], [0], [0], [1], [0, 0, 1, 1], [], []>} : vector<1x32xf32>, vector<32x4xf32>, vector<1x4xf32> -> vector<1x4xf32>
    %c0_50 = arith.constant 0 : index
    %c0_51 = arith.constant 0 : index
    %98 = vector.load %arg7[%c0_50, %c0_51] : memref<1x4xf32, #tpu.memory_space<vmem>>, vector<1x4xf32>
    %99 = arith.addf %97, %98 : vector<1x4xf32>
    %100 = arith.negf %99 : vector<1x4xf32>
    %101 = math.exp %100 : vector<1x4xf32>
    %cst_52 = arith.constant 1.000000e+00 : f32
    %102 = vector.broadcast %cst_52 : f32 to vector<1x4xf32>
    %103 = arith.addf %102, %101 : vector<1x4xf32>
    %104 = arith.divf %102, %103 : vector<1x4xf32>
    %105 = arith.mulf %99, %104 : vector<1x4xf32>
    %c0_53 = arith.constant 0 : index
    %c0_54 = arith.constant 0 : index
    %106 = vector.load %arg8[%c0_53, %c0_54] : memref<4x32xf32, #tpu.memory_space<vmem>>, vector<4x32xf32>
    %cst_55 = arith.constant dense<0.000000e+00> : vector<1x32xf32>
    %107 = tpu.matmul %105, %106, %cst_55 {dimension_numbers = #tpu.dot_dimension_numbers<[1], [0], [0], [1], [0, 0, 1, 1], [], []>} : vector<1x4xf32>, vector<4x32xf32>, vector<1x32xf32> -> vector<1x32xf32>
    %c0_56 = arith.constant 0 : index
    %c0_57 = arith.constant 0 : index
    %108 = vector.load %arg9[%c0_56, %c0_57] : memref<1x32xf32, #tpu.memory_space<vmem>>, vector<1x32xf32>
    %109 = arith.addf %107, %108 : vector<1x32xf32>
    %110 = arith.negf %109 : vector<1x32xf32>
    %111 = math.exp %110 : vector<1x32xf32>
    %cst_58 = arith.constant 1.000000e+00 : f32
    %112 = vector.broadcast %cst_58 : f32 to vector<1x32xf32>
    %113 = arith.addf %112, %111 : vector<1x32xf32>
    %114 = arith.divf %112, %113 : vector<1x32xf32>
    %115 = vector.broadcast %114 : vector<1x32xf32> to vector<256x32xf32>
    %116 = arith.mulf %91, %115 : vector<256x32xf32>
    %c0_59 = arith.constant 0 : index
    %c0_60 = arith.constant 0 : index
    %117 = vector.load %arg10[%c0_59, %c0_60] : memref<32x8xf32, #tpu.memory_space<vmem>>, vector<32x8xf32>
    %cst_61 = arith.constant dense<0.000000e+00> : vector<256x8xf32>
    %118 = tpu.matmul %116, %117, %cst_61 {dimension_numbers = #tpu.dot_dimension_numbers<[1], [0], [0], [1], [0, 0, 1, 1], [], []>} : vector<256x32xf32>, vector<32x8xf32>, vector<256x8xf32> -> vector<256x8xf32>
    %c0_62 = arith.constant 0 : index
    %c0_63 = arith.constant 0 : index
    %119 = vector.load %arg11[%c0_62, %c0_63] : memref<1x8xf32, #tpu.memory_space<vmem>>, vector<1x8xf32>
    %120 = vector.broadcast %119 : vector<1x8xf32> to vector<256x8xf32>
    %121 = arith.addf %118, %120 : vector<256x8xf32>
    %122 = arith.addf %121, %0 : vector<256x8xf32>
    %c0_64 = arith.constant 0 : index
    %c0_65 = arith.constant 0 : index
    %123 = vector.load %arg12[%c0_64, %c0_65] : memref<256x8xf32, #tpu.memory_space<vmem>>, vector<256x8xf32>
    tpu.vector_store %arg12[%c0_64, %c0_65], %122 {strides = array<i32>} : memref<256x8xf32, #tpu.memory_space<vmem>>, vector<256x8xf32>,
    return
  }
  func.func @transform_0(%arg0: i32) -> (i32, i32) {
    %c0_i32 = arith.constant 0 : i32
    %c0_i32_0 = arith.constant 0 : i32
    return %arg0, %c0_i32 : i32, i32
  }
  func.func @transform_1(%arg0: i32) -> (i32, i32) {
    %c0_i32 = arith.constant 0 : i32
    %c0_i32_0 = arith.constant 0 : i32
    %c0_i32_1 = arith.constant 0 : i32
    return %c0_i32, %c0_i32_0 : i32, i32
  }
  func.func @transform_2(%arg0: i32) -> (i32, i32) {
    %c0_i32 = arith.constant 0 : i32
    %c0_i32_0 = arith.constant 0 : i32
    %c0_i32_1 = arith.constant 0 : i32
    return %c0_i32, %c0_i32_0 : i32, i32
  }
  func.func @transform_3(%arg0: i32) -> (i32, i32, i32) {
    %c0_i32 = arith.constant 0 : i32
    %c0_i32_0 = arith.constant 0 : i32
    %c0_i32_1 = arith.constant 0 : i32
    %c0_i32_2 = arith.constant 0 : i32
    return %c0_i32, %c0_i32_0, %c0_i32_1 : i32, i32, i32
  }
  func.func @transform_4(%arg0: i32) -> (i32, i32) {
    %c0_i32 = arith.constant 0 : i32
    %c0_i32_0 = arith.constant 0 : i32
    %c0_i32_1 = arith.constant 0 : i32
    return %c0_i32, %c0_i32_0 : i32, i32
  }
  func.func @transform_5(%arg0: i32) -> (i32, i32) {
    %c0_i32 = arith.constant 0 : i32
    %c0_i32_0 = arith.constant 0 : i32
    %c0_i32_1 = arith.constant 0 : i32
    return %c0_i32, %c0_i32_0 : i32, i32
  }
  func.func @transform_6(%arg0: i32) -> (i32, i32) {
    %c0_i32 = arith.constant 0 : i32
    %c0_i32_0 = arith.constant 0 : i32
    %c0_i32_1 = arith.constant 0 : i32
    return %c0_i32, %c0_i32_0 : i32, i32
  }
  func.func @transform_7(%arg0: i32) -> (i32, i32) {
    %c0_i32 = arith.constant 0 : i32
    %c0_i32_0 = arith.constant 0 : i32
    %c0_i32_1 = arith.constant 0 : i32
    return %c0_i32, %c0_i32_0 : i32, i32
  }
  func.func @transform_8(%arg0: i32) -> (i32, i32) {
    %c0_i32 = arith.constant 0 : i32
    %c0_i32_0 = arith.constant 0 : i32
    %c0_i32_1 = arith.constant 0 : i32
    return %c0_i32, %c0_i32_0 : i32, i32
  }
  func.func @transform_9(%arg0: i32) -> (i32, i32) {
    %c0_i32 = arith.constant 0 : i32
    %c0_i32_0 = arith.constant 0 : i32
    %c0_i32_1 = arith.constant 0 : i32
    return %c0_i32, %c0_i32_0 : i32, i32
  }
  func.func @transform_10(%arg0: i32) -> (i32, i32) {
    %c0_i32 = arith.constant 0 : i32
    %c0_i32_0 = arith.constant 0 : i32
    %c0_i32_1 = arith.constant 0 : i32
    return %c0_i32, %c0_i32_0 : i32, i32
  }
  func.func @transform_11(%arg0: i32) -> (i32, i32) {
    %c0_i32 = arith.constant 0 : i32
    %c0_i32_0 = arith.constant 0 : i32
    return %arg0, %c0_i32 : i32, i32
  }
}

</mosaic_0001>

<llo_original>
// kernel: mbconv_forward.1
$region0: #{mbconv_forward.1}
  #allocation0 [shape = 'u32[]', space=smem, size = 0x4, offset = 0x4, fixed_abs, tag = 'smem constant byte address 0x4 - core index']
  #allocation1 [shape = 'u32[72,128]{1,0:T(1,128)}', space=vmem, size = 0x9000, scoped, tag = 'internal scratch']
  #allocation2 [shape = 'f32[18,18,32]{2,1,0:T(8,128)}', space=vmem, size = 0x36000, scoped, tag = 'scratch operand']
  %s0 = inlined_call_operand.vmem [shape: f32[512,8], index: 0, kind: input, shape index: {}]
  %s1 = inlined_call_operand.vmem [shape: f32[8,32], index: 1, kind: input, shape index: {}]
  %s2 = inlined_call_operand.vmem [shape: f32[1,32], index: 2, kind: input, shape index: {}]
  %s3 = inlined_call_operand.vmem [shape: f32[3,3,32], index: 3, kind: input, shape index: {}]
  %s4 = inlined_call_operand.vmem [shape: f32[1,32], index: 4, kind: input, shape index: {}]
  %s5 = inlined_call_operand.vmem [shape: f32[32,4], index: 5, kind: input, shape index: {}]
  %s6 = inlined_call_operand.vmem [shape: f32[1,4], index: 6, kind: input, shape index: {}]
  %s7 = inlined_call_operand.vmem [shape: f32[4,32], index: 7, kind: input, shape index: {}]
  %s8 = inlined_call_operand.vmem [shape: f32[1,32], index: 8, kind: input, shape index: {}]
  %s9 = inlined_call_operand.vmem [shape: f32[32,8], index: 9, kind: input, shape index: {}]
  %s10 = inlined_call_operand.vmem [shape: f32[1,8], index: 10, kind: input, shape index: {}]
  %s11 = inlined_call_operand.vmem [shape: f32[512,8], index: 11, kind: output, shape index: {}]
  %s12 = sld [smem:[#allocation0]]
  $region77: #{mbconv_forward.1} parent=0
    _
  %s14 = ssub.s32 1, %s12
  %s15 = scalar_select 0, %s14, %s12
  loop: start=0, step=1, limit=4
  $region2: #{mbconv_forward.1} parent=0 // loop_pre_header
    _
  $region3: #{mbconv_forward.1} parent=0 // loop_header
    %s17 = sphi 0, %s21
    %p18 = scmp.ge.s32.totalorder %s17, 4
    %s27 = sphi 0, %s29
    %s30 = sphi 0, %s27
    %s31 = sphi 0, %s30
    %s47 = sphi 0, %s31
    %s51 = sphi 0, %s51
    %s53 = sphi 0, %s51
    %s54 = sphi 0, %s53
    %s68 = sphi 0, %s54
    %s72 = sphi 0, %s72
    %s74 = sphi 0, %s72
    %s75 = sphi 0, %s74
    %s89 = sphi 0, %s75
    %s93 = sphi 0, %s93
    %s95 = sphi 0, %s93
    %s96 = sphi 0, %s95
    %s110 = sphi 0, %s96
    %s114 = sphi 0, %s114
    %s116 = sphi 0, %s114
    %s117 = sphi 0, %s116
    %s131 = sphi 0, %s117
    %s135 = sphi 0, %s135
    %s137 = sphi 0, %s135
    %s138 = sphi 0, %s137
    %s152 = sphi 0, %s138
    %s156 = sphi 0, %s156
    %s158 = sphi 0, %s156
    %s159 = sphi 0, %s158
    %s173 = sphi 0, %s159
    %s177 = sphi 0, %s177
    %s179 = sphi 0, %s177
    %s180 = sphi 0, %s179
    %s194 = sphi 0, %s180
    %s198 = sphi 0, %s198
    %s200 = sphi 0, %s198
    %s201 = sphi 0, %s200
    %s215 = sphi 0, %s201
    %s219 = sphi 0, %s219
    %s221 = sphi 0, %s219
    %s222 = sphi 0, %s221
    %s236 = sphi 0, %s222
    %s240 = sphi 0, %s240
    %s242 = sphi 0, %s240
    %s243 = sphi 0, %s242
    %s257 = sphi 0, %s243
    %s263 = sphi 0, %s265
    %s266 = sphi 0, %s263
    %s267 = sphi 0, %s266
    %s283 = sphi 0, %s267
  $region4: #{mbconv_forward.1} parent=0 // loop_header_branch
    %20 = sbr.rel (%p18) target = $region8
  $region5: #{mbconv_forward.1} parent=0 // loop_body
    %s22 = ssub.s32 %s17, 1
    %s23 = ssub.s32 %s17, 2
    %s24 = sadd.s32 %s17, 1
    %s25 = ssub.s32 %s17, %s24
    %p26 = scmp.eq.s32.totalorder %s25, 0
    %s28 = sadd.s32 %s27, 1
    %s29 = scalar_select %p26, %s27, %s28
    %p32 = pneg %p26
    %p33 = scmp.eq.s32.totalorder %s17, 1
    %p34 = por %p32, %p33
    %p35 = scmp.ne.s32.totalorder %s27, %s30
    %p36 = scmp.eq.s32.totalorder %s17, 0
    %p37 = por %p35, %p36
    %p38 = scmp.ne.s32.totalorder %s27, %s30
    %p39 = scmp.eq.s32.totalorder %s22, 1
    %p40 = por %p38, %p39
    %p41 = scmp.ne.s32.totalorder %s30, %s31
    %p42 = scmp.eq.s32.totalorder %s22, 0
    %p43 = por %p41, %p42
    %p44 = scmp.ne.s32.totalorder %s30, %s31
    %p45 = scmp.eq.s32.totalorder %s23, 1
    %p46 = por %p44, %p45
    %p48 = scmp.ne.s32.totalorder %s31, %s47
    %p49 = scmp.eq.s32.totalorder %s23, 0
    %p50 = por %p48, %p49
    %s52 = sadd.s32 %s51, 1
    %p55 = scmp.eq.s32.totalorder %s17, 1
    %p56 = scmp.ne.s32.totalorder %s51, %s53
    %p57 = scmp.eq.s32.totalorder %s17, 0
    %p58 = por %p56, %p57
    %p59 = scmp.ne.s32.totalorder %s51, %s53
    %p60 = scmp.eq.s32.totalorder %s22, 1
    %p61 = por %p59, %p60
    %p62 = scmp.ne.s32.totalorder %s53, %s54
    %p63 = scmp.eq.s32.totalorder %s22, 0
    %p64 = por %p62, %p63
    %p65 = scmp.ne.s32.totalorder %s53, %s54
    %p66 = scmp.eq.s32.totalorder %s23, 1
    %p67 = por %p65, %p66
    %p69 = scmp.ne.s32.totalorder %s54, %s68
    %p70 = scmp.eq.s32.totalorder %s23, 0
    %p71 = por %p69, %p70
    %s73 = sadd.s32 %s72, 1
    %p76 = scmp.eq.s32.totalorder %s17, 1
    %p77 = scmp.ne.s32.totalorder %s72, %s74
    %p78 = scmp.eq.s32.totalorder %s17, 0
    %p79 = por %p77, %p78
    %p80 = scmp.ne.s32.totalorder %s72, %s74
    %p81 = scmp.eq.s32.totalorder %s22, 1
    %p82 = por %p80, %p81
    %p83 = scmp.ne.s32.totalorder %s74, %s75
    %p84 = scmp.eq.s32.totalorder %s22, 0
    %p85 = por %p83, %p84
    %p86 = scmp.ne.s32.totalorder %s74, %s75
    %p87 = scmp.eq.s32.totalorder %s23, 1
    %p88 = por %p86, %p87
    %p90 = scmp.ne.s32.totalorder %s75, %s89
    %p91 = scmp.eq.s32.totalorder %s23, 0
    %p92 = por %p90, %p91
    %s94 = sadd.s32 %s93, 1
    %p97 = scmp.eq.s32.totalorder %s17, 1
    %p98 = scmp.ne.s32.totalorder %s93, %s95
    %p99 = scmp.eq.s32.totalorder %s17, 0
    %p100 = por %p98, %p99
    %p101 = scmp.ne.s32.totalorder %s93, %s95
    %p102 = scmp.eq.s32.totalorder %s22, 1
    %p103 = por %p101, %p102
    %p104 = scmp.ne.s32.totalorder %s95, %s96
    %p105 = scmp.eq.s32.totalorder %s22, 0
    %p106 = por %p104, %p105
    %p107 = scmp.ne.s32.totalorder %s95, %s96
    %p108 = scmp.eq.s32.totalorder %s23, 1
    %p109 = por %p107, %p108
    %p111 = scmp.ne.s32.totalorder %s96, %s110
    %p112 = scmp.eq.s32.totalorder %s23, 0
    %p113 = por %p111, %p112
    %s115 = sadd.s32 %s114, 1
    %p118 = scmp.eq.s32.totalorder %s17, 1
    %p119 = scmp.ne.s32.totalorder %s114, %s116
    %p120 = scmp.eq.s32.totalorder %s17, 0
    %p121 = por %p119, %p120
    %p122 = scmp.ne.s32.totalorder %s114, %s116
    %p123 = scmp.eq.s32.totalorder %s22, 1
    %p124 = por %p122, %p123
    %p125 = scmp.ne.s32.totalorder %s116, %s117
    %p126 = scmp.eq.s32.totalorder %s22, 0
    %p127 = por %p125, %p126
    %p128 = scmp.ne.s32.totalorder %s116, %s117
    %p129 = scmp.eq.s32.totalorder %s23, 1
    %p130 = por %p128, %p129
    %p132 = scmp.ne.s32.totalorder %s117, %s131
    %p133 = scmp.eq.s32.totalorder %s23, 0
    %p134 = por %p132, %p133
    %s136 = sadd.s32 %s135, 1
    %p139 = scmp.eq.s32.totalorder %s17, 1
    %p140 = scmp.ne.s32.totalorder %s135, %s137
    %p141 = scmp.eq.s32.totalorder %s17, 0
    %p142 = por %p140, %p141
    %p143 = scmp.ne.s32.totalorder %s135, %s137
    %p144 = scmp.eq.s32.totalorder %s22, 1
    %p145 = por %p143, %p144
    %p146 = scmp.ne.s32.totalorder %s137, %s138
    %p147 = scmp.eq.s32.totalorder %s22, 0
    %p148 = por %p146, %p147
    %p149 = scmp.ne.s32.totalorder %s137, %s138
    %p150 = scmp.eq.s32.totalorder %s23, 1
    %p151 = por %p149, %p150
    %p153 = scmp.ne.s32.totalorder %s138, %s152
    %p154 = scmp.eq.s32.totalorder %s23, 0
    %p155 = por %p153, %p154
    %s157 = sadd.s32 %s156, 1
    %p160 = scmp.eq.s32.totalorder %s17, 1
    %p161 = scmp.ne.s32.totalorder %s156, %s158
    %p162 = scmp.eq.s32.totalorder %s17, 0
    %p163 = por %p161, %p162
    %p164 = scmp.ne.s32.totalorder %s156, %s158
    %p165 = scmp.eq.s32.totalorder %s22, 1
    %p166 = por %p164, %p165
    %p167 = scmp.ne.s32.totalorder %s158, %s159
    %p168 = scmp.eq.s32.totalorder %s22, 0
    %p169 = por %p167, %p168
    %p170 = scmp.ne.s32.totalorder %s158, %s159
    %p171 = scmp.eq.s32.totalorder %s23, 1
    %p172 = por %p170, %p171
    %p174 = scmp.ne.s32.totalorder %s159, %s173
    %p175 = scmp.eq.s32.totalorder %s23, 0
    %p176 = por %p174, %p175
    %s178 = sadd.s32 %s177, 1
    %p181 = scmp.eq.s32.totalorder %s17, 1
    %p182 = scmp.ne.s32.totalorder %s177, %s179
    %p183 = scmp.eq.s32.totalorder %s17, 0
    %p184 = por %p182, %p183
    %p185 = scmp.ne.s32.totalorder %s177, %s179
    %p186 = scmp.eq.s32.totalorder %s22, 1
    %p187 = por %p185, %p186
    %p188 = scmp.ne.s32.totalorder %s179, %s180
    %p189 = scmp.eq.s32.totalorder %s22, 0
    %p190 = por %p188, %p189
    %p191 = scmp.ne.s32.totalorder %s179, %s180
    %p192 = scmp.eq.s32.totalorder %s23, 1
    %p193 = por %p191, %p192
    %p195 = scmp.ne.s32.totalorder %s180, %s194
    %p196 = scmp.eq.s32.totalorder %s23, 0
    %p197 = por %p195, %p196
    %s199 = sadd.s32 %s198, 1
    %p202 = scmp.eq.s32.totalorder %s17, 1
    %p203 = scmp.ne.s32.totalorder %s198, %s200
    %p204 = scmp.eq.s32.totalorder %s17, 0
    %p205 = por %p203, %p204
    %p206 = scmp.ne.s32.totalorder %s198, %s200
    %p207 = scmp.eq.s32.totalorder %s22, 1
    %p208 = por %p206, %p207
    %p209 = scmp.ne.s32.totalorder %s200, %s201
    %p210 = scmp.eq.s32.totalorder %s22, 0
    %p211 = por %p209, %p210
    %p212 = scmp.ne.s32.totalorder %s200, %s201
    %p213 = scmp.eq.s32.totalorder %s23, 1
    %p214 = por %p212, %p213
    %p216 = scmp.ne.s32.totalorder %s201, %s215
    %p217 = scmp.eq.s32.totalorder %s23, 0
    %p218 = por %p216, %p217
    %s220 = sadd.s32 %s219, 1
    %p223 = scmp.eq.s32.totalorder %s17, 1
    %p224 = scmp.ne.s32.totalorder %s219, %s221
    %p225 = scmp.eq.s32.totalorder %s17, 0
    %p226 = por %p224, %p225
    %p227 = scmp.ne.s32.totalorder %s219, %s221
    %p228 = scmp.eq.s32.totalorder %s22, 1
    %p229 = por %p227, %p228
    %p230 = scmp.ne.s32.totalorder %s221, %s222
    %p231 = scmp.eq.s32.totalorder %s22, 0
    %p232 = por %p230, %p231
    %p233 = scmp.ne.s32.totalorder %s221, %s222
    %p234 = scmp.eq.s32.totalorder %s23, 1
    %p235 = por %p233, %p234
    %p237 = scmp.ne.s32.totalorder %s222, %s236
    %p238 = scmp.eq.s32.totalorder %s23, 0
    %p239 = por %p237, %p238
    %s241 = sadd.s32 %s240, 1
    %p244 = scmp.eq.s32.totalorder %s17, 1
    %p245 = scmp.ne.s32.totalorder %s240, %s242
    %p246 = scmp.eq.s32.totalorder %s17, 0
    %p247 = por %p245, %p246
    %p248 = scmp.ne.s32.totalorder %s240, %s242
    %p249 = scmp.eq.s32.totalorder %s22, 1
    %p250 = por %p248, %p249
    %p251 = scmp.ne.s32.totalorder %s242, %s243
    %p252 = scmp.eq.s32.totalorder %s22, 0
    %p253 = por %p251, %p252
    %p254 = scmp.ne.s32.totalorder %s242, %s243
    %p255 = scmp.eq.s32.totalorder %s23, 1
    %p256 = por %p254, %p255
    %p258 = scmp.ne.s32.totalorder %s243, %s257
    %p259 = scmp.eq.s32.totalorder %s23, 0
    %p260 = por %p258, %p259
    %s261 = ssub.s32 %s17, %s24
    %p262 = scmp.eq.s32.totalorder %s261, 0
    %s264 = sadd.s32 %s263, 1
    %s265 = scalar_select %p262, %s263, %s264
    %p268 = pneg %p262
    %p269 = scmp.eq.s32.totalorder %s17, 1
    %p270 = por %p268, %p269
    %p271 = scmp.ne.s32.totalorder %s263, %s266
    %p272 = scmp.eq.s32.totalorder %s17, 0
    %p273 = por %p271, %p272
    %p274 = scmp.ne.s32.totalorder %s263, %s266
    %p275 = scmp.eq.s32.totalorder %s22, 1
    %p276 = por %p274, %p275
    %p277 = scmp.ne.s32.totalorder %s266, %s267
    %p278 = scmp.eq.s32.totalorder %s22, 0
    %p279 = por %p277, %p278
    %p280 = scmp.ne.s32.totalorder %s266, %s267
    %p281 = scmp.eq.s32.totalorder %s23, 1
    %p282 = por %p280, %p281
    %p284 = scmp.ne.s32.totalorder %s267, %s283
    %p285 = scmp.eq.s32.totalorder %s23, 0
    %p286 = por %p284, %p285
    %p287 = scmp.le.s32.totalorder 1, %s17
    %p288 = scmp.lt.s32.totalorder %s17, 3
    %p289 = pnand %p287, %p288
    %p290 = pneg %p289
    // Predicated region
    $region9: #{mbconv_forward.1} parent=5 // pred_check
      _
    $region10: #{mbconv_forward.1} parent=5 // pred_check_branch
      %292 = sbr.rel (%p289) target = $region12
    $region11: #{mbconv_forward.1} parent=5 // pred_region
      %s293 = ssub.s32 %s17, 1
      // Predicated region
      $region13: #{mbconv_forward.1} parent=11 // pred_check
        %p294 = pneg %p64
      $region14: #{mbconv_forward.1} parent=11 // pred_check_branch
        %296 = sbr.rel (%p294) target = $region16
      $region15: #{mbconv_forward.1} parent=11 // pred_region
        _
      $region16: #{mbconv_forward.1} parent=11 // pred_fallthru
        _
      // Predicated region
      $region17: #{mbconv_forward.1} parent=11 // pred_check
        %p297 = pneg %p85
      $region18: #{mbconv_forward.1} parent=11 // pred_check_branch
        %299 = sbr.rel (%p297) target = $region20
      $region19: #{mbconv_forward.1} parent=11 // pred_region
        _
      $region20: #{mbconv_forward.1} parent=11 // pred_fallthru
        _
      // Predicated region
      $region21: #{mbconv_forward.1} parent=11 // pred_check
        %p300 = pneg %p106
      $region22: #{mbconv_forward.1} parent=11 // pred_check_branch
        %302 = sbr.rel (%p300) target = $region24
      $region23: #{mbconv_forward.1} parent=11 // pred_region
        _
      $region24: #{mbconv_forward.1} parent=11 // pred_fallthru
        _
      // Predicated region
      $region25: #{mbconv_forward.1} parent=11 // pred_check
        %p303 = pneg %p127
      $region26: #{mbconv_forward.1} parent=11 // pred_check_branch
        %305 = sbr.rel (%p303) target = $region28
      $region27: #{mbconv_forward.1} parent=11 // pred_region
        _
      $region28: #{mbconv_forward.1} parent=11 // pred_fallthru
        _
      // Predicated region
      $region29: #{mbconv_forward.1} parent=11 // pred_check
        %p306 = pneg %p148
      $region30: #{mbconv_forward.1} parent=11 // pred_check_branch
        %308 = sbr.rel (%p306) target = $region32
      $region31: #{mbconv_forward.1} parent=11 // pred_region
        _
      $region32: #{mbconv_forward.1} parent=11 // pred_fallthru
        _
      // Predicated region
      $region33: #{mbconv_forward.1} parent=11 // pred_check
        %p309 = pneg %p169
      $region34: #{mbconv_forward.1} parent=11 // pred_check_branch
        %311 = sbr.rel (%p309) target = $region36
      $region35: #{mbconv_forward.1} parent=11 // pred_region
        _
      $region36: #{mbconv_forward.1} parent=11 // pred_fallthru
        _
      // Predicated region
      $region37: #{mbconv_forward.1} parent=11 // pred_check
        %p312 = pneg %p190
      $region38: #{mbconv_forward.1} parent=11 // pred_check_branch
        %314 = sbr.rel (%p312) target = $region40
      $region39: #{mbconv_forward.1} parent=11 // pred_region
        _
      $region40: #{mbconv_forward.1} parent=11 // pred_fallthru
        _
      // Predicated region
      $region41: #{mbconv_forward.1} parent=11 // pred_check
        %p315 = pneg %p211
      $region42: #{mbconv_forward.1} parent=11 // pred_check_branch
        %317 = sbr.rel (%p315) target = $region44
      $region43: #{mbconv_forward.1} parent=11 // pred_region
        _
      $region44: #{mbconv_forward.1} parent=11 // pred_fallthru
        _
      // Predicated region
      $region45: #{mbconv_forward.1} parent=11 // pred_check
        %p318 = pneg %p232
      $region46: #{mbconv_forward.1} parent=11 // pred_check_branch
        %320 = sbr.rel (%p318) target = $region48
      $region47: #{mbconv_forward.1} parent=11 // pred_region
        _
      $region48: #{mbconv_forward.1} parent=11 // pred_fallthru
        _
      // Predicated region
      $region49: #{mbconv_forward.1} parent=11 // pred_check
        %p321 = pneg %p253
      $region50: #{mbconv_forward.1} parent=11 // pred_check_branch
        %323 = sbr.rel (%p321) target = $region52
      $region51: #{mbconv_forward.1} parent=11 // pred_region
        _
      $region52: #{mbconv_forward.1} parent=11 // pred_fallthru
        _
    $region12: #{mbconv_forward.1} parent=5 // pred_fallthru
      _
    %p324 = scmp.lt.s32.totalorder %s17, 2
    // Predicated region
    $region53: #{mbconv_forward.1} parent=5 // pred_check
      %p325 = pneg %p324
    $region54: #{mbconv_forward.1} parent=5 // pred_check_branch
      %327 = sbr.rel (%p325) target = $region56
    $region55: #{mbconv_forward.1} parent=5 // pred_region
      // Predicated region
      $region57: #{mbconv_forward.1} parent=55 // pred_check
        %p328 = pneg %p37
      $region58: #{mbconv_forward.1} parent=55 // pred_check_branch
        %330 = sbr.rel (%p328) target = $region60
      $region59: #{mbconv_forward.1} parent=55 // pred_region
        %s331 = smul.u32 32, %s17
        %p332 = scmp.lt.s32.totalorder %s331, 63
        %s333 = scalar_select %p332, %s331, 63
        %s334 = smul.addr %s333, 8
        %s335 = scalar_lea.vmem %s0, %s334
        %s336 = smul.u32 32, %s17
      $region60: #{mbconv_forward.1} parent=55 // pred_fallthru
        _
    $region56: #{mbconv_forward.1} parent=5 // pred_fallthru
      _
    %p337 = scmp.le.s32.totalorder 1, %s17
    %p338 = scmp.lt.s32.totalorder %s17, 3
    %p339 = pnand %p337, %p338
    %p340 = pneg %p339
    // Predicated region
    $region61: #{mbconv_forward.1} parent=5 // pred_check
      _
    $region62: #{mbconv_forward.1} parent=5 // pred_check_branch
      %342 = sbr.rel (%p339) target = $region64
    $region63: #{mbconv_forward.1} parent=5 // pred_region
      %s343 = ssub.s32 %s17, 1
      %s344 = smul.u32 32, %s22
      %p345 = scmp.lt.s32.totalorder %s344, 63
      %s346 = scalar_select %p345, %s344, 63
      %s347 = smul.addr %s346, 8
      %s348 = scalar_lea.vmem %s0, %s347
      %p349 = pneg %p43
      %p350 = pneg %p40
      %p351 = pneg %p64
      %p352 = pneg %p61
      %p353 = pneg %p85
      %p354 = pneg %p82
      %p355 = pneg %p106
      %p356 = pneg %p103
      %p357 = pneg %p127
      %p358 = pneg %p124
      %p359 = pneg %p148
      %p360 = pneg %p145
      %p361 = pneg %p169
      %p362 = pneg %p166
      %p363 = pneg %p190
      %p364 = pneg %p187
      %p365 = pneg %p211
      %p366 = pneg %p208
      %p367 = pneg %p232
      %p368 = pneg %p229
      %p369 = pneg %p253
      %p370 = pneg %p250
      %p371 = pneg %p279
      %p372 = pneg %p276
      %s373 = smul.u32 32, %s22
      %p374 = scmp.lt.s32.totalorder %s373, 63
      %s375 = scalar_select %p374, %s373, 63
      %s376 = smul.addr %s375, 8
      %s377 = scalar_lea.vmem %s11, %s376
      %s378 = smul.u32 32, %s22
      %p379 = scmp.lt.s32.totalorder %s378, 63
      %s380 = scalar_select %p379, %s378, 63
      %s381 = smul.addr %s380, 8
      %s382 = scalar_lea.vmem %s0, %s381
      %s383 = smul.u32 32, %s22
      %s384 = smul.u32 32, %s22
      %p385 = scmp.lt.s32.totalorder %s384, 63
      %s386 = scalar_select %p385, %s384, 63
      %s387 = smul.addr %s386, 8
      %s388 = scalar_lea.vmem %s11, %s387
      %s389 = smul.u32 32, %s22
      %v390 = vld [vmem:[%s382] sm:$0xff]
      %v391 = vld [vmem:[%s382 + $0x8] sm:$0xff]
      %v392 = vld [vmem:[%s382 + $0x10] sm:$0xff]
      %v393 = vld [vmem:[%s382 + $0x18] sm:$0xff]
      %v394 = vld [vmem:[%s382 + $0x20] sm:$0xff]
      %v395 = vld [vmem:[%s382 + $0x28] sm:$0xff]
      %v396 = vld [vmem:[%s382 + $0x30] sm:$0xff]
      %v397 = vld [vmem:[%s382 + $0x38] sm:$0xff]
      %v398 = vld [vmem:[%s382 + $0x40] sm:$0xff]
      %v399 = vld [vmem:[%s382 + $0x48] sm:$0xff]
      %v400 = vld [vmem:[%s382 + $0x50] sm:$0xff]
      %v401 = vld [vmem:[%s382 + $0x58] sm:$0xff]
      %v402 = vld [vmem:[%s382 + $0x60] sm:$0xff]
      %v403 = vld [vmem:[%s382 + $0x68] sm:$0xff]
      %v404 = vld [vmem:[%s382 + $0x70] sm:$0xff]
      %v405 = vld [vmem:[%s382 + $0x78] sm:$0xff]
      %v406 = vld [vmem:[%s382 + $0x80] sm:$0xff]
      %v407 = vld [vmem:[%s382 + $0x88] sm:$0xff]
      %v408 = vld [vmem:[%s382 + $0x90] sm:$0xff]
      %v409 = vld [vmem:[%s382 + $0x98] sm:$0xff]
      %v410 = vld [vmem:[%s382 + $0xa0] sm:$0xff]
      %v411 = vld [vmem:[%s382 + $0xa8] sm:$0xff]
      %v412 = vld [vmem:[%s382 + $0xb0] sm:$0xff]
      %v413 = vld [vmem:[%s382 + $0xb8] sm:$0xff]
      %v414 = vld [vmem:[%s382 + $0xc0] sm:$0xff]
      %v415 = vld [vmem:[%s382 + $0xc8] sm:$0xff]
      %v416 = vld [vmem:[%s382 + $0xd0] sm:$0xff]
      %v417 = vld [vmem:[%s382 + $0xd8] sm:$0xff]
      %v418 = vld [vmem:[%s382 + $0xe0] sm:$0xff]
      %v419 = vld [vmem:[%s382 + $0xe8] sm:$0xff]
      %v420 = vld [vmem:[%s382 + $0xf0] sm:$0xff]
      %v421 = vld [vmem:[%s382 + $0xf8] sm:$0xff]
      %v422 = vld [vmem:[%s1] sm:$0xff]
      %v423 = vld [vmem:[%s2] sm:$0x1]
      %v425 = vperm.slane %v423, 0
      %vm427 = vcmask 64512
      %v429 = vsel %vm427, %v390, 0
      %v432 = vsel %vm427, %v391, 0
      %v435 = vsel %vm427, %v392, 0
      %v438 = vsel %vm427, %v393, 0
      %v441 = vsel %vm427, %v394, 0
      %v444 = vsel %vm427, %v395, 0
      %v447 = vsel %vm427, %v396, 0
      %v450 = vsel %vm427, %v397, 0
      %v453 = vsel %vm427, %v398, 0
      %v456 = vsel %vm427, %v399, 0
      %v459 = vsel %vm427, %v400, 0
      %v462 = vsel %vm427, %v401, 0
      %v465 = vsel %vm427, %v402, 0
      %v468 = vsel %vm427, %v403, 0
      %v471 = vsel %vm427, %v404, 0
      %v474 = vsel %vm427, %v405, 0
      %v477 = vsel %vm427, %v406, 0
      %v480 = vsel %vm427, %v407, 0
      %v483 = vsel %vm427, %v408, 0
      %v486 = vsel %vm427, %v409, 0
      %v489 = vsel %vm427, %v410, 0
      %v492 = vsel %vm427, %v411, 0
      %v495 = vsel %vm427, %v412, 0
      %v498 = vsel %vm427, %v413, 0
      %v501 = vsel %vm427, %v414, 0
      %v504 = vsel %vm427, %v415, 0
      %v507 = vsel %vm427, %v416, 0
      %v510 = vsel %vm427, %v417, 0
      %v513 = vsel %vm427, %v418, 0
      %v516 = vsel %vm427, %v419, 0
      %v519 = vsel %vm427, %v420, 0
      %v522 = vsel %vm427, %v421, 0
      %524 = vmatpush.msra.mxu0 0.0
      %525 = vmatpush.msra.mxu0 0.0
      %526 = vmatpush.msra.mxu0 0.0
      %527 = vmatpush.msra.mxu0 0.0
      %528 = vmatpush.msra.mxu0 0.0
      %529 = vmatpush.msra.mxu0 0.0
      %530 = vmatpush.msra.mxu0 0.0
      %531 = vmatpush.msra.mxu0 0.0
      %532 = vmatpush.msra.mxu0 0.0
      %533 = vmatpush.msra.mxu0 0.0
      %534 = vmatpush.msra.mxu0 0.0
      %535 = vmatpush.msra.mxu0 0.0
      %536 = vmatpush.msra.mxu0 0.0
      %537 = vmatpush.msra.mxu0 0.0
      %538 = vmatpush.msra.mxu0 0.0
      %539 = vmatpush.msra.mxu0 %v422
      %540 = vmatmul.f32.gmra.mxu0 %v429
      %v541 = vpop.f32.mrf.mxu0
      %v542 = vadd.f32 %v425, %v541
      %543 = vmatmul.f32.gmra.mxu0 %v432
      %v544 = vpop.f32.mrf.mxu0
      %v545 = vadd.f32 %v425, %v544
      %546 = vmatmul.f32.gmra.mxu0 %v435
      %v547 = vpop.f32.mrf.mxu0
      %v548 = vadd.f32 %v425, %v547
      %549 = vmatmul.f32.gmra.mxu0 %v438
      %v550 = vpop.f32.mrf.mxu0
      %v551 = vadd.f32 %v425, %v550
      %552 = vmatmul.f32.gmra.mxu0 %v441
      %v553 = vpop.f32.mrf.mxu0
      %v554 = vadd.f32 %v425, %v553
      %555 = vmatmul.f32.gmra.mxu0 %v444
      %v556 = vpop.f32.mrf.mxu0
      %v557 = vadd.f32 %v425, %v556
      %558 = vmatmul.f32.gmra.mxu0 %v447
      %v559 = vpop.f32.mrf.mxu0
      %v560 = vadd.f32 %v425, %v559
      %561 = vmatmul.f32.gmra.mxu0 %v450
      %v562 = vpop.f32.mrf.mxu0
      %v563 = vadd.f32 %v425, %v562
      %564 = vmatmul.f32.gmra.mxu0 %v453
      %v565 = vpop.f32.mrf.mxu0
      %v566 = vadd.f32 %v425, %v565
      %567 = vmatmul.f32.gmra.mxu0 %v456
      %v568 = vpop.f32.mrf.mxu0
      %v569 = vadd.f32 %v425, %v568
      %570 = vmatmul.f32.gmra.mxu0 %v459
      %v571 = vpop.f32.mrf.mxu0
      %v572 = vadd.f32 %v425, %v571
      %573 = vmatmul.f32.gmra.mxu0 %v462
      %v574 = vpop.f32.mrf.mxu0
      %v575 = vadd.f32 %v425, %v574
      %576 = vmatmul.f32.gmra.mxu0 %v465
      %v577 = vpop.f32.mrf.mxu0
      %v578 = vadd.f32 %v425, %v577
      %579 = vmatmul.f32.gmra.mxu0 %v468
      %v580 = vpop.f32.mrf.mxu0
      %v581 = vadd.f32 %v425, %v580
      %582 = vmatmul.f32.gmra.mxu0 %v471
      %v583 = vpop.f32.mrf.mxu0
      %v584 = vadd.f32 %v425, %v583
      %585 = vmatmul.f32.gmra.mxu0 %v474
      %v586 = vpop.f32.mrf.mxu0
      %v587 = vadd.f32 %v425, %v586
      %588 = vmatmul.f32.gmra.mxu0 %v477
      %v589 = vpop.f32.mrf.mxu0
      %v590 = vadd.f32 %v425, %v589
      %591 = vmatmul.f32.gmra.mxu0 %v480
      %v592 = vpop.f32.mrf.mxu0
      %v593 = vadd.f32 %v425, %v592
      %594 = vmatmul.f32.gmra.mxu0 %v483
      %v595 = vpop.f32.mrf.mxu0
      %v596 = vadd.f32 %v425, %v595
      %597 = vmatmul.f32.gmra.mxu0 %v486
      %v598 = vpop.f32.mrf.mxu0
      %v599 = vadd.f32 %v425, %v598
      %600 = vmatmul.f32.gmra.mxu0 %v489
      %v601 = vpop.f32.mrf.mxu0
      %v602 = vadd.f32 %v425, %v601
      %603 = vmatmul.f32.gmra.mxu0 %v492
      %v604 = vpop.f32.mrf.mxu0
      %v605 = vadd.f32 %v425, %v604
      %606 = vmatmul.f32.gmra.mxu0 %v495
      %v607 = vpop.f32.mrf.mxu0
      %v608 = vadd.f32 %v425, %v607
      %609 = vmatmul.f32.gmra.mxu0 %v498
      %v610 = vpop.f32.mrf.mxu0
      %v611 = vadd.f32 %v425, %v610
      %612 = vmatmul.f32.gmra.mxu0 %v501
      %v613 = vpop.f32.mrf.mxu0
      %v614 = vadd.f32 %v425, %v613
      %615 = vmatmul.f32.gmra.mxu0 %v504
      %v616 = vpop.f32.mrf.mxu0
      %v617 = vadd.f32 %v425, %v616
      %618 = vmatmul.f32.gmra.mxu0 %v507
      %v619 = vpop.f32.mrf.mxu0
      %v620 = vadd.f32 %v425, %v619
      %621 = vmatmul.f32.gmra.mxu0 %v510
      %v622 = vpop.f32.mrf.mxu0
      %v623 = vadd.f32 %v425, %v622
      %624 = vmatmul.f32.gmra.mxu0 %v513
      %v625 = vpop.f32.mrf.mxu0
      %v626 = vadd.f32 %v425, %v625
      %627 = vmatmul.f32.gmra.mxu0 %v516
      %v628 = vpop.f32.mrf.mxu0
      %v629 = vadd.f32 %v425, %v628
      %630 = vmatmul.f32.gmra.mxu0 %v519
      %v631 = vpop.f32.mrf.mxu0
      %v632 = vadd.f32 %v425, %v631
      %633 = vmatmul.f32.gmra.mxu0 %v522
      %v634 = vpop.f32.mrf.mxu0
      %v635 = vadd.f32 %v425, %v634
      %636 = vdwg.mxu0
      %v637 = vxor.u32 %v542, 2147483648
      %v638 = vxor.u32 %v545, 2147483648
      %v639 = vxor.u32 %v548, 2147483648
      %v640 = vxor.u32 %v551, 2147483648
      %v641 = vxor.u32 %v554, 2147483648
      %v642 = vxor.u32 %v557, 2147483648
      %v643 = vxor.u32 %v560, 2147483648
      %v644 = vxor.u32 %v563, 2147483648
      %v645 = vxor.u32 %v566, 2147483648
      %v646 = vxor.u32 %v569, 2147483648
      %v647 = vxor.u32 %v572, 2147483648
      %v648 = vxor.u32 %v575, 2147483648
      %v649 = vxor.u32 %v578, 2147483648
      %v650 = vxor.u32 %v581, 2147483648
      %v651 = vxor.u32 %v584, 2147483648
      %v652 = vxor.u32 %v587, 2147483648
      %v653 = vxor.u32 %v590, 2147483648
      %v654 = vxor.u32 %v593, 2147483648
      %v655 = vxor.u32 %v596, 2147483648
      %v656 = vxor.u32 %v599, 2147483648
      %v657 = vxor.u32 %v602, 2147483648
      %v658 = vxor.u32 %v605, 2147483648
      %v659 = vxor.u32 %v608, 2147483648
      %v660 = vxor.u32 %v611, 2147483648
      %v661 = vxor.u32 %v614, 2147483648
      %v662 = vxor.u32 %v617, 2147483648
      %v663 = vxor.u32 %v620, 2147483648
      %v664 = vxor.u32 %v623, 2147483648
      %v665 = vxor.u32 %v626, 2147483648
      %v666 = vxor.u32 %v629, 2147483648
      %v667 = vxor.u32 %v632, 2147483648
      %v668 = vxor.u32 %v635, 2147483648
      %v669 = vmul.f32 %v637, 1.442695
      %v670 = vpow.pop %v669
      %v671 = vmul.f32 %v638, 1.442695
      %v672 = vpow.pop %v671
      %v673 = vmul.f32 %v639, 1.442695
      %v674 = vpow.pop %v673
      %v675 = vmul.f32 %v640, 1.442695
      %v676 = vpow.pop %v675
      %v677 = vmul.f32 %v641, 1.442695
      %v678 = vpow.pop %v677
      %v679 = vmul.f32 %v642, 1.442695
      %v680 = vpow.pop %v679
      %v681 = vmul.f32 %v643, 1.442695
      %v682 = vpow.pop %v681
      %v683 = vmul.f32 %v644, 1.442695
      %v684 = vpow.pop %v683
      %v685 = vmul.f32 %v645, 1.442695
      %v686 = vpow.pop %v685
      %v687 = vmul.f32 %v646, 1.442695
      %v688 = vpow.pop %v687
      %v689 = vmul.f32 %v647, 1.442695
      %v690 = vpow.pop %v689
      %v691 = vmul.f32 %v648, 1.442695
      %v692 = vpow.pop %v691
      %v693 = vmul.f32 %v649, 1.442695
      %v694 = vpow.pop %v693
      %v695 = vmul.f32 %v650, 1.442695
      %v696 = vpow.pop %v695
      %v697 = vmul.f32 %v651, 1.442695
      %v698 = vpow.pop %v697
      %v699 = vmul.f32 %v652, 1.442695
      %v700 = vpow.pop %v699
      %v701 = vmul.f32 %v653, 1.442695
      %v702 = vpow.pop %v701
      %v703 = vmul.f32 %v654, 1.442695
      %v704 = vpow.pop %v703
      %v705 = vmul.f32 %v655, 1.442695
      %v706 = vpow.pop %v705
      %v707 = vmul.f32 %v656, 1.442695
      %v708 = vpow.pop %v707
      %v709 = vmul.f32 %v657, 1.442695
      %v710 = vpow.pop %v709
      %v711 = vmul.f32 %v658, 1.442695
      %v712 = vpow.pop %v711
      %v713 = vmul.f32 %v659, 1.442695
      %v714 = vpow.pop %v713
      %v715 = vmul.f32 %v660, 1.442695
      %v716 = vpow.pop %v715
      %v717 = vmul.f32 %v661, 1.442695
      %v718 = vpow.pop %v717
      %v719 = vmul.f32 %v662, 1.442695
      %v720 = vpow.pop %v719
      %v721 = vmul.f32 %v663, 1.442695
      %v722 = vpow.pop %v721
      %v723 = vmul.f32 %v664, 1.442695
      %v724 = vpow.pop %v723
      %v725 = vmul.f32 %v665, 1.442695
      %v726 = vpow.pop %v725
      %v727 = vmul.f32 %v666, 1.442695
      %v728 = vpow.pop %v727
      %v729 = vmul.f32 %v667, 1.442695
      %v730 = vpow.pop %v729
      %v731 = vmul.f32 %v668, 1.442695
      %v732 = vpow.pop %v731
      %v733 = vadd.f32 %v670, 1.0
      %v734 = vadd.f32 %v672, 1.0
      %v735 = vadd.f32 %v674, 1.0
      %v736 = vadd.f32 %v676, 1.0
      %v737 = vadd.f32 %v678, 1.0
      %v738 = vadd.f32 %v680, 1.0
      %v739 = vadd.f32 %v682, 1.0
      %v740 = vadd.f32 %v684, 1.0
      %v741 = vadd.f32 %v686, 1.0
      %v742 = vadd.f32 %v688, 1.0
      %v743 = vadd.f32 %v690, 1.0
      %v744 = vadd.f32 %v692, 1.0
      %v745 = vadd.f32 %v694, 1.0
      %v746 = vadd.f32 %v696, 1.0
      %v747 = vadd.f32 %v698, 1.0
      %v748 = vadd.f32 %v700, 1.0
      %v749 = vadd.f32 %v702, 1.0
      %v750 = vadd.f32 %v704, 1.0
      %v751 = vadd.f32 %v706, 1.0
      %v752 = vadd.f32 %v708, 1.0
      %v753 = vadd.f32 %v710, 1.0
      %v754 = vadd.f32 %v712, 1.0
      %v755 = vadd.f32 %v714, 1.0
      %v756 = vadd.f32 %v716, 1.0
      %v757 = vadd.f32 %v718, 1.0
      %v758 = vadd.f32 %v720, 1.0
      %v759 = vadd.f32 %v722, 1.0
      %v760 = vadd.f32 %v724, 1.0
      %v761 = vadd.f32 %v726, 1.0
      %v762 = vadd.f32 %v728, 1.0
      %v763 = vadd.f32 %v730, 1.0
      %v764 = vadd.f32 %v732, 1.0
      %v765 = vrcp.pop %v733
      %v766 = vmul.f32 %v733, %v765
      %v767 = vsub.f32 1.0, %v766
      %v768 = vmul.f32 %v765, %v767
      %v769 = vadd.f32 %v765, %v768
      %vm770 = vweird.f32 %v733
      %vm771 = vweird.f32 %v765
      %vm772 = vmor %vm770, %vm771
      %v773 = vsel %vm772, %v765, %v769
      %v774 = vand.u32 2147483647, %v733
      %vm775 = vcmp.eq.f32.partialorder %v774, 8.507059e+37
      %v776 = vand.u32 %v733, 2147483648
      %v777 = vor.u32 1.1754944e-38, %v776
      %v778 = vsel %vm775, %v777, %v773
      %v779 = vmul.f32 1.0, %v778
      %v780 = vrcp.pop %v734
      %v781 = vmul.f32 %v734, %v780
      %v782 = vsub.f32 1.0, %v781
      %v783 = vmul.f32 %v780, %v782
      %v784 = vadd.f32 %v780, %v783
      %vm785 = vweird.f32 %v734
      %vm786 = vweird.f32 %v780
      %vm787 = vmor %vm785, %vm786
      %v788 = vsel %vm787, %v780, %v784
      %v789 = vand.u32 2147483647, %v734
      %vm790 = vcmp.eq.f32.partialorder %v789, 8.507059e+37
      %v791 = vand.u32 %v734, 2147483648
      %v792 = vor.u32 1.1754944e-38, %v791
      %v793 = vsel %vm790, %v792, %v788
      %v794 = vmul.f32 1.0, %v793
      %v795 = vrcp.pop %v735
      %v796 = vmul.f32 %v735, %v795
      %v797 = vsub.f32 1.0, %v796
      %v798 = vmul.f32 %v795, %v797
      %v799 = vadd.f32 %v795, %v798
      %vm800 = vweird.f32 %v735
      %vm801 = vweird.f32 %v795
      %vm802 = vmor %vm800, %vm801
      %v803 = vsel %vm802, %v795, %v799
      %v804 = vand.u32 2147483647, %v735
      %vm805 = vcmp.eq.f32.partialorder %v804, 8.507059e+37
      %v806 = vand.u32 %v735, 2147483648
      %v807 = vor.u32 1.1754944e-38, %v806
      %v808 = vsel %vm805, %v807, %v803
      %v809 = vmul.f32 1.0, %v808
      %v810 = vrcp.pop %v736
      %v811 = vmul.f32 %v736, %v810
      %v812 = vsub.f32 1.0, %v811
      %v813 = vmul.f32 %v810, %v812
      %v814 = vadd.f32 %v810, %v813
      %vm815 = vweird.f32 %v736
      %vm816 = vweird.f32 %v810
      %vm817 = vmor %vm815, %vm816
      %v818 = vsel %vm817, %v810, %v814
      %v819 = vand.u32 2147483647, %v736
      %vm820 = vcmp.eq.f32.partialorder %v819, 8.507059e+37
      %v821 = vand.u32 %v736, 2147483648
      %v822 = vor.u32 1.1754944e-38, %v821
      %v823 = vsel %vm820, %v822, %v818
      %v824 = vmul.f32 1.0, %v823
      %v825 = vrcp.pop %v737
      %v826 = vmul.f32 %v737, %v825
      %v827 = vsub.f32 1.0, %v826
      %v828 = vmul.f32 %v825, %v827
      %v829 = vadd.f32 %v825, %v828
      %vm830 = vweird.f32 %v737
      %vm831 = vweird.f32 %v825
      %vm832 = vmor %vm830, %vm831
      %v833 = vsel %vm832, %v825, %v829
      %v834 = vand.u32 2147483647, %v737
      %vm835 = vcmp.eq.f32.partialorder %v834, 8.507059e+37
      %v836 = vand.u32 %v737, 2147483648
      %v837 = vor.u32 1.1754944e-38, %v836
      %v838 = vsel %vm835, %v837, %v833
      %v839 = vmul.f32 1.0, %v838
      %v840 = vrcp.pop %v738
      %v841 = vmul.f32 %v738, %v840
      %v842 = vsub.f32 1.0, %v841
      %v843 = vmul.f32 %v840, %v842
      %v844 = vadd.f32 %v840, %v843
      %vm845 = vweird.f32 %v738
      %vm846 = vweird.f32 %v840
      %vm847 = vmor %vm845, %vm846
      %v848 = vsel %vm847, %v840, %v844
      %v849 = vand.u32 2147483647, %v738
      %vm850 = vcmp.eq.f32.partialorder %v849, 8.507059e+37
      %v851 = vand.u32 %v738, 2147483648
      %v852 = vor.u32 1.1754944e-38, %v851
      %v853 = vsel %vm850, %v852, %v848
      %v854 = vmul.f32 1.0, %v853
      %v855 = vrcp.pop %v739
      %v856 = vmul.f32 %v739, %v855
      %v857 = vsub.f32 1.0, %v856
      %v858 = vmul.f32 %v855, %v857
      %v859 = vadd.f32 %v855, %v858
      %vm860 = vweird.f32 %v739
      %vm861 = vweird.f32 %v855
      %vm862 = vmor %vm860, %vm861
      %v863 = vsel %vm862, %v855, %v859
      %v864 = vand.u32 2147483647, %v739
      %vm865 = vcmp.eq.f32.partialorder %v864, 8.507059e+37
      %v866 = vand.u32 %v739, 2147483648
      %v867 = vor.u32 1.1754944e-38, %v866
      %v868 = vsel %vm865, %v867, %v863
      %v869 = vmul.f32 1.0, %v868
      %v870 = vrcp.pop %v740
      %v871 = vmul.f32 %v740, %v870
      %v872 = vsub.f32 1.0, %v871
      %v873 = vmul.f32 %v870, %v872
      %v874 = vadd.f32 %v870, %v873
      %vm875 = vweird.f32 %v740
      %vm876 = vweird.f32 %v870
      %vm877 = vmor %vm875, %vm876
      %v878 = vsel %vm877, %v870, %v874
      %v879 = vand.u32 2147483647, %v740
      %vm880 = vcmp.eq.f32.partialorder %v879, 8.507059e+37
      %v881 = vand.u32 %v740, 2147483648
      %v882 = vor.u32 1.1754944e-38, %v881
      %v883 = vsel %vm880, %v882, %v878
      %v884 = vmul.f32 1.0, %v883
      %v885 = vrcp.pop %v741
      %v886 = vmul.f32 %v741, %v885
      %v887 = vsub.f32 1.0, %v886
      %v888 = vmul.f32 %v885, %v887
      %v889 = vadd.f32 %v885, %v888
      %vm890 = vweird.f32 %v741
      %vm891 = vweird.f32 %v885
      %vm892 = vmor %vm890, %vm891
      %v893 = vsel %vm892, %v885, %v889
      %v894 = vand.u32 2147483647, %v741
      %vm895 = vcmp.eq.f32.partialorder %v894, 8.507059e+37
      %v896 = vand.u32 %v741, 2147483648
      %v897 = vor.u32 1.1754944e-38, %v896
      %v898 = vsel %vm895, %v897, %v893
      %v899 = vmul.f32 1.0, %v898
      %v900 = vrcp.pop %v742
      %v901 = vmul.f32 %v742, %v900
      %v902 = vsub.f32 1.0, %v901
      %v903 = vmul.f32 %v900, %v902
      %v904 = vadd.f32 %v900, %v903
      %vm905 = vweird.f32 %v742
      %vm906 = vweird.f32 %v900
      %vm907 = vmor %vm905, %vm906
      %v908 = vsel %vm907, %v900, %v904
      %v909 = vand.u32 2147483647, %v742
      %vm910 = vcmp.eq.f32.partialorder %v909, 8.507059e+37
      %v911 = vand.u32 %v742, 2147483648
      %v912 = vor.u32 1.1754944e-38, %v911
      %v913 = vsel %vm910, %v912, %v908
      %v914 = vmul.f32 1.0, %v913
      %v915 = vrcp.pop %v743
      %v916 = vmul.f32 %v743, %v915
      %v917 = vsub.f32 1.0, %v916
      %v918 = vmul.f32 %v915, %v917
      %v919 = vadd.f32 %v915, %v918
      %vm920 = vweird.f32 %v743
      %vm921 = vweird.f32 %v915
      %vm922 = vmor %vm920, %vm921
      %v923 = vsel %vm922, %v915, %v919
      %v924 = vand.u32 2147483647, %v743
      %vm925 = vcmp.eq.f32.partialorder %v924, 8.507059e+37
      %v926 = vand.u32 %v743, 2147483648
      %v927 = vor.u32 1.1754944e-38, %v926
      %v928 = vsel %vm925, %v927, %v923
      %v929 = vmul.f32 1.0, %v928
      %v930 = vrcp.pop %v744
      %v931 = vmul.f32 %v744, %v930
      %v932 = vsub.f32 1.0, %v931
      %v933 = vmul.f32 %v930, %v932
      %v934 = vadd.f32 %v930, %v933
      %vm935 = vweird.f32 %v744
      %vm936 = vweird.f32 %v930
      %vm937 = vmor %vm935, %vm936
      %v938 = vsel %vm937, %v930, %v934
      %v939 = vand.u32 2147483647, %v744
      %vm940 = vcmp.eq.f32.partialorder %v939, 8.507059e+37
      %v941 = vand.u32 %v744, 2147483648
      %v942 = vor.u32 1.1754944e-38, %v941
      %v943 = vsel %vm940, %v942, %v938
      %v944 = vmul.f32 1.0, %v943
      %v945 = vrcp.pop %v745
      %v946 = vmul.f32 %v745, %v945
      %v947 = vsub.f32 1.0, %v946
      %v948 = vmul.f32 %v945, %v947
      %v949 = vadd.f32 %v945, %v948
      %vm950 = vweird.f32 %v745
      %vm951 = vweird.f32 %v945
      %vm952 = vmor %vm950, %vm951
      %v953 = vsel %vm952, %v945, %v949
      %v954 = vand.u32 2147483647, %v745
      %vm955 = vcmp.eq.f32.partialorder %v954, 8.507059e+37
      %v956 = vand.u32 %v745, 2147483648
      %v957 = vor.u32 1.1754944e-38, %v956
      %v958 = vsel %vm955, %v957, %v953
      %v959 = vmul.f32 1.0, %v958
      %v960 = vrcp.pop %v746
      %v961 = vmul.f32 %v746, %v960
      %v962 = vsub.f32 1.0, %v961
      %v963 = vmul.f32 %v960, %v962
      %v964 = vadd.f32 %v960, %v963
      %vm965 = vweird.f32 %v746
      %vm966 = vweird.f32 %v960
      %vm967 = vmor %vm965, %vm966
      %v968 = vsel %vm967, %v960, %v964
      %v969 = vand.u32 2147483647, %v746
      %vm970 = vcmp.eq.f32.partialorder %v969, 8.507059e+37
      %v971 = vand.u32 %v746, 2147483648
      %v972 = vor.u32 1.1754944e-38, %v971
      %v973 = vsel %vm970, %v972, %v968
      %v974 = vmul.f32 1.0, %v973
      %v975 = vrcp.pop %v747
      %v976 = vmul.f32 %v747, %v975
      %v977 = vsub.f32 1.0, %v976
      %v978 = vmul.f32 %v975, %v977
      %v979 = vadd.f32 %v975, %v978
      %vm980 = vweird.f32 %v747
      %vm981 = vweird.f32 %v975
      %vm982 = vmor %vm980, %vm981
      %v983 = vsel %vm982, %v975, %v979
      %v984 = vand.u32 2147483647, %v747
      %vm985 = vcmp.eq.f32.partialorder %v984, 8.507059e+37
      %v986 = vand.u32 %v747, 2147483648
      %v987 = vor.u32 1.1754944e-38, %v986
      %v988 = vsel %vm985, %v987, %v983
      %v989 = vmul.f32 1.0, %v988
      %v990 = vrcp.pop %v748
      %v991 = vmul.f32 %v748, %v990
      %v992 = vsub.f32 1.0, %v991
      %v993 = vmul.f32 %v990, %v992
      %v994 = vadd.f32 %v990, %v993
      %vm995 = vweird.f32 %v748
      %vm996 = vweird.f32 %v990
      %vm997 = vmor %vm995, %vm996
      %v998 = vsel %vm997, %v990, %v994
      %v999 = vand.u32 2147483647, %v748
      %vm1000 = vcmp.eq.f32.partialorder %v999, 8.507059e+37
      %v1001 = vand.u32 %v748, 2147483648
      %v1002 = vor.u32 1.1754944e-38, %v1001
      %v1003 = vsel %vm1000, %v1002, %v998
      %v1004 = vmul.f32 1.0, %v1003
      %v1005 = vrcp.pop %v749
      %v1006 = vmul.f32 %v749, %v1005
      %v1007 = vsub.f32 1.0, %v1006
      %v1008 = vmul.f32 %v1005, %v1007
      %v1009 = vadd.f32 %v1005, %v1008
      %vm1010 = vweird.f32 %v749
      %vm1011 = vweird.f32 %v1005
      %vm1012 = vmor %vm1010, %vm1011
      %v1013 = vsel %vm1012, %v1005, %v1009
      %v1014 = vand.u32 2147483647, %v749
      %vm1015 = vcmp.eq.f32.partialorder %v1014, 8.507059e+37
      %v1016 = vand.u32 %v749, 2147483648
      %v1017 = vor.u32 1.1754944e-38, %v1016
      %v1018 = vsel %vm1015, %v1017, %v1013
      %v1019 = vmul.f32 1.0, %v1018
      %v1020 = vrcp.pop %v750
      %v1021 = vmul.f32 %v750, %v1020
      %v1022 = vsub.f32 1.0, %v1021
      %v1023 = vmul.f32 %v1020, %v1022
      %v1024 = vadd.f32 %v1020, %v1023
      %vm1025 = vweird.f32 %v750
      %vm1026 = vweird.f32 %v1020
      %vm1027 = vmor %vm1025, %vm1026
      %v1028 = vsel %vm1027, %v1020, %v1024
      %v1029 = vand.u32 2147483647, %v750
      %vm1030 = vcmp.eq.f32.partialorder %v1029, 8.507059e+37
      %v1031 = vand.u32 %v750, 2147483648
      %v1032 = vor.u32 1.1754944e-38, %v1031
      %v1033 = vsel %vm1030, %v1032, %v1028
      %v1034 = vmul.f32 1.0, %v1033
      %v1035 = vrcp.pop %v751
      %v1036 = vmul.f32 %v751, %v1035
      %v1037 = vsub.f32 1.0, %v1036
      %v1038 = vmul.f32 %v1035, %v1037
      %v1039 = vadd.f32 %v1035, %v1038
      %vm1040 = vweird.f32 %v751
      %vm1041 = vweird.f32 %v1035
      %vm1042 = vmor %vm1040, %vm1041
      %v1043 = vsel %vm1042, %v1035, %v1039
      %v1044 = vand.u32 2147483647, %v751
      %vm1045 = vcmp.eq.f32.partialorder %v1044, 8.507059e+37
      %v1046 = vand.u32 %v751, 2147483648
      %v1047 = vor.u32 1.1754944e-38, %v1046
      %v1048 = vsel %vm1045, %v1047, %v1043
      %v1049 = vmul.f32 1.0, %v1048
      %v1050 = vrcp.pop %v752
      %v1051 = vmul.f32 %v752, %v1050
      %v1052 = vsub.f32 1.0, %v1051
      %v1053 = vmul.f32 %v1050, %v1052
      %v1054 = vadd.f32 %v1050, %v1053
      %vm1055 = vweird.f32 %v752
      %vm1056 = vweird.f32 %v1050
      %vm1057 = vmor %vm1055, %vm1056
      %v1058 = vsel %vm1057, %v1050, %v1054
      %v1059 = vand.u32 2147483647, %v752
      %vm1060 = vcmp.eq.f32.partialorder %v1059, 8.507059e+37
      %v1061 = vand.u32 %v752, 2147483648
      %v1062 = vor.u32 1.1754944e-38, %v1061
      %v1063 = vsel %vm1060, %v1062, %v1058
      %v1064 = vmul.f32 1.0, %v1063
      %v1065 = vrcp.pop %v753
      %v1066 = vmul.f32 %v753, %v1065
      %v1067 = vsub.f32 1.0, %v1066
      %v1068 = vmul.f32 %v1065, %v1067
      %v1069 = vadd.f32 %v1065, %v1068
      %vm1070 = vweird.f32 %v753
      %vm1071 = vweird.f32 %v1065
      %vm1072 = vmor %vm1070, %vm1071
      %v1073 = vsel %vm1072, %v1065, %v1069
      %v1074 = vand.u32 2147483647, %v753
      %vm1075 = vcmp.eq.f32.partialorder %v1074, 8.507059e+37
      %v1076 = vand.u32 %v753, 2147483648
      %v1077 = vor.u32 1.1754944e-38, %v1076
      %v1078 = vsel %vm1075, %v1077, %v1073
      %v1079 = vmul.f32 1.0, %v1078
      %v1080 = vrcp.pop %v754
      %v1081 = vmul.f32 %v754, %v1080
      %v1082 = vsub.f32 1.0, %v1081
      %v1083 = vmul.f32 %v1080, %v1082
      %v1084 = vadd.f32 %v1080, %v1083
      %vm1085 = vweird.f32 %v754
      %vm1086 = vweird.f32 %v1080
      %vm1087 = vmor %vm1085, %vm1086
      %v1088 = vsel %vm1087, %v1080, %v1084
      %v1089 = vand.u32 2147483647, %v754
      %vm1090 = vcmp.eq.f32.partialorder %v1089, 8.507059e+37
      %v1091 = vand.u32 %v754, 2147483648
      %v1092 = vor.u32 1.1754944e-38, %v1091
      %v1093 = vsel %vm1090, %v1092, %v1088
      %v1094 = vmul.f32 1.0, %v1093
      %v1095 = vrcp.pop %v755
      %v1096 = vmul.f32 %v755, %v1095
      %v1097 = vsub.f32 1.0, %v1096
      %v1098 = vmul.f32 %v1095, %v1097
      %v1099 = vadd.f32 %v1095, %v1098
      %vm1100 = vweird.f32 %v755
      %vm1101 = vweird.f32 %v1095
      %vm1102 = vmor %vm1100, %vm1101
      %v1103 = vsel %vm1102, %v1095, %v1099
      %v1104 = vand.u32 2147483647, %v755
      %vm1105 = vcmp.eq.f32.partialorder %v1104, 8.507059e+37
      %v1106 = vand.u32 %v755, 2147483648
      %v1107 = vor.u32 1.1754944e-38, %v1106
      %v1108 = vsel %vm1105, %v1107, %v1103
      %v1109 = vmul.f32 1.0, %v1108
      %v1110 = vrcp.pop %v756
      %v1111 = vmul.f32 %v756, %v1110
      %v1112 = vsub.f32 1.0, %v1111
      %v1113 = vmul.f32 %v1110, %v1112
      %v1114 = vadd.f32 %v1110, %v1113
      %vm1115 = vweird.f32 %v756
      %vm1116 = vweird.f32 %v1110
      %vm1117 = vmor %vm1115, %vm1116
      %v1118 = vsel %vm1117, %v1110, %v1114
      %v1119 = vand.u32 2147483647, %v756
      %vm1120 = vcmp.eq.f32.partialorder %v1119, 8.507059e+37
      %v1121 = vand.u32 %v756, 2147483648
      %v1122 = vor.u32 1.1754944e-38, %v1121
      %v1123 = vsel %vm1120, %v1122, %v1118
      %v1124 = vmul.f32 1.0, %v1123
      %v1125 = vrcp.pop %v757
      %v1126 = vmul.f32 %v757, %v1125
      %v1127 = vsub.f32 1.0, %v1126
      %v1128 = vmul.f32 %v1125, %v1127
      %v1129 = vadd.f32 %v1125, %v1128
      %vm1130 = vweird.f32 %v757
      %vm1131 = vweird.f32 %v1125
      %vm1132 = vmor %vm1130, %vm1131
      %v1133 = vsel %vm1132, %v1125, %v1129
      %v1134 = vand.u32 2147483647, %v757
      %vm1135 = vcmp.eq.f32.partialorder %v1134, 8.507059e+37
      %v1136 = vand.u32 %v757, 2147483648
      %v1137 = vor.u32 1.1754944e-38, %v1136
      %v1138 = vsel %vm1135, %v1137, %v1133
      %v1139 = vmul.f32 1.0, %v1138
      %v1140 = vrcp.pop %v758
      %v1141 = vmul.f32 %v758, %v1140
      %v1142 = vsub.f32 1.0, %v1141
      %v1143 = vmul.f32 %v1140, %v1142
      %v1144 = vadd.f32 %v1140, %v1143
      %vm1145 = vweird.f32 %v758
      %vm1146 = vweird.f32 %v1140
      %vm1147 = vmor %vm1145, %vm1146
      %v1148 = vsel %vm1147, %v1140, %v1144
      %v1149 = vand.u32 2147483647, %v758
      %vm1150 = vcmp.eq.f32.partialorder %v1149, 8.507059e+37
      %v1151 = vand.u32 %v758, 2147483648
      %v1152 = vor.u32 1.1754944e-38, %v1151
      %v1153 = vsel %vm1150, %v1152, %v1148
      %v1154 = vmul.f32 1.0, %v1153
      %v1155 = vrcp.pop %v759
      %v1156 = vmul.f32 %v759, %v1155
      %v1157 = vsub.f32 1.0, %v1156
      %v1158 = vmul.f32 %v1155, %v1157
      %v1159 = vadd.f32 %v1155, %v1158
      %vm1160 = vweird.f32 %v759
      %vm1161 = vweird.f32 %v1155
      %vm1162 = vmor %vm1160, %vm1161
      %v1163 = vsel %vm1162, %v1155, %v1159
      %v1164 = vand.u32 2147483647, %v759
      %vm1165 = vcmp.eq.f32.partialorder %v1164, 8.507059e+37
      %v1166 = vand.u32 %v759, 2147483648
      %v1167 = vor.u32 1.1754944e-38, %v1166
      %v1168 = vsel %vm1165, %v1167, %v1163
      %v1169 = vmul.f32 1.0, %v1168
      %v1170 = vrcp.pop %v760
      %v1171 = vmul.f32 %v760, %v1170
      %v1172 = vsub.f32 1.0, %v1171
      %v1173 = vmul.f32 %v1170, %v1172
      %v1174 = vadd.f32 %v1170, %v1173
      %vm1175 = vweird.f32 %v760
      %vm1176 = vweird.f32 %v1170
      %vm1177 = vmor %vm1175, %vm1176
      %v1178 = vsel %vm1177, %v1170, %v1174
      %v1179 = vand.u32 2147483647, %v760
      %vm1180 = vcmp.eq.f32.partialorder %v1179, 8.507059e+37
      %v1181 = vand.u32 %v760, 2147483648
      %v1182 = vor.u32 1.1754944e-38, %v1181
      %v1183 = vsel %vm1180, %v1182, %v1178
      %v1184 = vmul.f32 1.0, %v1183
      %v1185 = vrcp.pop %v761
      %v1186 = vmul.f32 %v761, %v1185
      %v1187 = vsub.f32 1.0, %v1186
      %v1188 = vmul.f32 %v1185, %v1187
      %v1189 = vadd.f32 %v1185, %v1188
      %vm1190 = vweird.f32 %v761
      %vm1191 = vweird.f32 %v1185
      %vm1192 = vmor %vm1190, %vm1191
      %v1193 = vsel %vm1192, %v1185, %v1189
      %v1194 = vand.u32 2147483647, %v761
      %vm1195 = vcmp.eq.f32.partialorder %v1194, 8.507059e+37
      %v1196 = vand.u32 %v761, 2147483648
      %v1197 = vor.u32 1.1754944e-38, %v1196
      %v1198 = vsel %vm1195, %v1197, %v1193
      %v1199 = vmul.f32 1.0, %v1198
      %v1200 = vrcp.pop %v762
      %v1201 = vmul.f32 %v762, %v1200
      %v1202 = vsub.f32 1.0, %v1201
      %v1203 = vmul.f32 %v1200, %v1202
      %v1204 = vadd.f32 %v1200, %v1203
      %vm1205 = vweird.f32 %v762
      %vm1206 = vweird.f32 %v1200
      %vm1207 = vmor %vm1205, %vm1206
      %v1208 = vsel %vm1207, %v1200, %v1204
      %v1209 = vand.u32 2147483647, %v762
      %vm1210 = vcmp.eq.f32.partialorder %v1209, 8.507059e+37
      %v1211 = vand.u32 %v762, 2147483648
      %v1212 = vor.u32 1.1754944e-38, %v1211
      %v1213 = vsel %vm1210, %v1212, %v1208
      %v1214 = vmul.f32 1.0, %v1213
      %v1215 = vrcp.pop %v763
      %v1216 = vmul.f32 %v763, %v1215
      %v1217 = vsub.f32 1.0, %v1216
      %v1218 = vmul.f32 %v1215, %v1217
      %v1219 = vadd.f32 %v1215, %v1218
      %vm1220 = vweird.f32 %v763
      %vm1221 = vweird.f32 %v1215
      %vm1222 = vmor %vm1220, %vm1221
      %v1223 = vsel %vm1222, %v1215, %v1219
      %v1224 = vand.u32 2147483647, %v763
      %vm1225 = vcmp.eq.f32.partialorder %v1224, 8.507059e+37
      %v1226 = vand.u32 %v763, 2147483648
      %v1227 = vor.u32 1.1754944e-38, %v1226
      %v1228 = vsel %vm1225, %v1227, %v1223
      %v1229 = vmul.f32 1.0, %v1228
      %v1230 = vrcp.pop %v764
      %v1231 = vmul.f32 %v764, %v1230
      %v1232 = vsub.f32 1.0, %v1231
      %v1233 = vmul.f32 %v1230, %v1232
      %v1234 = vadd.f32 %v1230, %v1233
      %vm1235 = vweird.f32 %v764
      %vm1236 = vweird.f32 %v1230
      %vm1237 = vmor %vm1235, %vm1236
      %v1238 = vsel %vm1237, %v1230, %v1234
      %v1239 = vand.u32 2147483647, %v764
      %vm1240 = vcmp.eq.f32.partialorder %v1239, 8.507059e+37
      %v1241 = vand.u32 %v764, 2147483648
      %v1242 = vor.u32 1.1754944e-38, %v1241
      %v1243 = vsel %vm1240, %v1242, %v1238
      %v1244 = vmul.f32 1.0, %v1243
      %v1245 = vmul.f32 %v542, %v779
      %v1246 = vmul.f32 %v545, %v794
      %v1247 = vmul.f32 %v548, %v809
      %v1248 = vmul.f32 %v551, %v824
      %v1249 = vmul.f32 %v554, %v839
      %v1250 = vmul.f32 %v557, %v854
      %v1251 = vmul.f32 %v560, %v869
      %v1252 = vmul.f32 %v563, %v884
      %v1253 = vmul.f32 %v566, %v899
      %v1254 = vmul.f32 %v569, %v914
      %v1255 = vmul.f32 %v572, %v929
      %v1256 = vmul.f32 %v575, %v944
      %v1257 = vmul.f32 %v578, %v959
      %v1258 = vmul.f32 %v581, %v974
      %v1259 = vmul.f32 %v584, %v989
      %v1260 = vmul.f32 %v587, %v1004
      %v1261 = vmul.f32 %v590, %v1019
      %v1262 = vmul.f32 %v593, %v1034
      %v1263 = vmul.f32 %v596, %v1049
      %v1264 = vmul.f32 %v599, %v1064
      %v1265 = vmul.f32 %v602, %v1079
      %v1266 = vmul.f32 %v605, %v1094
      %v1267 = vmul.f32 %v608, %v1109
      %v1268 = vmul.f32 %v611, %v1124
      %v1269 = vmul.f32 %v614, %v1139
      %v1270 = vmul.f32 %v617, %v1154
      %v1271 = vmul.f32 %v620, %v1169
      %v1272 = vmul.f32 %v623, %v1184
      %v1273 = vmul.f32 %v626, %v1199
      %v1274 = vmul.f32 %v629, %v1214
      %v1275 = vmul.f32 %v632, %v1229
      %v1276 = vmul.f32 %v635, %v1244
      %vm1277 = vcmask 261120
      %1278 = vst.msk [vmem:[#allocation2] sm:$0xff] %vm1277, 0.0
      %1279 = vst.msk [vmem:[#allocation2 + $0x8] sm:$0xff] %vm1277, 0.0
      %vm1280 = vcmask 254976
      %1281 = vst.msk [vmem:[#allocation2 + $0x10] sm:$0x3] %vm1280, 0.0
      %1282 = vst.msk [vmem:[#allocation2 + $0x18] sm:$0xff] %vm1277, 0.0
      %1283 = vst.msk [vmem:[#allocation2 + $0x20] sm:$0xff] %vm1277, 0.0
      %1284 = vst.msk [vmem:[#allocation2 + $0x28] sm:$0x3] %vm1280, 0.0
      %1285 = vst.msk [vmem:[#allocation2 + $0x30] sm:$0xff] %vm1277, 0.0
      %1286 = vst.msk [vmem:[#allocation2 + $0x38] sm:$0xff] %vm1277, 0.0
      %1287 = vst.msk [vmem:[#allocation2 + $0x40] sm:$0x3] %vm1280, 0.0
      %1288 = vst.msk [vmem:[#allocation2 + $0x48] sm:$0xff] %vm1277, 0.0
      %1289 = vst.msk [vmem:[#allocation2 + $0x50] sm:$0xff] %vm1277, 0.0
      %1290 = vst.msk [vmem:[#allocation2 + $0x58] sm:$0x3] %vm1280, 0.0
      %1291 = vst.msk [vmem:[#allocation2 + $0x60] sm:$0xff] %vm1277, 0.0
      %1292 = vst.msk [vmem:[#allocation2 + $0x68] sm:$0xff] %vm1277, 0.0
      %1293 = vst.msk [vmem:[#allocation2 + $0x70] sm:$0x3] %vm1280, 0.0
      %1294 = vst.msk [vmem:[#allocation2 + $0x78] sm:$0xff] %vm1277, 0.0
      %1295 = vst.msk [vmem:[#allocation2 + $0x80] sm:$0xff] %vm1277, 0.0
      %1296 = vst.msk [vmem:[#allocation2 + $0x88] sm:$0x3] %vm1280, 0.0
      %1297 = vst.msk [vmem:[#allocation2 + $0x90] sm:$0xff] %vm1277, 0.0
      %1298 = vst.msk [vmem:[#allocation2 + $0x98] sm:$0xff] %vm1277, 0.0
      %1299 = vst.msk [vmem:[#allocation2 + $0xa0] sm:$0x3] %vm1280, 0.0
      %1300 = vst.msk [vmem:[#allocation2 + $0xa8] sm:$0xff] %vm1277, 0.0
      %1301 = vst.msk [vmem:[#allocation2 + $0xb0] sm:$0xff] %vm1277, 0.0
      %1302 = vst.msk [vmem:[#allocation2 + $0xb8] sm:$0x3] %vm1280, 0.0
      %1303 = vst.msk [vmem:[#allocation2 + $0xc0] sm:$0xff] %vm1277, 0.0
      %1304 = vst.msk [vmem:[#allocation2 + $0xc8] sm:$0xff] %vm1277, 0.0
      %1305 = vst.msk [vmem:[#allocation2 + $0xd0] sm:$0x3] %vm1280, 0.0
      %1306 = vst.msk [vmem:[#allocation2 + $0xd8] sm:$0xff] %vm1277, 0.0
      %1307 = vst.msk [vmem:[#allocation2 + $0xe0] sm:$0xff] %vm1277, 0.0
      %1308 = vst.msk [vmem:[#allocation2 + $0xe8] sm:$0x3] %vm1280, 0.0
      %1309 = vst.msk [vmem:[#allocation2 + $0xf0] sm:$0xff] %vm1277, 0.0
      %1310 = vst.msk [vmem:[#allocation2 + $0xf8] sm:$0xff] %vm1277, 0.0
      %1311 = vst.msk [vmem:[#allocation2 + $0x100] sm:$0x3] %vm1280, 0.0
      %1312 = vst.msk [vmem:[#allocation2 + $0x108] sm:$0xff] %vm1277, 0.0
      %1313 = vst.msk [vmem:[#allocation2 + $0x110] sm:$0xff] %vm1277, 0.0
      %1314 = vst.msk [vmem:[#allocation2 + $0x118] sm:$0x3] %vm1280, 0.0
      %1315 = vst.msk [vmem:[#allocation2 + $0x120] sm:$0xff] %vm1277, 0.0
      %1316 = vst.msk [vmem:[#allocation2 + $0x128] sm:$0xff] %vm1277, 0.0
      %1317 = vst.msk [vmem:[#allocation2 + $0x130] sm:$0x3] %vm1280, 0.0
      %1318 = vst.msk [vmem:[#allocation2 + $0x138] sm:$0xff] %vm1277, 0.0
      %1319 = vst.msk [vmem:[#allocation2 + $0x140] sm:$0xff] %vm1277, 0.0
      %1320 = vst.msk [vmem:[#allocation2 + $0x148] sm:$0x3] %vm1280, 0.0
      %1321 = vst.msk [vmem:[#allocation2 + $0x150] sm:$0xff] %vm1277, 0.0
      %1322 = vst.msk [vmem:[#allocation2 + $0x158] sm:$0xff] %vm1277, 0.0
      %1323 = vst.msk [vmem:[#allocation2 + $0x160] sm:$0x3] %vm1280, 0.0
      %1324 = vst.msk [vmem:[#allocation2 + $0x168] sm:$0xff] %vm1277, 0.0
      %1325 = vst.msk [vmem:[#allocation2 + $0x170] sm:$0xff] %vm1277, 0.0
      %1326 = vst.msk [vmem:[#allocation2 + $0x178] sm:$0x3] %vm1280, 0.0
      %1327 = vst.msk [vmem:[#allocation2 + $0x180] sm:$0xff] %vm1277, 0.0
      %1328 = vst.msk [vmem:[#allocation2 + $0x188] sm:$0xff] %vm1277, 0.0
      %1329 = vst.msk [vmem:[#allocation2 + $0x190] sm:$0x3] %vm1280, 0.0
      %1330 = vst.msk [vmem:[#allocation2 + $0x198] sm:$0xff] %vm1277, 0.0
      %1331 = vst.msk [vmem:[#allocation2 + $0x1a0] sm:$0xff] %vm1277, 0.0
      %1332 = vst.msk [vmem:[#allocation2 + $0x1a8] sm:$0x3] %vm1280, 0.0
      %s1333 = scalar_lea.vmem [#allocation2], 24
      %1334 = vst.msk [vmem:[%s1333 + $0x1] sm:$0xff] %vm1277, %v1245
      %1335 = vst.msk [vmem:[%s1333 + $0x9] sm:$0xff] %vm1277, %v1246
      %1336 = vst.msk [vmem:[%s1333 + $0x19] sm:$0xff] %vm1277, %v1247
      %1337 = vst.msk [vmem:[%s1333 + $0x21] sm:$0xff] %vm1277, %v1248
      %1338 = vst.msk [vmem:[%s1333 + $0x31] sm:$0xff] %vm1277, %v1249
      %1339 = vst.msk [vmem:[%s1333 + $0x39] sm:$0xff] %vm1277, %v1250
      %1340 = vst.msk [vmem:[%s1333 + $0x49] sm:$0xff] %vm1277, %v1251
      %1341 = vst.msk [vmem:[%s1333 + $0x51] sm:$0xff] %vm1277, %v1252
      %1342 = vst.msk [vmem:[%s1333 + $0x61] sm:$0xff] %vm1277, %v1253
      %1343 = vst.msk [vmem:[%s1333 + $0x69] sm:$0xff] %vm1277, %v1254
      %1344 = vst.msk [vmem:[%s1333 + $0x79] sm:$0xff] %vm1277, %v1255
      %1345 = vst.msk [vmem:[%s1333 + $0x81] sm:$0xff] %vm1277, %v1256
      %1346 = vst.msk [vmem:[%s1333 + $0x91] sm:$0xff] %vm1277, %v1257
      %1347 = vst.msk [vmem:[%s1333 + $0x99] sm:$0xff] %vm1277, %v1258
      %1348 = vst.msk [vmem:[%s1333 + $0xa9] sm:$0xff] %vm1277, %v1259
      %1349 = vst.msk [vmem:[%s1333 + $0xb1] sm:$0xff] %vm1277, %v1260
      %1350 = vst.msk [vmem:[%s1333 + $0xc1] sm:$0xff] %vm1277, %v1261
      %1351 = vst.msk [vmem:[%s1333 + $0xc9] sm:$0xff] %vm1277, %v1262
      %1352 = vst.msk [vmem:[%s1333 + $0xd9] sm:$0xff] %vm1277, %v1263
      %1353 = vst.msk [vmem:[%s1333 + $0xe1] sm:$0xff] %vm1277, %v1264
      %1354 = vst.msk [vmem:[%s1333 + $0xf1] sm:$0xff] %vm1277, %v1265
      %1355 = vst.msk [vmem:[%s1333 + $0xf9] sm:$0xff] %vm1277, %v1266
      %1356 = vst.msk [vmem:[%s1333 + $0x109] sm:$0xff] %vm1277, %v1267
      %1357 = vst.msk [vmem:[%s1333 + $0x111] sm:$0xff] %vm1277, %v1268
      %1358 = vst.msk [vmem:[%s1333 + $0x121] sm:$0xff] %vm1277, %v1269
      %1359 = vst.msk [vmem:[%s1333 + $0x129] sm:$0xff] %vm1277, %v1270
      %1360 = vst.msk [vmem:[%s1333 + $0x139] sm:$0xff] %vm1277, %v1271
      %1361 = vst.msk [vmem:[%s1333 + $0x141] sm:$0xff] %vm1277, %v1272
      %1362 = vst.msk [vmem:[%s1333 + $0x151] sm:$0xff] %vm1277, %v1273
      %1363 = vst.msk [vmem:[%s1333 + $0x159] sm:$0xff] %vm1277, %v1274
      %1364 = vst.msk [vmem:[%s1333 + $0x169] sm:$0xff] %vm1277, %v1275
      %1365 = vst.msk [vmem:[%s1333 + $0x171] sm:$0xff] %vm1277, %v1276
      %v1366 = vld [vmem:[%s3] sm:$0x7]
      %v1367 = vld [vmem:[%s3 + $0x4] sm:$0x7]
      %v1368 = vld [vmem:[%s3 + $0x8] sm:$0x7]
      %v1369 = vld [vmem:[#allocation2] sm:$0xff]
      %v1370 = vld [vmem:[#allocation2 + $0x8] sm:$0xff]
      %v1371 = vld [vmem:[#allocation2 + $0x18] sm:$0xff]
      %v1372 = vld [vmem:[#allocation2 + $0x20] sm:$0xff]
      %v1373 = vld [vmem:[#allocation2 + $0x30] sm:$0xff]
      %v1374 = vld [vmem:[#allocation2 + $0x38] sm:$0xff]
      %v1375 = vld [vmem:[#allocation2 + $0x48] sm:$0xff]
      %v1376 = vld [vmem:[#allocation2 + $0x50] sm:$0xff]
      %v1377 = vld [vmem:[#allocation2 + $0x60] sm:$0xff]
      %v1378 = vld [vmem:[#allocation2 + $0x68] sm:$0xff]
      %v1379 = vld [vmem:[#allocation2 + $0x78] sm:$0xff]
      %v1380 = vld [vmem:[#allocation2 + $0x80] sm:$0xff]
      %v1381 = vld [vmem:[#allocation2 + $0x90] sm:$0xff]
      %v1382 = vld [vmem:[#allocation2 + $0x98] sm:$0xff]
      %v1383 = vld [vmem:[#allocation2 + $0xa8] sm:$0xff]
      %v1384 = vld [vmem:[#allocation2 + $0xb0] sm:$0xff]
      %v1385 = vld [vmem:[#allocation2 + $0xc0] sm:$0xff]
      %v1386 = vld [vmem:[#allocation2 + $0xc8] sm:$0xff]
      %v1387 = vld [vmem:[#allocation2 + $0xd8] sm:$0xff]
      %v1388 = vld [vmem:[#allocation2 + $0xe0] sm:$0xff]
      %v1389 = vld [vmem:[#allocation2 + $0xf0] sm:$0xff]
      %v1390 = vld [vmem:[#allocation2 + $0xf8] sm:$0xff]
      %v1391 = vld [vmem:[#allocation2 + $0x108] sm:$0xff]
      %v1392 = vld [vmem:[#allocation2 + $0x110] sm:$0xff]
      %v1393 = vld [vmem:[#allocation2 + $0x120] sm:$0xff]
      %v1394 = vld [vmem:[#allocation2 + $0x128] sm:$0xff]
      %v1395 = vld [vmem:[#allocation2 + $0x138] sm:$0xff]
      %v1396 = vld [vmem:[#allocation2 + $0x140] sm:$0xff]
      %v1397 = vld [vmem:[#allocation2 + $0x150] sm:$0xff]
      %v1398 = vld [vmem:[#allocation2 + $0x158] sm:$0xff]
      %v1399 = vld [vmem:[#allocation2 + $0x168] sm:$0xff]
      %v1400 = vld [vmem:[#allocation2 + $0x170] sm:$0xff]
      %v1401 = vperm.slane %v1366, 0
      %v1402 = vmul.f32 %v1369, %v1401
      %v1403 = vmul.f32 %v1370, %v1401
      %v1404 = vmul.f32 %v1371, %v1401
      %v1405 = vmul.f32 %v1372, %v1401
      %v1406 = vmul.f32 %v1373, %v1401
      %v1407 = vmul.f32 %v1374, %v1401
      %v1408 = vmul.f32 %v1375, %v1401
      %v1409 = vmul.f32 %v1376, %v1401
      %v1410 = vmul.f32 %v1377, %v1401
      %v1411 = vmul.f32 %v1378, %v1401
      %v1412 = vmul.f32 %v1379, %v1401
      %v1413 = vmul.f32 %v1380, %v1401
      %v1414 = vmul.f32 %v1381, %v1401
      %v1415 = vmul.f32 %v1382, %v1401
      %v1416 = vmul.f32 %v1383, %v1401
      %v1417 = vmul.f32 %v1384, %v1401
      %v1418 = vmul.f32 %v1385, %v1401
      %v1419 = vmul.f32 %v1386, %v1401
      %v1420 = vmul.f32 %v1387, %v1401
      %v1421 = vmul.f32 %v1388, %v1401
      %v1422 = vmul.f32 %v1389, %v1401
      %v1423 = vmul.f32 %v1390, %v1401
      %v1424 = vmul.f32 %v1391, %v1401
      %v1425 = vmul.f32 %v1392, %v1401
      %v1426 = vmul.f32 %v1393, %v1401
      %v1427 = vmul.f32 %v1394, %v1401
      %v1428 = vmul.f32 %v1395, %v1401
      %v1429 = vmul.f32 %v1396, %v1401
      %v1430 = vmul.f32 %v1397, %v1401
      %v1431 = vmul.f32 %v1398, %v1401
      %v1432 = vmul.f32 %v1399, %v1401
      %v1433 = vmul.f32 %v1400, %v1401
      %v1434 = vadd.f32 %v1402, 0.0
      %v1435 = vadd.f32 %v1403, 0.0
      %v1436 = vadd.f32 %v1404, 0.0
      %v1437 = vadd.f32 %v1405, 0.0
      %v1438 = vadd.f32 %v1406, 0.0
      %v1439 = vadd.f32 %v1407, 0.0
      %v1440 = vadd.f32 %v1408, 0.0
      %v1441 = vadd.f32 %v1409, 0.0
      %v1442 = vadd.f32 %v1410, 0.0
      %v1443 = vadd.f32 %v1411, 0.0
      %v1444 = vadd.f32 %v1412, 0.0
      %v1445 = vadd.f32 %v1413, 0.0
      %v1446 = vadd.f32 %v1414, 0.0
      %v1447 = vadd.f32 %v1415, 0.0
      %v1448 = vadd.f32 %v1416, 0.0
      %v1449 = vadd.f32 %v1417, 0.0
      %v1450 = vadd.f32 %v1418, 0.0
      %v1451 = vadd.f32 %v1419, 0.0
      %v1452 = vadd.f32 %v1420, 0.0
      %v1453 = vadd.f32 %v1421, 0.0
      %v1454 = vadd.f32 %v1422, 0.0
      %v1455 = vadd.f32 %v1423, 0.0
      %v1456 = vadd.f32 %v1424, 0.0
      %v1457 = vadd.f32 %v1425, 0.0
      %v1458 = vadd.f32 %v1426, 0.0
      %v1459 = vadd.f32 %v1427, 0.0
      %v1460 = vadd.f32 %v1428, 0.0
      %v1461 = vadd.f32 %v1429, 0.0
      %v1462 = vadd.f32 %v1430, 0.0
      %v1463 = vadd.f32 %v1431, 0.0
      %v1464 = vadd.f32 %v1432, 0.0
      %v1465 = vadd.f32 %v1433, 0.0
      %v1466 = vld [vmem:[#allocation2 + $0x1] sm:$0xff]
      %v1467 = vld [vmem:[#allocation2 + $0x9] sm:$0xff]
      %v1468 = vld [vmem:[#allocation2 + $0x19] sm:$0xff]
      %v1469 = vld [vmem:[#allocation2 + $0x21] sm:$0xff]
      %v1470 = vld [vmem:[#allocation2 + $0x31] sm:$0xff]
      %v1471 = vld [vmem:[#allocation2 + $0x39] sm:$0xff]
      %v1472 = vld [vmem:[#allocation2 + $0x49] sm:$0xff]
      %v1473 = vld [vmem:[#allocation2 + $0x51] sm:$0xff]
      %v1474 = vld [vmem:[#allocation2 + $0x61] sm:$0xff]
      %v1475 = vld [vmem:[#allocation2 + $0x69] sm:$0xff]
      %v1476 = vld [vmem:[#allocation2 + $0x79] sm:$0xff]
      %v1477 = vld [vmem:[#allocation2 + $0x81] sm:$0xff]
      %v1478 = vld [vmem:[#allocation2 + $0x91] sm:$0xff]
      %v1479 = vld [vmem:[#allocation2 + $0x99] sm:$0xff]
      %v1480 = vld [vmem:[#allocation2 + $0xa9] sm:$0xff]
      %v1481 = vld [vmem:[#allocation2 + $0xb1] sm:$0xff]
      %v1482 = vld [vmem:[#allocation2 + $0xc1] sm:$0xff]
      %v1483 = vld [vmem:[#allocation2 + $0xc9] sm:$0xff]
      %v1484 = vld [vmem:[#allocation2 + $0xd9] sm:$0xff]
      %v1485 = vld [vmem:[#allocation2 + $0xe1] sm:$0xff]
      %v1486 = vld [vmem:[#allocation2 + $0xf1] sm:$0xff]
      %v1487 = vld [vmem:[#allocation2 + $0xf9] sm:$0xff]
      %v1488 = vld [vmem:[#allocation2 + $0x109] sm:$0xff]
      %v1489 = vld [vmem:[#allocation2 + $0x111] sm:$0xff]
      %v1490 = vld [vmem:[#allocation2 + $0x121] sm:$0xff]
      %v1491 = vld [vmem:[#allocation2 + $0x129] sm:$0xff]
      %v1492 = vld [vmem:[#allocation2 + $0x139] sm:$0xff]
      %v1493 = vld [vmem:[#allocation2 + $0x141] sm:$0xff]
      %v1494 = vld [vmem:[#allocation2 + $0x151] sm:$0xff]
      %v1495 = vld [vmem:[#allocation2 + $0x159] sm:$0xff]
      %v1496 = vld [vmem:[#allocation2 + $0x169] sm:$0xff]
      %v1497 = vld [vmem:[#allocation2 + $0x171] sm:$0xff]
      %v1498 = vperm.slane %v1366, 1
      %v1499 = vmul.f32 %v1466, %v1498
      %v1500 = vmul.f32 %v1467, %v1498
      %v1501 = vmul.f32 %v1468, %v1498
      %v1502 = vmul.f32 %v1469, %v1498
      %v1503 = vmul.f32 %v1470, %v1498
      %v1504 = vmul.f32 %v1471, %v1498
      %v1505 = vmul.f32 %v1472, %v1498
      %v1506 = vmul.f32 %v1473, %v1498
      %v1507 = vmul.f32 %v1474, %v1498
      %v1508 = vmul.f32 %v1475, %v1498
      %v1509 = vmul.f32 %v1476, %v1498
      %v1510 = vmul.f32 %v1477, %v1498
      %v1511 = vmul.f32 %v1478, %v1498
      %v1512 = vmul.f32 %v1479, %v1498
      %v1513 = vmul.f32 %v1480, %v1498
      %v1514 = vmul.f32 %v1481, %v1498
      %v1515 = vmul.f32 %v1482, %v1498
      %v1516 = vmul.f32 %v1483, %v1498
      %v1517 = vmul.f32 %v1484, %v1498
      %v1518 = vmul.f32 %v1485, %v1498
      %v1519 = vmul.f32 %v1486, %v1498
      %v1520 = vmul.f32 %v1487, %v1498
      %v1521 = vmul.f32 %v1488, %v1498
      %v1522 = vmul.f32 %v1489, %v1498
      %v1523 = vmul.f32 %v1490, %v1498
      %v1524 = vmul.f32 %v1491, %v1498
      %v1525 = vmul.f32 %v1492, %v1498
      %v1526 = vmul.f32 %v1493, %v1498
      %v1527 = vmul.f32 %v1494, %v1498
      %v1528 = vmul.f32 %v1495, %v1498
      %v1529 = vmul.f32 %v1496, %v1498
      %v1530 = vmul.f32 %v1497, %v1498
      %v1531 = vadd.f32 %v1434, %v1499
      %v1532 = vadd.f32 %v1435, %v1500
      %v1533 = vadd.f32 %v1436, %v1501
      %v1534 = vadd.f32 %v1437, %v1502
      %v1535 = vadd.f32 %v1438, %v1503
      %v1536 = vadd.f32 %v1439, %v1504
      %v1537 = vadd.f32 %v1440, %v1505
      %v1538 = vadd.f32 %v1441, %v1506
      %v1539 = vadd.f32 %v1442, %v1507
      %v1540 = vadd.f32 %v1443, %v1508
      %v1541 = vadd.f32 %v1444, %v1509
      %v1542 = vadd.f32 %v1445, %v1510
      %v1543 = vadd.f32 %v1446, %v1511
      %v1544 = vadd.f32 %v1447, %v1512
      %v1545 = vadd.f32 %v1448, %v1513
      %v1546 = vadd.f32 %v1449, %v1514
      %v1547 = vadd.f32 %v1450, %v1515
      %v1548 = vadd.f32 %v1451, %v1516
      %v1549 = vadd.f32 %v1452, %v1517
      %v1550 = vadd.f32 %v1453, %v1518
      %v1551 = vadd.f32 %v1454, %v1519
      %v1552 = vadd.f32 %v1455, %v1520
      %v1553 = vadd.f32 %v1456, %v1521
      %v1554 = vadd.f32 %v1457, %v1522
      %v1555 = vadd.f32 %v1458, %v1523
      %v1556 = vadd.f32 %v1459, %v1524
      %v1557 = vadd.f32 %v1460, %v1525
      %v1558 = vadd.f32 %v1461, %v1526
      %v1559 = vadd.f32 %v1462, %v1527
      %v1560 = vadd.f32 %v1463, %v1528
      %v1561 = vadd.f32 %v1464, %v1529
      %v1562 = vadd.f32 %v1465, %v1530
      %v1563 = vld [vmem:[#allocation2 + $0x2] sm:$0xff]
      %v1564 = vld [vmem:[#allocation2 + $0xa] sm:$0xff]
      %v1565 = vld [vmem:[#allocation2 + $0x1a] sm:$0xff]
      %v1566 = vld [vmem:[#allocation2 + $0x22] sm:$0xff]
      %v1567 = vld [vmem:[#allocation2 + $0x32] sm:$0xff]
      %v1568 = vld [vmem:[#allocation2 + $0x3a] sm:$0xff]
      %v1569 = vld [vmem:[#allocation2 + $0x4a] sm:$0xff]
      %v1570 = vld [vmem:[#allocation2 + $0x52] sm:$0xff]
      %v1571 = vld [vmem:[#allocation2 + $0x62] sm:$0xff]
      %v1572 = vld [vmem:[#allocation2 + $0x6a] sm:$0xff]
      %v1573 = vld [vmem:[#allocation2 + $0x7a] sm:$0xff]
      %v1574 = vld [vmem:[#allocation2 + $0x82] sm:$0xff]
      %v1575 = vld [vmem:[#allocation2 + $0x92] sm:$0xff]
      %v1576 = vld [vmem:[#allocation2 + $0x9a] sm:$0xff]
      %v1577 = vld [vmem:[#allocation2 + $0xaa] sm:$0xff]
      %v1578 = vld [vmem:[#allocation2 + $0xb2] sm:$0xff]
      %v1579 = vld [vmem:[#allocation2 + $0xc2] sm:$0xff]
      %v1580 = vld [vmem:[#allocation2 + $0xca] sm:$0xff]
      %v1581 = vld [vmem:[#allocation2 + $0xda] sm:$0xff]
      %v1582 = vld [vmem:[#allocation2 + $0xe2] sm:$0xff]
      %v1583 = vld [vmem:[#allocation2 + $0xf2] sm:$0xff]
      %v1584 = vld [vmem:[#allocation2 + $0xfa] sm:$0xff]
      %v1585 = vld [vmem:[#allocation2 + $0x10a] sm:$0xff]
      %v1586 = vld [vmem:[#allocation2 + $0x112] sm:$0xff]
      %v1587 = vld [vmem:[#allocation2 + $0x122] sm:$0xff]
      %v1588 = vld [vmem:[#allocation2 + $0x12a] sm:$0xff]
      %v1589 = vld [vmem:[#allocation2 + $0x13a] sm:$0xff]
      %v1590 = vld [vmem:[#allocation2 + $0x142] sm:$0xff]
      %v1591 = vld [vmem:[#allocation2 + $0x152] sm:$0xff]
      %v1592 = vld [vmem:[#allocation2 + $0x15a] sm:$0xff]
      %v1593 = vld [vmem:[#allocation2 + $0x16a] sm:$0xff]
      %v1594 = vld [vmem:[#allocation2 + $0x172] sm:$0xff]
      %v1595 = vperm.slane %v1366, 2
      %v1596 = vmul.f32 %v1563, %v1595
      %v1597 = vmul.f32 %v1564, %v1595
      %v1598 = vmul.f32 %v1565, %v1595
      %v1599 = vmul.f32 %v1566, %v1595
      %v1600 = vmul.f32 %v1567, %v1595
      %v1601 = vmul.f32 %v1568, %v1595
      %v1602 = vmul.f32 %v1569, %v1595
      %v1603 = vmul.f32 %v1570, %v1595
      %v1604 = vmul.f32 %v1571, %v1595
      %v1605 = vmul.f32 %v1572, %v1595
      %v1606 = vmul.f32 %v1573, %v1595
      %v1607 = vmul.f32 %v1574, %v1595
      %v1608 = vmul.f32 %v1575, %v1595
      %v1609 = vmul.f32 %v1576, %v1595
      %v1610 = vmul.f32 %v1577, %v1595
      %v1611 = vmul.f32 %v1578, %v1595
      %v1612 = vmul.f32 %v1579, %v1595
      %v1613 = vmul.f32 %v1580, %v1595
      %v1614 = vmul.f32 %v1581, %v1595
      %v1615 = vmul.f32 %v1582, %v1595
      %v1616 = vmul.f32 %v1583, %v1595
      %v1617 = vmul.f32 %v1584, %v1595
      %v1618 = vmul.f32 %v1585, %v1595
      %v1619 = vmul.f32 %v1586, %v1595
      %v1620 = vmul.f32 %v1587, %v1595
      %v1621 = vmul.f32 %v1588, %v1595
      %v1622 = vmul.f32 %v1589, %v1595
      %v1623 = vmul.f32 %v1590, %v1595
      %v1624 = vmul.f32 %v1591, %v1595
      %v1625 = vmul.f32 %v1592, %v1595
      %v1626 = vmul.f32 %v1593, %v1595
      %v1627 = vmul.f32 %v1594, %v1595
      %v1628 = vadd.f32 %v1531, %v1596
      %v1629 = vadd.f32 %v1532, %v1597
      %v1630 = vadd.f32 %v1533, %v1598
      %v1631 = vadd.f32 %v1534, %v1599
      %v1632 = vadd.f32 %v1535, %v1600
      %v1633 = vadd.f32 %v1536, %v1601
      %v1634 = vadd.f32 %v1537, %v1602
      %v1635 = vadd.f32 %v1538, %v1603
      %v1636 = vadd.f32 %v1539, %v1604
      %v1637 = vadd.f32 %v1540, %v1605
      %v1638 = vadd.f32 %v1541, %v1606
      %v1639 = vadd.f32 %v1542, %v1607
      %v1640 = vadd.f32 %v1543, %v1608
      %v1641 = vadd.f32 %v1544, %v1609
      %v1642 = vadd.f32 %v1545, %v1610
      %v1643 = vadd.f32 %v1546, %v1611
      %v1644 = vadd.f32 %v1547, %v1612
      %v1645 = vadd.f32 %v1548, %v1613
      %v1646 = vadd.f32 %v1549, %v1614
      %v1647 = vadd.f32 %v1550, %v1615
      %v1648 = vadd.f32 %v1551, %v1616
      %v1649 = vadd.f32 %v1552, %v1617
      %v1650 = vadd.f32 %v1553, %v1618
      %v1651 = vadd.f32 %v1554, %v1619
      %v1652 = vadd.f32 %v1555, %v1620
      %v1653 = vadd.f32 %v1556, %v1621
      %v1654 = vadd.f32 %v1557, %v1622
      %v1655 = vadd.f32 %v1558, %v1623
      %v1656 = vadd.f32 %v1559, %v1624
      %v1657 = vadd.f32 %v1560, %v1625
      %v1658 = vadd.f32 %v1561, %v1626
      %v1659 = vadd.f32 %v1562, %v1627
      %v1660 = vld [vmem:[%s1333] sm:$0xff]
      %v1661 = vld [vmem:[%s1333 + $0x8] sm:$0xff]
      %v1662 = vld [vmem:[%s1333 + $0x18] sm:$0xff]
      %v1663 = vld [vmem:[%s1333 + $0x20] sm:$0xff]
      %v1664 = vld [vmem:[%s1333 + $0x30] sm:$0xff]
      %v1665 = vld [vmem:[%s1333 + $0x38] sm:$0xff]
      %v1666 = vld [vmem:[%s1333 + $0x48] sm:$0xff]
      %v1667 = vld [vmem:[%s1333 + $0x50] sm:$0xff]
      %v1668 = vld [vmem:[%s1333 + $0x60] sm:$0xff]
      %v1669 = vld [vmem:[%s1333 + $0x68] sm:$0xff]
      %v1670 = vld [vmem:[%s1333 + $0x78] sm:$0xff]
      %v1671 = vld [vmem:[%s1333 + $0x80] sm:$0xff]
      %v1672 = vld [vmem:[%s1333 + $0x90] sm:$0xff]
      %v1673 = vld [vmem:[%s1333 + $0x98] sm:$0xff]
      %v1674 = vld [vmem:[%s1333 + $0xa8] sm:$0xff]
      %v1675 = vld [vmem:[%s1333 + $0xb0] sm:$0xff]
      %v1676 = vld [vmem:[%s1333 + $0xc0] sm:$0xff]
      %v1677 = vld [vmem:[%s1333 + $0xc8] sm:$0xff]
      %v1678 = vld [vmem:[%s1333 + $0xd8] sm:$0xff]
      %v1679 = vld [vmem:[%s1333 + $0xe0] sm:$0xff]
      %v1680 = vld [vmem:[%s1333 + $0xf0] sm:$0xff]
      %v1681 = vld [vmem:[%s1333 + $0xf8] sm:$0xff]
      %v1682 = vld [vmem:[%s1333 + $0x108] sm:$0xff]
      %v1683 = vld [vmem:[%s1333 + $0x110] sm:$0xff]
      %v1684 = vld [vmem:[%s1333 + $0x120] sm:$0xff]
      %v1685 = vld [vmem:[%s1333 + $0x128] sm:$0xff]
      %v1686 = vld [vmem:[%s1333 + $0x138] sm:$0xff]
      %v1687 = vld [vmem:[%s1333 + $0x140] sm:$0xff]
      %v1688 = vld [vmem:[%s1333 + $0x150] sm:$0xff]
      %v1689 = vld [vmem:[%s1333 + $0x158] sm:$0xff]
      %v1690 = vld [vmem:[%s1333 + $0x168] sm:$0xff]
      %v1691 = vld [vmem:[%s1333 + $0x170] sm:$0xff]
      %v1692 = vperm.slane %v1367, 0
      %v1693 = vmul.f32 %v1660, %v1692
      %v1694 = vmul.f32 %v1661, %v1692
      %v1695 = vmul.f32 %v1662, %v1692
      %v1696 = vmul.f32 %v1663, %v1692
      %v1697 = vmul.f32 %v1664, %v1692
      %v1698 = vmul.f32 %v1665, %v1692
      %v1699 = vmul.f32 %v1666, %v1692
      %v1700 = vmul.f32 %v1667, %v1692
      %v1701 = vmul.f32 %v1668, %v1692
      %v1702 = vmul.f32 %v1669, %v1692
      %v1703 = vmul.f32 %v1670, %v1692
      %v1704 = vmul.f32 %v1671, %v1692
      %v1705 = vmul.f32 %v1672, %v1692
      %v1706 = vmul.f32 %v1673, %v1692
      %v1707 = vmul.f32 %v1674, %v1692
      %v1708 = vmul.f32 %v1675, %v1692
      %v1709 = vmul.f32 %v1676, %v1692
      %v1710 = vmul.f32 %v1677, %v1692
      %v1711 = vmul.f32 %v1678, %v1692
      %v1712 = vmul.f32 %v1679, %v1692
      %v1713 = vmul.f32 %v1680, %v1692
      %v1714 = vmul.f32 %v1681, %v1692
      %v1715 = vmul.f32 %v1682, %v1692
      %v1716 = vmul.f32 %v1683, %v1692
      %v1717 = vmul.f32 %v1684, %v1692
      %v1718 = vmul.f32 %v1685, %v1692
      %v1719 = vmul.f32 %v1686, %v1692
      %v1720 = vmul.f32 %v1687, %v1692
      %v1721 = vmul.f32 %v1688, %v1692
      %v1722 = vmul.f32 %v1689, %v1692
      %v1723 = vmul.f32 %v1690, %v1692
      %v1724 = vmul.f32 %v1691, %v1692
      %v1725 = vadd.f32 %v1628, %v1693
      %v1726 = vadd.f32 %v1629, %v1694
      %v1727 = vadd.f32 %v1630, %v1695
      %v1728 = vadd.f32 %v1631, %v1696
      %v1729 = vadd.f32 %v1632, %v1697
      %v1730 = vadd.f32 %v1633, %v1698
      %v1731 = vadd.f32 %v1634, %v1699
      %v1732 = vadd.f32 %v1635, %v1700
      %v1733 = vadd.f32 %v1636, %v1701
      %v1734 = vadd.f32 %v1637, %v1702
      %v1735 = vadd.f32 %v1638, %v1703
      %v1736 = vadd.f32 %v1639, %v1704
      %v1737 = vadd.f32 %v1640, %v1705
      %v1738 = vadd.f32 %v1641, %v1706
      %v1739 = vadd.f32 %v1642, %v1707
      %v1740 = vadd.f32 %v1643, %v1708
      %v1741 = vadd.f32 %v1644, %v1709
      %v1742 = vadd.f32 %v1645, %v1710
      %v1743 = vadd.f32 %v1646, %v1711
      %v1744 = vadd.f32 %v1647, %v1712
      %v1745 = vadd.f32 %v1648, %v1713
      %v1746 = vadd.f32 %v1649, %v1714
      %v1747 = vadd.f32 %v1650, %v1715
      %v1748 = vadd.f32 %v1651, %v1716
      %v1749 = vadd.f32 %v1652, %v1717
      %v1750 = vadd.f32 %v1653, %v1718
      %v1751 = vadd.f32 %v1654, %v1719
      %v1752 = vadd.f32 %v1655, %v1720
      %v1753 = vadd.f32 %v1656, %v1721
      %v1754 = vadd.f32 %v1657, %v1722
      %v1755 = vadd.f32 %v1658, %v1723
      %v1756 = vadd.f32 %v1659, %v1724
      %v1757 = vld [vmem:[%s1333 + $0x1] sm:$0xff]
      %v1758 = vld [vmem:[%s1333 + $0x9] sm:$0xff]
      %v1759 = vld [vmem:[%s1333 + $0x19] sm:$0xff]
      %v1760 = vld [vmem:[%s1333 + $0x21] sm:$0xff]
      %v1761 = vld [vmem:[%s1333 + $0x31] sm:$0xff]
      %v1762 = vld [vmem:[%s1333 + $0x39] sm:$0xff]
      %v1763 = vld [vmem:[%s1333 + $0x49] sm:$0xff]
      %v1764 = vld [vmem:[%s1333 + $0x51] sm:$0xff]
      %v1765 = vld [vmem:[%s1333 + $0x61] sm:$0xff]
      %v1766 = vld [vmem:[%s1333 + $0x69] sm:$0xff]
      %v1767 = vld [vmem:[%s1333 + $0x79] sm:$0xff]
      %v1768 = vld [vmem:[%s1333 + $0x81] sm:$0xff]
      %v1769 = vld [vmem:[%s1333 + $0x91] sm:$0xff]
      %v1770 = vld [vmem:[%s1333 + $0x99] sm:$0xff]
      %v1771 = vld [vmem:[%s1333 + $0xa9] sm:$0xff]
      %v1772 = vld [vmem:[%s1333 + $0xb1] sm:$0xff]
      %v1773 = vld [vmem:[%s1333 + $0xc1] sm:$0xff]
      %v1774 = vld [vmem:[%s1333 + $0xc9] sm:$0xff]
      %v1775 = vld [vmem:[%s1333 + $0xd9] sm:$0xff]
      %v1776 = vld [vmem:[%s1333 + $0xe1] sm:$0xff]
      %v1777 = vld [vmem:[%s1333 + $0xf1] sm:$0xff]
      %v1778 = vld [vmem:[%s1333 + $0xf9] sm:$0xff]
      %v1779 = vld [vmem:[%s1333 + $0x109] sm:$0xff]
      %v1780 = vld [vmem:[%s1333 + $0x111] sm:$0xff]
      %v1781 = vld [vmem:[%s1333 + $0x121] sm:$0xff]
      %v1782 = vld [vmem:[%s1333 + $0x129] sm:$0xff]
      %v1783 = vld [vmem:[%s1333 + $0x139] sm:$0xff]
      %v1784 = vld [vmem:[%s1333 + $0x141] sm:$0xff]
      %v1785 = vld [vmem:[%s1333 + $0x151] sm:$0xff]
      %v1786 = vld [vmem:[%s1333 + $0x159] sm:$0xff]
      %v1787 = vld [vmem:[%s1333 + $0x169] sm:$0xff]
      %v1788 = vld [vmem:[%s1333 + $0x171] sm:$0xff]
      %v1789 = vperm.slane %v1367, 1
      %v1790 = vmul.f32 %v1757, %v1789
      %v1791 = vmul.f32 %v1758, %v1789
      %v1792 = vmul.f32 %v1759, %v1789
      %v1793 = vmul.f32 %v1760, %v1789
      %v1794 = vmul.f32 %v1761, %v1789
      %v1795 = vmul.f32 %v1762, %v1789
      %v1796 = vmul.f32 %v1763, %v1789
      %v1797 = vmul.f32 %v1764, %v1789
      %v1798 = vmul.f32 %v1765, %v1789
      %v1799 = vmul.f32 %v1766, %v1789
      %v1800 = vmul.f32 %v1767, %v1789
      %v1801 = vmul.f32 %v1768, %v1789
      %v1802 = vmul.f32 %v1769, %v1789
      %v1803 = vmul.f32 %v1770, %v1789
      %v1804 = vmul.f32 %v1771, %v1789
      %v1805 = vmul.f32 %v1772, %v1789
      %v1806 = vmul.f32 %v1773, %v1789
      %v1807 = vmul.f32 %v1774, %v1789
      %v1808 = vmul.f32 %v1775, %v1789
      %v1809 = vmul.f32 %v1776, %v1789
      %v1810 = vmul.f32 %v1777, %v1789
      %v1811 = vmul.f32 %v1778, %v1789
      %v1812 = vmul.f32 %v1779, %v1789
      %v1813 = vmul.f32 %v1780, %v1789
      %v1814 = vmul.f32 %v1781, %v1789
      %v1815 = vmul.f32 %v1782, %v1789
      %v1816 = vmul.f32 %v1783, %v1789
      %v1817 = vmul.f32 %v1784, %v1789
      %v1818 = vmul.f32 %v1785, %v1789
      %v1819 = vmul.f32 %v1786, %v1789
      %v1820 = vmul.f32 %v1787, %v1789
      %v1821 = vmul.f32 %v1788, %v1789
      %v1822 = vadd.f32 %v1725, %v1790
      %v1823 = vadd.f32 %v1726, %v1791
      %v1824 = vadd.f32 %v1727, %v1792
      %v1825 = vadd.f32 %v1728, %v1793
      %v1826 = vadd.f32 %v1729, %v1794
      %v1827 = vadd.f32 %v1730, %v1795
      %v1828 = vadd.f32 %v1731, %v1796
      %v1829 = vadd.f32 %v1732, %v1797
      %v1830 = vadd.f32 %v1733, %v1798
      %v1831 = vadd.f32 %v1734, %v1799
      %v1832 = vadd.f32 %v1735, %v1800
      %v1833 = vadd.f32 %v1736, %v1801
      %v1834 = vadd.f32 %v1737, %v1802
      %v1835 = vadd.f32 %v1738, %v1803
      %v1836 = vadd.f32 %v1739, %v1804
      %v1837 = vadd.f32 %v1740, %v1805
      %v1838 = vadd.f32 %v1741, %v1806
      %v1839 = vadd.f32 %v1742, %v1807
      %v1840 = vadd.f32 %v1743, %v1808
      %v1841 = vadd.f32 %v1744, %v1809
      %v1842 = vadd.f32 %v1745, %v1810
      %v1843 = vadd.f32 %v1746, %v1811
      %v1844 = vadd.f32 %v1747, %v1812
      %v1845 = vadd.f32 %v1748, %v1813
      %v1846 = vadd.f32 %v1749, %v1814
      %v1847 = vadd.f32 %v1750, %v1815
      %v1848 = vadd.f32 %v1751, %v1816
      %v1849 = vadd.f32 %v1752, %v1817
      %v1850 = vadd.f32 %v1753, %v1818
      %v1851 = vadd.f32 %v1754, %v1819
      %v1852 = vadd.f32 %v1755, %v1820
      %v1853 = vadd.f32 %v1756, %v1821
      %v1854 = vld [vmem:[%s1333 + $0x2] sm:$0xff]
      %v1855 = vld [vmem:[%s1333 + $0xa] sm:$0xff]
      %v1856 = vld [vmem:[%s1333 + $0x1a] sm:$0xff]
      %v1857 = vld [vmem:[%s1333 + $0x22] sm:$0xff]
      %v1858 = vld [vmem:[%s1333 + $0x32] sm:$0xff]
      %v1859 = vld [vmem:[%s1333 + $0x3a] sm:$0xff]
      %v1860 = vld [vmem:[%s1333 + $0x4a] sm:$0xff]
      %v1861 = vld [vmem:[%s1333 + $0x52] sm:$0xff]
      %v1862 = vld [vmem:[%s1333 + $0x62] sm:$0xff]
      %v1863 = vld [vmem:[%s1333 + $0x6a] sm:$0xff]
      %v1864 = vld [vmem:[%s1333 + $0x7a] sm:$0xff]
      %v1865 = vld [vmem:[%s1333 + $0x82] sm:$0xff]
      %v1866 = vld [vmem:[%s1333 + $0x92] sm:$0xff]
      %v1867 = vld [vmem:[%s1333 + $0x9a] sm:$0xff]
      %v1868 = vld [vmem:[%s1333 + $0xaa] sm:$0xff]
      %v1869 = vld [vmem:[%s1333 + $0xb2] sm:$0xff]
      %v1870 = vld [vmem:[%s1333 + $0xc2] sm:$0xff]
      %v1871 = vld [vmem:[%s1333 + $0xca] sm:$0xff]
      %v1872 = vld [vmem:[%s1333 + $0xda] sm:$0xff]
      %v1873 = vld [vmem:[%s1333 + $0xe2] sm:$0xff]
      %v1874 = vld [vmem:[%s1333 + $0xf2] sm:$0xff]
      %v1875 = vld [vmem:[%s1333 + $0xfa] sm:$0xff]
      %v1876 = vld [vmem:[%s1333 + $0x10a] sm:$0xff]
      %v1877 = vld [vmem:[%s1333 + $0x112] sm:$0xff]
      %v1878 = vld [vmem:[%s1333 + $0x122] sm:$0xff]
      %v1879 = vld [vmem:[%s1333 + $0x12a] sm:$0xff]
      %v1880 = vld [vmem:[%s1333 + $0x13a] sm:$0xff]
      %v1881 = vld [vmem:[%s1333 + $0x142] sm:$0xff]
      %v1882 = vld [vmem:[%s1333 + $0x152] sm:$0xff]
      %v1883 = vld [vmem:[%s1333 + $0x15a] sm:$0xff]
      %v1884 = vld [vmem:[%s1333 + $0x16a] sm:$0xff]
      %v1885 = vld [vmem:[%s1333 + $0x172] sm:$0xff]
      %v1886 = vperm.slane %v1367, 2
      %v1887 = vmul.f32 %v1854, %v1886
      %v1888 = vmul.f32 %v1855, %v1886
      %v1889 = vmul.f32 %v1856, %v1886
      %v1890 = vmul.f32 %v1857, %v1886
      %v1891 = vmul.f32 %v1858, %v1886
      %v1892 = vmul.f32 %v1859, %v1886
      %v1893 = vmul.f32 %v1860, %v1886
      %v1894 = vmul.f32 %v1861, %v1886
      %v1895 = vmul.f32 %v1862, %v1886
      %v1896 = vmul.f32 %v1863, %v1886
      %v1897 = vmul.f32 %v1864, %v1886
      %v1898 = vmul.f32 %v1865, %v1886
      %v1899 = vmul.f32 %v1866, %v1886
      %v1900 = vmul.f32 %v1867, %v1886
      %v1901 = vmul.f32 %v1868, %v1886
      %v1902 = vmul.f32 %v1869, %v1886
      %v1903 = vmul.f32 %v1870, %v1886
      %v1904 = vmul.f32 %v1871, %v1886
      %v1905 = vmul.f32 %v1872, %v1886
      %v1906 = vmul.f32 %v1873, %v1886
      %v1907 = vmul.f32 %v1874, %v1886
      %v1908 = vmul.f32 %v1875, %v1886
      %v1909 = vmul.f32 %v1876, %v1886
      %v1910 = vmul.f32 %v1877, %v1886
      %v1911 = vmul.f32 %v1878, %v1886
      %v1912 = vmul.f32 %v1879, %v1886
      %v1913 = vmul.f32 %v1880, %v1886
      %v1914 = vmul.f32 %v1881, %v1886
      %v1915 = vmul.f32 %v1882, %v1886
      %v1916 = vmul.f32 %v1883, %v1886
      %v1917 = vmul.f32 %v1884, %v1886
      %v1918 = vmul.f32 %v1885, %v1886
      %v1919 = vadd.f32 %v1822, %v1887
      %v1920 = vadd.f32 %v1823, %v1888
      %v1921 = vadd.f32 %v1824, %v1889
      %v1922 = vadd.f32 %v1825, %v1890
      %v1923 = vadd.f32 %v1826, %v1891
      %v1924 = vadd.f32 %v1827, %v1892
      %v1925 = vadd.f32 %v1828, %v1893
      %v1926 = vadd.f32 %v1829, %v1894
      %v1927 = vadd.f32 %v1830, %v1895
      %v1928 = vadd.f32 %v1831, %v1896
      %v1929 = vadd.f32 %v1832, %v1897
      %v1930 = vadd.f32 %v1833, %v1898
      %v1931 = vadd.f32 %v1834, %v1899
      %v1932 = vadd.f32 %v1835, %v1900
      %v1933 = vadd.f32 %v1836, %v1901
      %v1934 = vadd.f32 %v1837, %v1902
      %v1935 = vadd.f32 %v1838, %v1903
      %v1936 = vadd.f32 %v1839, %v1904
      %v1937 = vadd.f32 %v1840, %v1905
      %v1938 = vadd.f32 %v1841, %v1906
      %v1939 = vadd.f32 %v1842, %v1907
      %v1940 = vadd.f32 %v1843, %v1908
      %v1941 = vadd.f32 %v1844, %v1909
      %v1942 = vadd.f32 %v1845, %v1910
      %v1943 = vadd.f32 %v1846, %v1911
      %v1944 = vadd.f32 %v1847, %v1912
      %v1945 = vadd.f32 %v1848, %v1913
      %v1946 = vadd.f32 %v1849, %v1914
      %v1947 = vadd.f32 %v1850, %v1915
      %v1948 = vadd.f32 %v1851, %v1916
      %v1949 = vadd.f32 %v1852, %v1917
      %v1950 = vadd.f32 %v1853, %v1918
      %s1951 = scalar_lea.vmem [#allocation2], 48
      %v1952 = vld [vmem:[%s1951] sm:$0xff]
      %v1953 = vld [vmem:[%s1951 + $0x8] sm:$0xff]
      %v1954 = vld [vmem:[%s1951 + $0x18] sm:$0xff]
      %v1955 = vld [vmem:[%s1951 + $0x20] sm:$0xff]
      %v1956 = vld [vmem:[%s1951 + $0x30] sm:$0xff]
      %v1957 = vld [vmem:[%s1951 + $0x38] sm:$0xff]
      %v1958 = vld [vmem:[%s1951 + $0x48] sm:$0xff]
      %v1959 = vld [vmem:[%s1951 + $0x50] sm:$0xff]
      %v1960 = vld [vmem:[%s1951 + $0x60] sm:$0xff]
      %v1961 = vld [vmem:[%s1951 + $0x68] sm:$0xff]
      %v1962 = vld [vmem:[%s1951 + $0x78] sm:$0xff]
      %v1963 = vld [vmem:[%s1951 + $0x80] sm:$0xff]
      %v1964 = vld [vmem:[%s1951 + $0x90] sm:$0xff]
      %v1965 = vld [vmem:[%s1951 + $0x98] sm:$0xff]
      %v1966 = vld [vmem:[%s1951 + $0xa8] sm:$0xff]
      %v1967 = vld [vmem:[%s1951 + $0xb0] sm:$0xff]
      %v1968 = vld [vmem:[%s1951 + $0xc0] sm:$0xff]
      %v1969 = vld [vmem:[%s1951 + $0xc8] sm:$0xff]
      %v1970 = vld [vmem:[%s1951 + $0xd8] sm:$0xff]
      %v1971 = vld [vmem:[%s1951 + $0xe0] sm:$0xff]
      %v1972 = vld [vmem:[%s1951 + $0xf0] sm:$0xff]
      %v1973 = vld [vmem:[%s1951 + $0xf8] sm:$0xff]
      %v1974 = vld [vmem:[%s1951 + $0x108] sm:$0xff]
      %v1975 = vld [vmem:[%s1951 + $0x110] sm:$0xff]
      %v1976 = vld [vmem:[%s1951 + $0x120] sm:$0xff]
      %v1977 = vld [vmem:[%s1951 + $0x128] sm:$0xff]
      %v1978 = vld [vmem:[%s1951 + $0x138] sm:$0xff]
      %v1979 = vld [vmem:[%s1951 + $0x140] sm:$0xff]
      %v1980 = vld [vmem:[%s1951 + $0x150] sm:$0xff]
      %v1981 = vld [vmem:[%s1951 + $0x158] sm:$0xff]
      %v1982 = vld [vmem:[%s1951 + $0x168] sm:$0xff]
      %v1983 = vld [vmem:[%s1951 + $0x170] sm:$0xff]
      %v1984 = vperm.slane %v1368, 0
      %v1985 = vmul.f32 %v1952, %v1984
      %v1986 = vmul.f32 %v1953, %v1984
      %v1987 = vmul.f32 %v1954, %v1984
      %v1988 = vmul.f32 %v1955, %v1984
      %v1989 = vmul.f32 %v1956, %v1984
      %v1990 = vmul.f32 %v1957, %v1984
      %v1991 = vmul.f32 %v1958, %v1984
      %v1992 = vmul.f32 %v1959, %v1984
      %v1993 = vmul.f32 %v1960, %v1984
      %v1994 = vmul.f32 %v1961, %v1984
      %v1995 = vmul.f32 %v1962, %v1984
      %v1996 = vmul.f32 %v1963, %v1984
      %v1997 = vmul.f32 %v1964, %v1984
      %v1998 = vmul.f32 %v1965, %v1984
      %v1999 = vmul.f32 %v1966, %v1984
      %v2000 = vmul.f32 %v1967, %v1984
      %v2001 = vmul.f32 %v1968, %v1984
      %v2002 = vmul.f32 %v1969, %v1984
      %v2003 = vmul.f32 %v1970, %v1984
      %v2004 = vmul.f32 %v1971, %v1984
      %v2005 = vmul.f32 %v1972, %v1984
      %v2006 = vmul.f32 %v1973, %v1984
      %v2007 = vmul.f32 %v1974, %v1984
      %v2008 = vmul.f32 %v1975, %v1984
      %v2009 = vmul.f32 %v1976, %v1984
      %v2010 = vmul.f32 %v1977, %v1984
      %v2011 = vmul.f32 %v1978, %v1984
      %v2012 = vmul.f32 %v1979, %v1984
      %v2013 = vmul.f32 %v1980, %v1984
      %v2014 = vmul.f32 %v1981, %v1984
      %v2015 = vmul.f32 %v1982, %v1984
      %v2016 = vmul.f32 %v1983, %v1984
      %v2017 = vadd.f32 %v1919, %v1985
      %v2018 = vadd.f32 %v1920, %v1986
      %v2019 = vadd.f32 %v1921, %v1987
      %v2020 = vadd.f32 %v1922, %v1988
      %v2021 = vadd.f32 %v1923, %v1989
      %v2022 = vadd.f32 %v1924, %v1990
      %v2023 = vadd.f32 %v1925, %v1991
      %v2024 = vadd.f32 %v1926, %v1992
      %v2025 = vadd.f32 %v1927, %v1993
      %v2026 = vadd.f32 %v1928, %v1994
      %v2027 = vadd.f32 %v1929, %v1995
      %v2028 = vadd.f32 %v1930, %v1996
      %v2029 = vadd.f32 %v1931, %v1997
      %v2030 = vadd.f32 %v1932, %v1998
      %v2031 = vadd.f32 %v1933, %v1999
      %v2032 = vadd.f32 %v1934, %v2000
      %v2033 = vadd.f32 %v1935, %v2001
      %v2034 = vadd.f32 %v1936, %v2002
      %v2035 = vadd.f32 %v1937, %v2003
      %v2036 = vadd.f32 %v1938, %v2004
      %v2037 = vadd.f32 %v1939, %v2005
      %v2038 = vadd.f32 %v1940, %v2006
      %v2039 = vadd.f32 %v1941, %v2007
      %v2040 = vadd.f32 %v1942, %v2008
      %v2041 = vadd.f32 %v1943, %v2009
      %v2042 = vadd.f32 %v1944, %v2010
      %v2043 = vadd.f32 %v1945, %v2011
      %v2044 = vadd.f32 %v1946, %v2012
      %v2045 = vadd.f32 %v1947, %v2013
      %v2046 = vadd.f32 %v1948, %v2014
      %v2047 = vadd.f32 %v1949, %v2015
      %v2048 = vadd.f32 %v1950, %v2016
      %v2049 = vld [vmem:[%s1951 + $0x1] sm:$0xff]
      %v2050 = vld [vmem:[%s1951 + $0x9] sm:$0xff]
      %v2051 = vld [vmem:[%s1951 + $0x19] sm:$0xff]
      %v2052 = vld [vmem:[%s1951 + $0x21] sm:$0xff]
      %v2053 = vld [vmem:[%s1951 + $0x31] sm:$0xff]
      %v2054 = vld [vmem:[%s1951 + $0x39] sm:$0xff]
      %v2055 = vld [vmem:[%s1951 + $0x49] sm:$0xff]
      %v2056 = vld [vmem:[%s1951 + $0x51] sm:$0xff]
      %v2057 = vld [vmem:[%s1951 + $0x61] sm:$0xff]
      %v2058 = vld [vmem:[%s1951 + $0x69] sm:$0xff]
      %v2059 = vld [vmem:[%s1951 + $0x79] sm:$0xff]
      %v2060 = vld [vmem:[%s1951 + $0x81] sm:$0xff]
      %v2061 = vld [vmem:[%s1951 + $0x91] sm:$0xff]
      %v2062 = vld [vmem:[%s1951 + $0x99] sm:$0xff]
      %v2063 = vld [vmem:[%s1951 + $0xa9] sm:$0xff]
      %v2064 = vld [vmem:[%s1951 + $0xb1] sm:$0xff]
      %v2065 = vld [vmem:[%s1951 + $0xc1] sm:$0xff]
      %v2066 = vld [vmem:[%s1951 + $0xc9] sm:$0xff]
      %v2067 = vld [vmem:[%s1951 + $0xd9] sm:$0xff]
      %v2068 = vld [vmem:[%s1951 + $0xe1] sm:$0xff]
      %v2069 = vld [vmem:[%s1951 + $0xf1] sm:$0xff]
      %v2070 = vld [vmem:[%s1951 + $0xf9] sm:$0xff]
      %v2071 = vld [vmem:[%s1951 + $0x109] sm:$0xff]
      %v2072 = vld [vmem:[%s1951 + $0x111] sm:$0xff]
      %v2073 = vld [vmem:[%s1951 + $0x121] sm:$0xff]
      %v2074 = vld [vmem:[%s1951 + $0x129] sm:$0xff]
      %v2075 = vld [vmem:[%s1951 + $0x139] sm:$0xff]
      %v2076 = vld [vmem:[%s1951 + $0x141] sm:$0xff]
      %v2077 = vld [vmem:[%s1951 + $0x151] sm:$0xff]
      %v2078 = vld [vmem:[%s1951 + $0x159] sm:$0xff]
      %v2079 = vld [vmem:[%s1951 + $0x169] sm:$0xff]
      %v2080 = vld [vmem:[%s1951 + $0x171] sm:$0xff]
      %v2081 = vperm.slane %v1368, 1
      %v2082 = vmul.f32 %v2049, %v2081
      %v2083 = vmul.f32 %v2050, %v2081
      %v2084 = vmul.f32 %v2051, %v2081
      %v2085 = vmul.f32 %v2052, %v2081
      %v2086 = vmul.f32 %v2053, %v2081
      %v2087 = vmul.f32 %v2054, %v2081
      %v2088 = vmul.f32 %v2055, %v2081
      %v2089 = vmul.f32 %v2056, %v2081
      %v2090 = vmul.f32 %v2057, %v2081
      %v2091 = vmul.f32 %v2058, %v2081
      %v2092 = vmul.f32 %v2059, %v2081
      %v2093 = vmul.f32 %v2060, %v2081
      %v2094 = vmul.f32 %v2061, %v2081
      %v2095 = vmul.f32 %v2062, %v2081
      %v2096 = vmul.f32 %v2063, %v2081
      %v2097 = vmul.f32 %v2064, %v2081
      %v2098 = vmul.f32 %v2065, %v2081
      %v2099 = vmul.f32 %v2066, %v2081
      %v2100 = vmul.f32 %v2067, %v2081
      %v2101 = vmul.f32 %v2068, %v2081
      %v2102 = vmul.f32 %v2069, %v2081
      %v2103 = vmul.f32 %v2070, %v2081
      %v2104 = vmul.f32 %v2071, %v2081
      %v2105 = vmul.f32 %v2072, %v2081
      %v2106 = vmul.f32 %v2073, %v2081
      %v2107 = vmul.f32 %v2074, %v2081
      %v2108 = vmul.f32 %v2075, %v2081
      %v2109 = vmul.f32 %v2076, %v2081
      %v2110 = vmul.f32 %v2077, %v2081
      %v2111 = vmul.f32 %v2078, %v2081
      %v2112 = vmul.f32 %v2079, %v2081
      %v2113 = vmul.f32 %v2080, %v2081
      %v2114 = vadd.f32 %v2017, %v2082
      %v2115 = vadd.f32 %v2018, %v2083
      %v2116 = vadd.f32 %v2019, %v2084
      %v2117 = vadd.f32 %v2020, %v2085
      %v2118 = vadd.f32 %v2021, %v2086
      %v2119 = vadd.f32 %v2022, %v2087
      %v2120 = vadd.f32 %v2023, %v2088
      %v2121 = vadd.f32 %v2024, %v2089
      %v2122 = vadd.f32 %v2025, %v2090
      %v2123 = vadd.f32 %v2026, %v2091
      %v2124 = vadd.f32 %v2027, %v2092
      %v2125 = vadd.f32 %v2028, %v2093
      %v2126 = vadd.f32 %v2029, %v2094
      %v2127 = vadd.f32 %v2030, %v2095
      %v2128 = vadd.f32 %v2031, %v2096
      %v2129 = vadd.f32 %v2032, %v2097
      %v2130 = vadd.f32 %v2033, %v2098
      %v2131 = vadd.f32 %v2034, %v2099
      %v2132 = vadd.f32 %v2035, %v2100
      %v2133 = vadd.f32 %v2036, %v2101
      %v2134 = vadd.f32 %v2037, %v2102
      %v2135 = vadd.f32 %v2038, %v2103
      %v2136 = vadd.f32 %v2039, %v2104
      %v2137 = vadd.f32 %v2040, %v2105
      %v2138 = vadd.f32 %v2041, %v2106
      %v2139 = vadd.f32 %v2042, %v2107
      %v2140 = vadd.f32 %v2043, %v2108
      %v2141 = vadd.f32 %v2044, %v2109
      %v2142 = vadd.f32 %v2045, %v2110
      %v2143 = vadd.f32 %v2046, %v2111
      %v2144 = vadd.f32 %v2047, %v2112
      %v2145 = vadd.f32 %v2048, %v2113
      %v2146 = vld [vmem:[%s1951 + $0x2] sm:$0xff]
      %v2147 = vld [vmem:[%s1951 + $0xa] sm:$0xff]
      %v2148 = vld [vmem:[%s1951 + $0x1a] sm:$0xff]
      %v2149 = vld [vmem:[%s1951 + $0x22] sm:$0xff]
      %v2150 = vld [vmem:[%s1951 + $0x32] sm:$0xff]
      %v2151 = vld [vmem:[%s1951 + $0x3a] sm:$0xff]
      %v2152 = vld [vmem:[%s1951 + $0x4a] sm:$0xff]
      %v2153 = vld [vmem:[%s1951 + $0x52] sm:$0xff]
      %v2154 = vld [vmem:[%s1951 + $0x62] sm:$0xff]
      %v2155 = vld [vmem:[%s1951 + $0x6a] sm:$0xff]
      %v2156 = vld [vmem:[%s1951 + $0x7a] sm:$0xff]
      %v2157 = vld [vmem:[%s1951 + $0x82] sm:$0xff]
      %v2158 = vld [vmem:[%s1951 + $0x92] sm:$0xff]
      %v2159 = vld [vmem:[%s1951 + $0x9a] sm:$0xff]
      %v2160 = vld [vmem:[%s1951 + $0xaa] sm:$0xff]
      %v2161 = vld [vmem:[%s1951 + $0xb2] sm:$0xff]
      %v2162 = vld [vmem:[%s1951 + $0xc2] sm:$0xff]
      %v2163 = vld [vmem:[%s1951 + $0xca] sm:$0xff]
      %v2164 = vld [vmem:[%s1951 + $0xda] sm:$0xff]
      %v2165 = vld [vmem:[%s1951 + $0xe2] sm:$0xff]
      %v2166 = vld [vmem:[%s1951 + $0xf2] sm:$0xff]
      %v2167 = vld [vmem:[%s1951 + $0xfa] sm:$0xff]
      %v2168 = vld [vmem:[%s1951 + $0x10a] sm:$0xff]
      %v2169 = vld [vmem:[%s1951 + $0x112] sm:$0xff]
      %v2170 = vld [vmem:[%s1951 + $0x122] sm:$0xff]
      %v2171 = vld [vmem:[%s1951 + $0x12a] sm:$0xff]
      %v2172 = vld [vmem:[%s1951 + $0x13a] sm:$0xff]
      %v2173 = vld [vmem:[%s1951 + $0x142] sm:$0xff]
      %v2174 = vld [vmem:[%s1951 + $0x152] sm:$0xff]
      %v2175 = vld [vmem:[%s1951 + $0x15a] sm:$0xff]
      %v2176 = vld [vmem:[%s1951 + $0x16a] sm:$0xff]
      %v2177 = vld [vmem:[%s1951 + $0x172] sm:$0xff]
      %v2178 = vperm.slane %v1368, 2
      %v2179 = vmul.f32 %v2146, %v2178
      %v2180 = vmul.f32 %v2147, %v2178
      %v2181 = vmul.f32 %v2148, %v2178
      %v2182 = vmul.f32 %v2149, %v2178
      %v2183 = vmul.f32 %v2150, %v2178
      %v2184 = vmul.f32 %v2151, %v2178
      %v2185 = vmul.f32 %v2152, %v2178
      %v2186 = vmul.f32 %v2153, %v2178
      %v2187 = vmul.f32 %v2154, %v2178
      %v2188 = vmul.f32 %v2155, %v2178
      %v2189 = vmul.f32 %v2156, %v2178
      %v2190 = vmul.f32 %v2157, %v2178
      %v2191 = vmul.f32 %v2158, %v2178
      %v2192 = vmul.f32 %v2159, %v2178
      %v2193 = vmul.f32 %v2160, %v2178
      %v2194 = vmul.f32 %v2161, %v2178
      %v2195 = vmul.f32 %v2162, %v2178
      %v2196 = vmul.f32 %v2163, %v2178
      %v2197 = vmul.f32 %v2164, %v2178
      %v2198 = vmul.f32 %v2165, %v2178
      %v2199 = vmul.f32 %v2166, %v2178
      %v2200 = vmul.f32 %v2167, %v2178
      %v2201 = vmul.f32 %v2168, %v2178
      %v2202 = vmul.f32 %v2169, %v2178
      %v2203 = vmul.f32 %v2170, %v2178
      %v2204 = vmul.f32 %v2171, %v2178
      %v2205 = vmul.f32 %v2172, %v2178
      %v2206 = vmul.f32 %v2173, %v2178
      %v2207 = vmul.f32 %v2174, %v2178
      %v2208 = vmul.f32 %v2175, %v2178
      %v2209 = vmul.f32 %v2176, %v2178
      %v2210 = vmul.f32 %v2177, %v2178
      %v2211 = vadd.f32 %v2114, %v2179
      %v2212 = vadd.f32 %v2115, %v2180
      %v2213 = vadd.f32 %v2116, %v2181
      %v2214 = vadd.f32 %v2117, %v2182
      %v2215 = vadd.f32 %v2118, %v2183
      %v2216 = vadd.f32 %v2119, %v2184
      %v2217 = vadd.f32 %v2120, %v2185
      %v2218 = vadd.f32 %v2121, %v2186
      %v2219 = vadd.f32 %v2122, %v2187
      %v2220 = vadd.f32 %v2123, %v2188
      %v2221 = vadd.f32 %v2124, %v2189
      %v2222 = vadd.f32 %v2125, %v2190
      %v2223 = vadd.f32 %v2126, %v2191
      %v2224 = vadd.f32 %v2127, %v2192
      %v2225 = vadd.f32 %v2128, %v2193
      %v2226 = vadd.f32 %v2129, %v2194
      %v2227 = vadd.f32 %v2130, %v2195
      %v2228 = vadd.f32 %v2131, %v2196
      %v2229 = vadd.f32 %v2132, %v2197
      %v2230 = vadd.f32 %v2133, %v2198
      %v2231 = vadd.f32 %v2134, %v2199
      %v2232 = vadd.f32 %v2135, %v2200
      %v2233 = vadd.f32 %v2136, %v2201
      %v2234 = vadd.f32 %v2137, %v2202
      %v2235 = vadd.f32 %v2138, %v2203
      %v2236 = vadd.f32 %v2139, %v2204
      %v2237 = vadd.f32 %v2140, %v2205
      %v2238 = vadd.f32 %v2141, %v2206
      %v2239 = vadd.f32 %v2142, %v2207
      %v2240 = vadd.f32 %v2143, %v2208
      %v2241 = vadd.f32 %v2144, %v2209
      %v2242 = vadd.f32 %v2145, %v2210
      %v2243 = vld [vmem:[%s4] sm:$0x1]
      %v2245 = vperm.slane %v2243, 0
      %v2247 = vadd.f32 %v2211, %v2245
      %v2248 = vadd.f32 %v2212, %v2245
      %v2249 = vadd.f32 %v2213, %v2245
      %v2250 = vadd.f32 %v2214, %v2245
      %v2251 = vadd.f32 %v2215, %v2245
      %v2252 = vadd.f32 %v2216, %v2245
      %v2253 = vadd.f32 %v2217, %v2245
      %v2254 = vadd.f32 %v2218, %v2245
      %v2255 = vadd.f32 %v2219, %v2245
      %v2256 = vadd.f32 %v2220, %v2245
      %v2257 = vadd.f32 %v2221, %v2245
      %v2258 = vadd.f32 %v2222, %v2245
      %v2259 = vadd.f32 %v2223, %v2245
      %v2260 = vadd.f32 %v2224, %v2245
      %v2261 = vadd.f32 %v2225, %v2245
      %v2262 = vadd.f32 %v2226, %v2245
      %v2263 = vadd.f32 %v2227, %v2245
      %v2264 = vadd.f32 %v2228, %v2245
      %v2265 = vadd.f32 %v2229, %v2245
      %v2266 = vadd.f32 %v2230, %v2245
      %v2267 = vadd.f32 %v2231, %v2245
      %v2268 = vadd.f32 %v2232, %v2245
      %v2269 = vadd.f32 %v2233, %v2245
      %v2270 = vadd.f32 %v2234, %v2245
      %v2271 = vadd.f32 %v2235, %v2245
      %v2272 = vadd.f32 %v2236, %v2245
      %v2273 = vadd.f32 %v2237, %v2245
      %v2274 = vadd.f32 %v2238, %v2245
      %v2275 = vadd.f32 %v2239, %v2245
      %v2276 = vadd.f32 %v2240, %v2245
      %v2277 = vadd.f32 %v2241, %v2245
      %v2278 = vadd.f32 %v2242, %v2245
      %v2279 = vxor.u32 %v2247, 2147483648
      %v2280 = vxor.u32 %v2248, 2147483648
      %v2281 = vxor.u32 %v2249, 2147483648
      %v2282 = vxor.u32 %v2250, 2147483648
      %v2283 = vxor.u32 %v2251, 2147483648
      %v2284 = vxor.u32 %v2252, 2147483648
      %v2285 = vxor.u32 %v2253, 2147483648
      %v2286 = vxor.u32 %v2254, 2147483648
      %v2287 = vxor.u32 %v2255, 2147483648
      %v2288 = vxor.u32 %v2256, 2147483648
      %v2289 = vxor.u32 %v2257, 2147483648
      %v2290 = vxor.u32 %v2258, 2147483648
      %v2291 = vxor.u32 %v2259, 2147483648
      %v2292 = vxor.u32 %v2260, 2147483648
      %v2293 = vxor.u32 %v2261, 2147483648
      %v2294 = vxor.u32 %v2262, 2147483648
      %v2295 = vxor.u32 %v2263, 2147483648
      %v2296 = vxor.u32 %v2264, 2147483648
      %v2297 = vxor.u32 %v2265, 2147483648
      %v2298 = vxor.u32 %v2266, 2147483648
      %v2299 = vxor.u32 %v2267, 2147483648
      %v2300 = vxor.u32 %v2268, 2147483648
      %v2301 = vxor.u32 %v2269, 2147483648
      %v2302 = vxor.u32 %v2270, 2147483648
      %v2303 = vxor.u32 %v2271, 2147483648
      %v2304 = vxor.u32 %v2272, 2147483648
      %v2305 = vxor.u32 %v2273, 2147483648
      %v2306 = vxor.u32 %v2274, 2147483648
      %v2307 = vxor.u32 %v2275, 2147483648
      %v2308 = vxor.u32 %v2276, 2147483648
      %v2309 = vxor.u32 %v2277, 2147483648
      %v2310 = vxor.u32 %v2278, 2147483648
      %v2311 = vmul.f32 %v2279, 1.442695
      %v2312 = vpow.pop %v2311
      %v2313 = vmul.f32 %v2280, 1.442695
      %v2314 = vpow.pop %v2313
      %v2315 = vmul.f32 %v2281, 1.442695
      %v2316 = vpow.pop %v2315
      %v2317 = vmul.f32 %v2282, 1.442695
      %v2318 = vpow.pop %v2317
      %v2319 = vmul.f32 %v2283, 1.442695
      %v2320 = vpow.pop %v2319
      %v2321 = vmul.f32 %v2284, 1.442695
      %v2322 = vpow.pop %v2321
      %v2323 = vmul.f32 %v2285, 1.442695
      %v2324 = vpow.pop %v2323
      %v2325 = vmul.f32 %v2286, 1.442695
      %v2326 = vpow.pop %v2325
      %v2327 = vmul.f32 %v2287, 1.442695
      %v2328 = vpow.pop %v2327
      %v2329 = vmul.f32 %v2288, 1.442695
      %v2330 = vpow.pop %v2329
      %v2331 = vmul.f32 %v2289, 1.442695
      %v2332 = vpow.pop %v2331
      %v2333 = vmul.f32 %v2290, 1.442695
      %v2334 = vpow.pop %v2333
      %v2335 = vmul.f32 %v2291, 1.442695
      %v2336 = vpow.pop %v2335
      %v2337 = vmul.f32 %v2292, 1.442695
      %v2338 = vpow.pop %v2337
      %v2339 = vmul.f32 %v2293, 1.442695
      %v2340 = vpow.pop %v2339
      %v2341 = vmul.f32 %v2294, 1.442695
      %v2342 = vpow.pop %v2341
      %v2343 = vmul.f32 %v2295, 1.442695
      %v2344 = vpow.pop %v2343
      %v2345 = vmul.f32 %v2296, 1.442695
      %v2346 = vpow.pop %v2345
      %v2347 = vmul.f32 %v2297, 1.442695
      %v2348 = vpow.pop %v2347
      %v2349 = vmul.f32 %v2298, 1.442695
      %v2350 = vpow.pop %v2349
      %v2351 = vmul.f32 %v2299, 1.442695
      %v2352 = vpow.pop %v2351
      %v2353 = vmul.f32 %v2300, 1.442695
      %v2354 = vpow.pop %v2353
      %v2355 = vmul.f32 %v2301, 1.442695
      %v2356 = vpow.pop %v2355
      %v2357 = vmul.f32 %v2302, 1.442695
      %v2358 = vpow.pop %v2357
      %v2359 = vmul.f32 %v2303, 1.442695
      %v2360 = vpow.pop %v2359
      %v2361 = vmul.f32 %v2304, 1.442695
      %v2362 = vpow.pop %v2361
      %v2363 = vmul.f32 %v2305, 1.442695
      %v2364 = vpow.pop %v2363
      %v2365 = vmul.f32 %v2306, 1.442695
      %v2366 = vpow.pop %v2365
      %v2367 = vmul.f32 %v2307, 1.442695
      %v2368 = vpow.pop %v2367
      %v2369 = vmul.f32 %v2308, 1.442695
      %v2370 = vpow.pop %v2369
      %v2371 = vmul.f32 %v2309, 1.442695
      %v2372 = vpow.pop %v2371
      %v2373 = vmul.f32 %v2310, 1.442695
      %v2374 = vpow.pop %v2373
      %v2375 = vadd.f32 %v2312, 1.0
      %v2376 = vadd.f32 %v2314, 1.0
      %v2377 = vadd.f32 %v2316, 1.0
      %v2378 = vadd.f32 %v2318, 1.0
      %v2379 = vadd.f32 %v2320, 1.0
      %v2380 = vadd.f32 %v2322, 1.0
      %v2381 = vadd.f32 %v2324, 1.0
      %v2382 = vadd.f32 %v2326, 1.0
      %v2383 = vadd.f32 %v2328, 1.0
      %v2384 = vadd.f32 %v2330, 1.0
      %v2385 = vadd.f32 %v2332, 1.0
      %v2386 = vadd.f32 %v2334, 1.0
      %v2387 = vadd.f32 %v2336, 1.0
      %v2388 = vadd.f32 %v2338, 1.0
      %v2389 = vadd.f32 %v2340, 1.0
      %v2390 = vadd.f32 %v2342, 1.0
      %v2391 = vadd.f32 %v2344, 1.0
      %v2392 = vadd.f32 %v2346, 1.0
      %v2393 = vadd.f32 %v2348, 1.0
      %v2394 = vadd.f32 %v2350, 1.0
      %v2395 = vadd.f32 %v2352, 1.0
      %v2396 = vadd.f32 %v2354, 1.0
      %v2397 = vadd.f32 %v2356, 1.0
      %v2398 = vadd.f32 %v2358, 1.0
      %v2399 = vadd.f32 %v2360, 1.0
      %v2400 = vadd.f32 %v2362, 1.0
      %v2401 = vadd.f32 %v2364, 1.0
      %v2402 = vadd.f32 %v2366, 1.0
      %v2403 = vadd.f32 %v2368, 1.0
      %v2404 = vadd.f32 %v2370, 1.0
      %v2405 = vadd.f32 %v2372, 1.0
      %v2406 = vadd.f32 %v2374, 1.0
      %v2407 = vrcp.pop %v2375
      %v2408 = vmul.f32 %v2375, %v2407
      %v2409 = vsub.f32 1.0, %v2408
      %v2410 = vmul.f32 %v2407, %v2409
      %v2411 = vadd.f32 %v2407, %v2410
      %vm2412 = vweird.f32 %v2375
      %vm2413 = vweird.f32 %v2407
      %vm2414 = vmor %vm2412, %vm2413
      %v2415 = vsel %vm2414, %v2407, %v2411
      %v2416 = vand.u32 2147483647, %v2375
      %vm2417 = vcmp.eq.f32.partialorder %v2416, 8.507059e+37
      %v2418 = vand.u32 %v2375, 2147483648
      %v2419 = vor.u32 1.1754944e-38, %v2418
      %v2420 = vsel %vm2417, %v2419, %v2415
      %v2421 = vmul.f32 1.0, %v2420
      %v2422 = vrcp.pop %v2376
      %v2423 = vmul.f32 %v2376, %v2422
      %v2424 = vsub.f32 1.0, %v2423
      %v2425 = vmul.f32 %v2422, %v2424
      %v2426 = vadd.f32 %v2422, %v2425
      %vm2427 = vweird.f32 %v2376
      %vm2428 = vweird.f32 %v2422
      %vm2429 = vmor %vm2427, %vm2428
      %v2430 = vsel %vm2429, %v2422, %v2426
      %v2431 = vand.u32 2147483647, %v2376
      %vm2432 = vcmp.eq.f32.partialorder %v2431, 8.507059e+37
      %v2433 = vand.u32 %v2376, 2147483648
      %v2434 = vor.u32 1.1754944e-38, %v2433
      %v2435 = vsel %vm2432, %v2434, %v2430
      %v2436 = vmul.f32 1.0, %v2435
      %v2437 = vrcp.pop %v2377
      %v2438 = vmul.f32 %v2377, %v2437
      %v2439 = vsub.f32 1.0, %v2438
      %v2440 = vmul.f32 %v2437, %v2439
      %v2441 = vadd.f32 %v2437, %v2440
      %vm2442 = vweird.f32 %v2377
      %vm2443 = vweird.f32 %v2437
      %vm2444 = vmor %vm2442, %vm2443
      %v2445 = vsel %vm2444, %v2437, %v2441
      %v2446 = vand.u32 2147483647, %v2377
      %vm2447 = vcmp.eq.f32.partialorder %v2446, 8.507059e+37
      %v2448 = vand.u32 %v2377, 2147483648
      %v2449 = vor.u32 1.1754944e-38, %v2448
      %v2450 = vsel %vm2447, %v2449, %v2445
      %v2451 = vmul.f32 1.0, %v2450
      %v2452 = vrcp.pop %v2378
      %v2453 = vmul.f32 %v2378, %v2452
      %v2454 = vsub.f32 1.0, %v2453
      %v2455 = vmul.f32 %v2452, %v2454
      %v2456 = vadd.f32 %v2452, %v2455
      %vm2457 = vweird.f32 %v2378
      %vm2458 = vweird.f32 %v2452
      %vm2459 = vmor %vm2457, %vm2458
      %v2460 = vsel %vm2459, %v2452, %v2456
      %v2461 = vand.u32 2147483647, %v2378
      %vm2462 = vcmp.eq.f32.partialorder %v2461, 8.507059e+37
      %v2463 = vand.u32 %v2378, 2147483648
      %v2464 = vor.u32 1.1754944e-38, %v2463
      %v2465 = vsel %vm2462, %v2464, %v2460
      %v2466 = vmul.f32 1.0, %v2465
      %v2467 = vrcp.pop %v2379
      %v2468 = vmul.f32 %v2379, %v2467
      %v2469 = vsub.f32 1.0, %v2468
      %v2470 = vmul.f32 %v2467, %v2469
      %v2471 = vadd.f32 %v2467, %v2470
      %vm2472 = vweird.f32 %v2379
      %vm2473 = vweird.f32 %v2467
      %vm2474 = vmor %vm2472, %vm2473
      %v2475 = vsel %vm2474, %v2467, %v2471
      %v2476 = vand.u32 2147483647, %v2379
      %vm2477 = vcmp.eq.f32.partialorder %v2476, 8.507059e+37
      %v2478 = vand.u32 %v2379, 2147483648
      %v2479 = vor.u32 1.1754944e-38, %v2478
      %v2480 = vsel %vm2477, %v2479, %v2475
      %v2481 = vmul.f32 1.0, %v2480
      %v2482 = vrcp.pop %v2380
      %v2483 = vmul.f32 %v2380, %v2482
      %v2484 = vsub.f32 1.0, %v2483
      %v2485 = vmul.f32 %v2482, %v2484
      %v2486 = vadd.f32 %v2482, %v2485
      %vm2487 = vweird.f32 %v2380
      %vm2488 = vweird.f32 %v2482
      %vm2489 = vmor %vm2487, %vm2488
      %v2490 = vsel %vm2489, %v2482, %v2486
      %v2491 = vand.u32 2147483647, %v2380
      %vm2492 = vcmp.eq.f32.partialorder %v2491, 8.507059e+37
      %v2493 = vand.u32 %v2380, 2147483648
      %v2494 = vor.u32 1.1754944e-38, %v2493
      %v2495 = vsel %vm2492, %v2494, %v2490
      %v2496 = vmul.f32 1.0, %v2495
      %v2497 = vrcp.pop %v2381
      %v2498 = vmul.f32 %v2381, %v2497
      %v2499 = vsub.f32 1.0, %v2498
      %v2500 = vmul.f32 %v2497, %v2499
      %v2501 = vadd.f32 %v2497, %v2500
      %vm2502 = vweird.f32 %v2381
      %vm2503 = vweird.f32 %v2497
      %vm2504 = vmor %vm2502, %vm2503
      %v2505 = vsel %vm2504, %v2497, %v2501
      %v2506 = vand.u32 2147483647, %v2381
      %vm2507 = vcmp.eq.f32.partialorder %v2506, 8.507059e+37
      %v2508 = vand.u32 %v2381, 2147483648
      %v2509 = vor.u32 1.1754944e-38, %v2508
      %v2510 = vsel %vm2507, %v2509, %v2505
      %v2511 = vmul.f32 1.0, %v2510
      %v2512 = vrcp.pop %v2382
      %v2513 = vmul.f32 %v2382, %v2512
      %v2514 = vsub.f32 1.0, %v2513
      %v2515 = vmul.f32 %v2512, %v2514
      %v2516 = vadd.f32 %v2512, %v2515
      %vm2517 = vweird.f32 %v2382
      %vm2518 = vweird.f32 %v2512
      %vm2519 = vmor %vm2517, %vm2518
      %v2520 = vsel %vm2519, %v2512, %v2516
      %v2521 = vand.u32 2147483647, %v2382
      %vm2522 = vcmp.eq.f32.partialorder %v2521, 8.507059e+37
      %v2523 = vand.u32 %v2382, 2147483648
      %v2524 = vor.u32 1.1754944e-38, %v2523
      %v2525 = vsel %vm2522, %v2524, %v2520
      %v2526 = vmul.f32 1.0, %v2525
      %v2527 = vrcp.pop %v2383
      %v2528 = vmul.f32 %v2383, %v2527
      %v2529 = vsub.f32 1.0, %v2528
      %v2530 = vmul.f32 %v2527, %v2529
      %v2531 = vadd.f32 %v2527, %v2530
      %vm2532 = vweird.f32 %v2383
      %vm2533 = vweird.f32 %v2527
      %vm2534 = vmor %vm2532, %vm2533
      %v2535 = vsel %vm2534, %v2527, %v2531
      %v2536 = vand.u32 2147483647, %v2383
      %vm2537 = vcmp.eq.f32.partialorder %v2536, 8.507059e+37
      %v2538 = vand.u32 %v2383, 2147483648
      %v2539 = vor.u32 1.1754944e-38, %v2538
      %v2540 = vsel %vm2537, %v2539, %v2535
      %v2541 = vmul.f32 1.0, %v2540
      %v2542 = vrcp.pop %v2384
      %v2543 = vmul.f32 %v2384, %v2542
      %v2544 = vsub.f32 1.0, %v2543
      %v2545 = vmul.f32 %v2542, %v2544
      %v2546 = vadd.f32 %v2542, %v2545
      %vm2547 = vweird.f32 %v2384
      %vm2548 = vweird.f32 %v2542
      %vm2549 = vmor %vm2547, %vm2548
      %v2550 = vsel %vm2549, %v2542, %v2546
      %v2551 = vand.u32 2147483647, %v2384
      %vm2552 = vcmp.eq.f32.partialorder %v2551, 8.507059e+37
      %v2553 = vand.u32 %v2384, 2147483648
      %v2554 = vor.u32 1.1754944e-38, %v2553
      %v2555 = vsel %vm2552, %v2554, %v2550
      %v2556 = vmul.f32 1.0, %v2555
      %v2557 = vrcp.pop %v2385
      %v2558 = vmul.f32 %v2385, %v2557
      %v2559 = vsub.f32 1.0, %v2558
      %v2560 = vmul.f32 %v2557, %v2559
      %v2561 = vadd.f32 %v2557, %v2560
      %vm2562 = vweird.f32 %v2385
      %vm2563 = vweird.f32 %v2557
      %vm2564 = vmor %vm2562, %vm2563
      %v2565 = vsel %vm2564, %v2557, %v2561
      %v2566 = vand.u32 2147483647, %v2385
      %vm2567 = vcmp.eq.f32.partialorder %v2566, 8.507059e+37
      %v2568 = vand.u32 %v2385, 2147483648
      %v2569 = vor.u32 1.1754944e-38, %v2568
      %v2570 = vsel %vm2567, %v2569, %v2565
      %v2571 = vmul.f32 1.0, %v2570
      %v2572 = vrcp.pop %v2386
      %v2573 = vmul.f32 %v2386, %v2572
      %v2574 = vsub.f32 1.0, %v2573
      %v2575 = vmul.f32 %v2572, %v2574
      %v2576 = vadd.f32 %v2572, %v2575
      %vm2577 = vweird.f32 %v2386
      %vm2578 = vweird.f32 %v2572
      %vm2579 = vmor %vm2577, %vm2578
      %v2580 = vsel %vm2579, %v2572, %v2576
      %v2581 = vand.u32 2147483647, %v2386
      %vm2582 = vcmp.eq.f32.partialorder %v2581, 8.507059e+37
      %v2583 = vand.u32 %v2386, 2147483648
      %v2584 = vor.u32 1.1754944e-38, %v2583
      %v2585 = vsel %vm2582, %v2584, %v2580
      %v2586 = vmul.f32 1.0, %v2585
      %v2587 = vrcp.pop %v2387
      %v2588 = vmul.f32 %v2387, %v2587
      %v2589 = vsub.f32 1.0, %v2588
      %v2590 = vmul.f32 %v2587, %v2589
      %v2591 = vadd.f32 %v2587, %v2590
      %vm2592 = vweird.f32 %v2387
      %vm2593 = vweird.f32 %v2587
      %vm2594 = vmor %vm2592, %vm2593
      %v2595 = vsel %vm2594, %v2587, %v2591
      %v2596 = vand.u32 2147483647, %v2387
      %vm2597 = vcmp.eq.f32.partialorder %v2596, 8.507059e+37
      %v2598 = vand.u32 %v2387, 2147483648
      %v2599 = vor.u32 1.1754944e-38, %v2598
      %v2600 = vsel %vm2597, %v2599, %v2595
      %v2601 = vmul.f32 1.0, %v2600
      %v2602 = vrcp.pop %v2388
      %v2603 = vmul.f32 %v2388, %v2602
      %v2604 = vsub.f32 1.0, %v2603
      %v2605 = vmul.f32 %v2602, %v2604
      %v2606 = vadd.f32 %v2602, %v2605
      %vm2607 = vweird.f32 %v2388
      %vm2608 = vweird.f32 %v2602
      %vm2609 = vmor %vm2607, %vm2608
      %v2610 = vsel %vm2609, %v2602, %v2606
      %v2611 = vand.u32 2147483647, %v2388
      %vm2612 = vcmp.eq.f32.partialorder %v2611, 8.507059e+37
      %v2613 = vand.u32 %v2388, 2147483648
      %v2614 = vor.u32 1.1754944e-38, %v2613
      %v2615 = vsel %vm2612, %v2614, %v2610
      %v2616 = vmul.f32 1.0, %v2615
      %v2617 = vrcp.pop %v2389
      %v2618 = vmul.f32 %v2389, %v2617
      %v2619 = vsub.f32 1.0, %v2618
      %v2620 = vmul.f32 %v2617, %v2619
      %v2621 = vadd.f32 %v2617, %v2620
      %vm2622 = vweird.f32 %v2389
      %vm2623 = vweird.f32 %v2617
      %vm2624 = vmor %vm2622, %vm2623
      %v2625 = vsel %vm2624, %v2617, %v2621
      %v2626 = vand.u32 2147483647, %v2389
      %vm2627 = vcmp.eq.f32.partialorder %v2626, 8.507059e+37
      %v2628 = vand.u32 %v2389, 2147483648
      %v2629 = vor.u32 1.1754944e-38, %v2628
      %v2630 = vsel %vm2627, %v2629, %v2625
      %v2631 = vmul.f32 1.0, %v2630
      %v2632 = vrcp.pop %v2390
      %v2633 = vmul.f32 %v2390, %v2632
      %v2634 = vsub.f32 1.0, %v2633
      %v2635 = vmul.f32 %v2632, %v2634
      %v2636 = vadd.f32 %v2632, %v2635
      %vm2637 = vweird.f32 %v2390
      %vm2638 = vweird.f32 %v2632
      %vm2639 = vmor %vm2637, %vm2638
      %v2640 = vsel %vm2639, %v2632, %v2636
      %v2641 = vand.u32 2147483647, %v2390
      %vm2642 = vcmp.eq.f32.partialorder %v2641, 8.507059e+37
      %v2643 = vand.u32 %v2390, 2147483648
      %v2644 = vor.u32 1.1754944e-38, %v2643
      %v2645 = vsel %vm2642, %v2644, %v2640
      %v2646 = vmul.f32 1.0, %v2645
      %v2647 = vrcp.pop %v2391
      %v2648 = vmul.f32 %v2391, %v2647
      %v2649 = vsub.f32 1.0, %v2648
      %v2650 = vmul.f32 %v2647, %v2649
      %v2651 = vadd.f32 %v2647, %v2650
      %vm2652 = vweird.f32 %v2391
      %vm2653 = vweird.f32 %v2647
      %vm2654 = vmor %vm2652, %vm2653
      %v2655 = vsel %vm2654, %v2647, %v2651
      %v2656 = vand.u32 2147483647, %v2391
      %vm2657 = vcmp.eq.f32.partialorder %v2656, 8.507059e+37
      %v2658 = vand.u32 %v2391, 2147483648
      %v2659 = vor.u32 1.1754944e-38, %v2658
      %v2660 = vsel %vm2657, %v2659, %v2655
      %v2661 = vmul.f32 1.0, %v2660
      %v2662 = vrcp.pop %v2392
      %v2663 = vmul.f32 %v2392, %v2662
      %v2664 = vsub.f32 1.0, %v2663
      %v2665 = vmul.f32 %v2662, %v2664
      %v2666 = vadd.f32 %v2662, %v2665
      %vm2667 = vweird.f32 %v2392
      %vm2668 = vweird.f32 %v2662
      %vm2669 = vmor %vm2667, %vm2668
      %v2670 = vsel %vm2669, %v2662, %v2666
      %v2671 = vand.u32 2147483647, %v2392
      %vm2672 = vcmp.eq.f32.partialorder %v2671, 8.507059e+37
      %v2673 = vand.u32 %v2392, 2147483648
      %v2674 = vor.u32 1.1754944e-38, %v2673
      %v2675 = vsel %vm2672, %v2674, %v2670
      %v2676 = vmul.f32 1.0, %v2675
      %v2677 = vrcp.pop %v2393
      %v2678 = vmul.f32 %v2393, %v2677
      %v2679 = vsub.f32 1.0, %v2678
      %v2680 = vmul.f32 %v2677, %v2679
      %v2681 = vadd.f32 %v2677, %v2680
      %vm2682 = vweird.f32 %v2393
      %vm2683 = vweird.f32 %v2677
      %vm2684 = vmor %vm2682, %vm2683
      %v2685 = vsel %vm2684, %v2677, %v2681
      %v2686 = vand.u32 2147483647, %v2393
      %vm2687 = vcmp.eq.f32.partialorder %v2686, 8.507059e+37
      %v2688 = vand.u32 %v2393, 2147483648
      %v2689 = vor.u32 1.1754944e-38, %v2688
      %v2690 = vsel %vm2687, %v2689, %v2685
      %v2691 = vmul.f32 1.0, %v2690
      %v2692 = vrcp.pop %v2394
      %v2693 = vmul.f32 %v2394, %v2692
      %v2694 = vsub.f32 1.0, %v2693
      %v2695 = vmul.f32 %v2692, %v2694
      %v2696 = vadd.f32 %v2692, %v2695
      %vm2697 = vweird.f32 %v2394
      %vm2698 = vweird.f32 %v2692
      %vm2699 = vmor %vm2697, %vm2698
      %v2700 = vsel %vm2699, %v2692, %v2696
      %v2701 = vand.u32 2147483647, %v2394
      %vm2702 = vcmp.eq.f32.partialorder %v2701, 8.507059e+37
      %v2703 = vand.u32 %v2394, 2147483648
      %v2704 = vor.u32 1.1754944e-38, %v2703
      %v2705 = vsel %vm2702, %v2704, %v2700
      %v2706 = vmul.f32 1.0, %v2705
      %v2707 = vrcp.pop %v2395
      %v2708 = vmul.f32 %v2395, %v2707
      %v2709 = vsub.f32 1.0, %v2708
      %v2710 = vmul.f32 %v2707, %v2709
      %v2711 = vadd.f32 %v2707, %v2710
      %vm2712 = vweird.f32 %v2395
      %vm2713 = vweird.f32 %v2707
      %vm2714 = vmor %vm2712, %vm2713
      %v2715 = vsel %vm2714, %v2707, %v2711
      %v2716 = vand.u32 2147483647, %v2395
      %vm2717 = vcmp.eq.f32.partialorder %v2716, 8.507059e+37
      %v2718 = vand.u32 %v2395, 2147483648
      %v2719 = vor.u32 1.1754944e-38, %v2718
      %v2720 = vsel %vm2717, %v2719, %v2715
      %v2721 = vmul.f32 1.0, %v2720
      %v2722 = vrcp.pop %v2396
      %v2723 = vmul.f32 %v2396, %v2722
      %v2724 = vsub.f32 1.0, %v2723
      %v2725 = vmul.f32 %v2722, %v2724
      %v2726 = vadd.f32 %v2722, %v2725
      %vm2727 = vweird.f32 %v2396
      %vm2728 = vweird.f32 %v2722
      %vm2729 = vmor %vm2727, %vm2728
      %v2730 = vsel %vm2729, %v2722, %v2726
      %v2731 = vand.u32 2147483647, %v2396
      %vm2732 = vcmp.eq.f32.partialorder %v2731, 8.507059e+37
      %v2733 = vand.u32 %v2396, 2147483648
      %v2734 = vor.u32 1.1754944e-38, %v2733
      %v2735 = vsel %vm2732, %v2734, %v2730
      %v2736 = vmul.f32 1.0, %v2735
      %v2737 = vrcp.pop %v2397
      %v2738 = vmul.f32 %v2397, %v2737
      %v2739 = vsub.f32 1.0, %v2738
      %v2740 = vmul.f32 %v2737, %v2739
      %v2741 = vadd.f32 %v2737, %v2740
      %vm2742 = vweird.f32 %v2397
      %vm2743 = vweird.f32 %v2737
      %vm2744 = vmor %vm2742, %vm2743
      %v2745 = vsel %vm2744, %v2737, %v2741
      %v2746 = vand.u32 2147483647, %v2397
      %vm2747 = vcmp.eq.f32.partialorder %v2746, 8.507059e+37
      %v2748 = vand.u32 %v2397, 2147483648
      %v2749 = vor.u32 1.1754944e-38, %v2748
      %v2750 = vsel %vm2747, %v2749, %v2745
      %v2751 = vmul.f32 1.0, %v2750
      %v2752 = vrcp.pop %v2398
      %v2753 = vmul.f32 %v2398, %v2752
      %v2754 = vsub.f32 1.0, %v2753
      %v2755 = vmul.f32 %v2752, %v2754
      %v2756 = vadd.f32 %v2752, %v2755
      %vm2757 = vweird.f32 %v2398
      %vm2758 = vweird.f32 %v2752
      %vm2759 = vmor %vm2757, %vm2758
      %v2760 = vsel %vm2759, %v2752, %v2756
      %v2761 = vand.u32 2147483647, %v2398
      %vm2762 = vcmp.eq.f32.partialorder %v2761, 8.507059e+37
      %v2763 = vand.u32 %v2398, 2147483648
      %v2764 = vor.u32 1.1754944e-38, %v2763
      %v2765 = vsel %vm2762, %v2764, %v2760
      %v2766 = vmul.f32 1.0, %v2765
      %v2767 = vrcp.pop %v2399
      %v2768 = vmul.f32 %v2399, %v2767
      %v2769 = vsub.f32 1.0, %v2768
      %v2770 = vmul.f32 %v2767, %v2769
      %v2771 = vadd.f32 %v2767, %v2770
      %vm2772 = vweird.f32 %v2399
      %vm2773 = vweird.f32 %v2767
      %vm2774 = vmor %vm2772, %vm2773
      %v2775 = vsel %vm2774, %v2767, %v2771
      %v2776 = vand.u32 2147483647, %v2399
      %vm2777 = vcmp.eq.f32.partialorder %v2776, 8.507059e+37
      %v2778 = vand.u32 %v2399, 2147483648
      %v2779 = vor.u32 1.1754944e-38, %v2778
      %v2780 = vsel %vm2777, %v2779, %v2775
      %v2781 = vmul.f32 1.0, %v2780
      %v2782 = vrcp.pop %v2400
      %v2783 = vmul.f32 %v2400, %v2782
      %v2784 = vsub.f32 1.0, %v2783
      %v2785 = vmul.f32 %v2782, %v2784
      %v2786 = vadd.f32 %v2782, %v2785
      %vm2787 = vweird.f32 %v2400
      %vm2788 = vweird.f32 %v2782
      %vm2789 = vmor %vm2787, %vm2788
      %v2790 = vsel %vm2789, %v2782, %v2786
      %v2791 = vand.u32 2147483647, %v2400
      %vm2792 = vcmp.eq.f32.partialorder %v2791, 8.507059e+37
      %v2793 = vand.u32 %v2400, 2147483648
      %v2794 = vor.u32 1.1754944e-38, %v2793
      %v2795 = vsel %vm2792, %v2794, %v2790
      %v2796 = vmul.f32 1.0, %v2795
      %v2797 = vrcp.pop %v2401
      %v2798 = vmul.f32 %v2401, %v2797
      %v2799 = vsub.f32 1.0, %v2798
      %v2800 = vmul.f32 %v2797, %v2799
      %v2801 = vadd.f32 %v2797, %v2800
      %vm2802 = vweird.f32 %v2401
      %vm2803 = vweird.f32 %v2797
      %vm2804 = vmor %vm2802, %vm2803
      %v2805 = vsel %vm2804, %v2797, %v2801
      %v2806 = vand.u32 2147483647, %v2401
      %vm2807 = vcmp.eq.f32.partialorder %v2806, 8.507059e+37
      %v2808 = vand.u32 %v2401, 2147483648
      %v2809 = vor.u32 1.1754944e-38, %v2808
      %v2810 = vsel %vm2807, %v2809, %v2805
      %v2811 = vmul.f32 1.0, %v2810
      %v2812 = vrcp.pop %v2402
      %v2813 = vmul.f32 %v2402, %v2812
      %v2814 = vsub.f32 1.0, %v2813
      %v2815 = vmul.f32 %v2812, %v2814
      %v2816 = vadd.f32 %v2812, %v2815
      %vm2817 = vweird.f32 %v2402
      %vm2818 = vweird.f32 %v2812
      %vm2819 = vmor %vm2817, %vm2818
      %v2820 = vsel %vm2819, %v2812, %v2816
      %v2821 = vand.u32 2147483647, %v2402
      %vm2822 = vcmp.eq.f32.partialorder %v2821, 8.507059e+37
      %v2823 = vand.u32 %v2402, 2147483648
      %v2824 = vor.u32 1.1754944e-38, %v2823
      %v2825 = vsel %vm2822, %v2824, %v2820
      %v2826 = vmul.f32 1.0, %v2825
      %v2827 = vrcp.pop %v2403
      %v2828 = vmul.f32 %v2403, %v2827
      %v2829 = vsub.f32 1.0, %v2828
      %v2830 = vmul.f32 %v2827, %v2829
      %v2831 = vadd.f32 %v2827, %v2830
      %vm2832 = vweird.f32 %v2403
      %vm2833 = vweird.f32 %v2827
      %vm2834 = vmor %vm2832, %vm2833
      %v2835 = vsel %vm2834, %v2827, %v2831
      %v2836 = vand.u32 2147483647, %v2403
      %vm2837 = vcmp.eq.f32.partialorder %v2836, 8.507059e+37
      %v2838 = vand.u32 %v2403, 2147483648
      %v2839 = vor.u32 1.1754944e-38, %v2838
      %v2840 = vsel %vm2837, %v2839, %v2835
      %v2841 = vmul.f32 1.0, %v2840
      %v2842 = vrcp.pop %v2404
      %v2843 = vmul.f32 %v2404, %v2842
      %v2844 = vsub.f32 1.0, %v2843
      %v2845 = vmul.f32 %v2842, %v2844
      %v2846 = vadd.f32 %v2842, %v2845
      %vm2847 = vweird.f32 %v2404
      %vm2848 = vweird.f32 %v2842
      %vm2849 = vmor %vm2847, %vm2848
      %v2850 = vsel %vm2849, %v2842, %v2846
      %v2851 = vand.u32 2147483647, %v2404
      %vm2852 = vcmp.eq.f32.partialorder %v2851, 8.507059e+37
      %v2853 = vand.u32 %v2404, 2147483648
      %v2854 = vor.u32 1.1754944e-38, %v2853
      %v2855 = vsel %vm2852, %v2854, %v2850
      %v2856 = vmul.f32 1.0, %v2855
      %v2857 = vrcp.pop %v2405
      %v2858 = vmul.f32 %v2405, %v2857
      %v2859 = vsub.f32 1.0, %v2858
      %v2860 = vmul.f32 %v2857, %v2859
      %v2861 = vadd.f32 %v2857, %v2860
      %vm2862 = vweird.f32 %v2405
      %vm2863 = vweird.f32 %v2857
      %vm2864 = vmor %vm2862, %vm2863
      %v2865 = vsel %vm2864, %v2857, %v2861
      %v2866 = vand.u32 2147483647, %v2405
      %vm2867 = vcmp.eq.f32.partialorder %v2866, 8.507059e+37
      %v2868 = vand.u32 %v2405, 2147483648
      %v2869 = vor.u32 1.1754944e-38, %v2868
      %v2870 = vsel %vm2867, %v2869, %v2865
      %v2871 = vmul.f32 1.0, %v2870
      %v2872 = vrcp.pop %v2406
      %v2873 = vmul.f32 %v2406, %v2872
      %v2874 = vsub.f32 1.0, %v2873
      %v2875 = vmul.f32 %v2872, %v2874
      %v2876 = vadd.f32 %v2872, %v2875
      %vm2877 = vweird.f32 %v2406
      %vm2878 = vweird.f32 %v2872
      %vm2879 = vmor %vm2877, %vm2878
      %v2880 = vsel %vm2879, %v2872, %v2876
      %v2881 = vand.u32 2147483647, %v2406
      %vm2882 = vcmp.eq.f32.partialorder %v2881, 8.507059e+37
      %v2883 = vand.u32 %v2406, 2147483648
      %v2884 = vor.u32 1.1754944e-38, %v2883
      %v2885 = vsel %vm2882, %v2884, %v2880
      %v2886 = vmul.f32 1.0, %v2885
      %v2887 = vmul.f32 %v2247, %v2421
      %v2888 = vmul.f32 %v2248, %v2436
      %v2889 = vmul.f32 %v2249, %v2451
      %v2890 = vmul.f32 %v2250, %v2466
      %v2891 = vmul.f32 %v2251, %v2481
      %v2892 = vmul.f32 %v2252, %v2496
      %v2893 = vmul.f32 %v2253, %v2511
      %v2894 = vmul.f32 %v2254, %v2526
      %v2895 = vmul.f32 %v2255, %v2541
      %v2896 = vmul.f32 %v2256, %v2556
      %v2897 = vmul.f32 %v2257, %v2571
      %v2898 = vmul.f32 %v2258, %v2586
      %v2899 = vmul.f32 %v2259, %v2601
      %v2900 = vmul.f32 %v2260, %v2616
      %v2901 = vmul.f32 %v2261, %v2631
      %v2902 = vmul.f32 %v2262, %v2646
      %v2903 = vmul.f32 %v2263, %v2661
      %v2904 = vmul.f32 %v2264, %v2676
      %v2905 = vmul.f32 %v2265, %v2691
      %v2906 = vmul.f32 %v2266, %v2706
      %v2907 = vmul.f32 %v2267, %v2721
      %v2908 = vmul.f32 %v2268, %v2736
      %v2909 = vmul.f32 %v2269, %v2751
      %v2910 = vmul.f32 %v2270, %v2766
      %v2911 = vmul.f32 %v2271, %v2781
      %v2912 = vmul.f32 %v2272, %v2796
      %v2913 = vmul.f32 %v2273, %v2811
      %v2914 = vmul.f32 %v2274, %v2826
      %v2915 = vmul.f32 %v2275, %v2841
      %v2916 = vmul.f32 %v2276, %v2856
      %v2917 = vmul.f32 %v2277, %v2871
      %v2918 = vmul.f32 %v2278, %v2886
      %v2919 = vsel %vm1277, %v2887, 0.0
      %v2920 = vsel %vm1277, %v2888, 0.0
      %v2921 = vadd.f32 %v2919, %v2920
      %v2922 = vsel %vm1277, %v2889, 0.0
      %v2923 = vadd.f32 %v2921, %v2922
      %v2924 = vsel %vm1277, %v2890, 0.0
      %v2925 = vadd.f32 %v2923, %v2924
      %v2926 = vsel %vm1277, %v2891, 0.0
      %v2927 = vadd.f32 %v2925, %v2926
      %v2928 = vsel %vm1277, %v2892, 0.0
      %v2929 = vadd.f32 %v2927, %v2928
      %v2930 = vsel %vm1277, %v2893, 0.0
      %v2931 = vadd.f32 %v2929, %v2930
      %v2932 = vsel %vm1277, %v2894, 0.0
      %v2933 = vadd.f32 %v2931, %v2932
      %v2934 = vsel %vm1277, %v2895, 0.0
      %v2935 = vadd.f32 %v2933, %v2934
      %v2936 = vsel %vm1277, %v2896, 0.0
      %v2937 = vadd.f32 %v2935, %v2936
      %v2938 = vsel %vm1277, %v2897, 0.0
      %v2939 = vadd.f32 %v2937, %v2938
      %v2940 = vsel %vm1277, %v2898, 0.0
      %v2941 = vadd.f32 %v2939, %v2940
      %v2942 = vsel %vm1277, %v2899, 0.0
      %v2943 = vadd.f32 %v2941, %v2942
      %v2944 = vsel %vm1277, %v2900, 0.0
      %v2945 = vadd.f32 %v2943, %v2944
      %v2946 = vsel %vm1277, %v2901, 0.0
      %v2947 = vadd.f32 %v2945, %v2946
      %v2948 = vsel %vm1277, %v2902, 0.0
      %v2949 = vadd.f32 %v2947, %v2948
      %v2950 = vsel %vm1277, %v2903, 0.0
      %v2951 = vadd.f32 %v2949, %v2950
      %v2952 = vsel %vm1277, %v2904, 0.0
      %v2953 = vadd.f32 %v2951, %v2952
      %v2954 = vsel %vm1277, %v2905, 0.0
      %v2955 = vadd.f32 %v2953, %v2954
      %v2956 = vsel %vm1277, %v2906, 0.0
      %v2957 = vadd.f32 %v2955, %v2956
      %v2958 = vsel %vm1277, %v2907, 0.0
      %v2959 = vadd.f32 %v2957, %v2958
      %v2960 = vsel %vm1277, %v2908, 0.0
      %v2961 = vadd.f32 %v2959, %v2960
      %v2962 = vsel %vm1277, %v2909, 0.0
      %v2963 = vadd.f32 %v2961, %v2962
      %v2964 = vsel %vm1277, %v2910, 0.0
      %v2965 = vadd.f32 %v2963, %v2964
      %v2966 = vsel %vm1277, %v2911, 0.0
      %v2967 = vadd.f32 %v2965, %v2966
      %v2968 = vsel %vm1277, %v2912, 0.0
      %v2969 = vadd.f32 %v2967, %v2968
      %v2970 = vsel %vm1277, %v2913, 0.0
      %v2971 = vadd.f32 %v2969, %v2970
      %v2972 = vsel %vm1277, %v2914, 0.0
      %v2973 = vadd.f32 %v2971, %v2972
      %v2974 = vsel %vm1277, %v2915, 0.0
      %v2975 = vadd.f32 %v2973, %v2974
      %v2976 = vsel %vm1277, %v2916, 0.0
      %v2977 = vadd.f32 %v2975, %v2976
      %v2978 = vsel %vm1277, %v2917, 0.0
      %v2979 = vadd.f32 %v2977, %v2978
      %v2980 = vsel %vm1277, %v2918, 0.0
      %v2981 = vadd.f32 %v2979, %v2980
      %v2982 = vrot.slane %v2981, 4
      %v2983 = vadd.f32 %v2981, %v2982
      %v2984 = vrot.slane %v2983, 2
      %v2985 = vadd.f32 %v2983, %v2984
      %v2986 = vrot.slane %v2985, 1
      %v2987 = vadd.f32 %v2985, %v2986
      %v2988 = vmul.f32 %v2987, 0.00390625
      %v2989 = vld [vmem:[%s5] sm:$0xff]
      %v2990 = vld [vmem:[%s5 + $0x8] sm:$0xff]
      %v2991 = vld [vmem:[%s5 + $0x10] sm:$0xff]
      %v2992 = vld [vmem:[%s5 + $0x18] sm:$0xff]
      %v2993 = vld [vmem:[%s6] sm:$0x1]
      %v2995 = vsel %vm1277, %v2988, 0
      %2997 = vmatpush.msra.mxu0 0.0
      %2998 = vmatpush.msra.mxu0 0.0
      %2999 = vmatpush.msra.mxu0 0.0
      %3000 = vmatpush.msra.mxu0 0.0
      %3001 = vmatpush.msra.mxu0 0.0
      %3002 = vmatpush.msra.mxu0 0.0
      %3003 = vmatpush.msra.mxu0 0.0
      %3004 = vmatpush.msra.mxu0 0.0
      %3005 = vmatpush.msra.mxu0 0.0
      %3006 = vmatpush.msra.mxu0 0.0
      %3007 = vmatpush.msra.mxu0 0.0
      %3008 = vmatpush.msra.mxu0 0.0
      %3009 = vmatpush.msra.mxu0 %v2992
      %3010 = vmatpush.msra.mxu0 %v2991
      %3011 = vmatpush.msra.mxu0 %v2990
      %3012 = vmatpush.msra.mxu0 %v2989
      %3013 = vmatmul.f32.gmra.mxu0 %v2995
      %v3014 = vpop.f32.mrf.mxu0
      %v3015 = vadd.f32 %v2993, %v3014
      %3016 = vdwg.mxu0
      %v3017 = vxor.u32 %v3015, 2147483648
      %v3018 = vmul.f32 %v3017, 1.442695
      %v3019 = vpow.pop %v3018
      %v3020 = vadd.f32 %v3019, 1.0
      %v3021 = vrcp.pop %v3020
      %v3022 = vmul.f32 %v3020, %v3021
      %v3023 = vsub.f32 1.0, %v3022
      %v3024 = vmul.f32 %v3021, %v3023
      %v3025 = vadd.f32 %v3021, %v3024
      %vm3026 = vweird.f32 %v3020
      %vm3027 = vweird.f32 %v3021
      %vm3028 = vmor %vm3026, %vm3027
      %v3029 = vsel %vm3028, %v3021, %v3025
      %v3030 = vand.u32 2147483647, %v3020
      %vm3031 = vcmp.eq.f32.partialorder %v3030, 8.507059e+37
      %v3032 = vand.u32 %v3020, 2147483648
      %v3033 = vor.u32 1.1754944e-38, %v3032
      %v3034 = vsel %vm3031, %v3033, %v3029
      %v3035 = vmul.f32 1.0, %v3034
      %v3036 = vmul.f32 %v3015, %v3035
      %v3037 = vld [vmem:[%s7] sm:$0xf]
      %v3038 = vld [vmem:[%s8] sm:$0x1]
      %vm3039 = vcmask 31744
      %v3041 = vsel %vm3039, %v3036, 0
      %vm3043 = vcmask 1043456
      %v3045 = vsel %vm3043, %v3037, 0
      %3047 = vmatpush.msra.mxu0 0.0
      %3048 = vmatpush.msra.mxu0 0.0
      %3049 = vmatpush.msra.mxu0 0.0
      %3050 = vmatpush.msra.mxu0 0.0
      %3051 = vmatpush.msra.mxu0 0.0
      %3052 = vmatpush.msra.mxu0 0.0
      %3053 = vmatpush.msra.mxu0 0.0
      %3054 = vmatpush.msra.mxu0 0.0
      %3055 = vmatpush.msra.mxu0 0.0
      %3056 = vmatpush.msra.mxu0 0.0
      %3057 = vmatpush.msra.mxu0 0.0
      %3058 = vmatpush.msra.mxu0 0.0
      %3059 = vmatpush.msra.mxu0 0.0
      %3060 = vmatpush.msra.mxu0 0.0
      %3061 = vmatpush.msra.mxu0 0.0
      %3062 = vmatpush.msra.mxu0 %v3045
      %3063 = vmatmul.f32.gmra.mxu0 %v3041
      %v3064 = vpop.f32.mrf.mxu0
      %v3065 = vadd.f32 %v3038, %v3064
      %3066 = vdwg.mxu0
      %v3067 = vxor.u32 %v3065, 2147483648
      %v3068 = vmul.f32 %v3067, 1.442695
      %v3069 = vpow.pop %v3068
      %v3070 = vadd.f32 %v3069, 1.0
      %v3071 = vrcp.pop %v3070
      %v3072 = vmul.f32 %v3070, %v3071
      %v3073 = vsub.f32 1.0, %v3072
      %v3074 = vmul.f32 %v3071, %v3073
      %v3075 = vadd.f32 %v3071, %v3074
      %vm3076 = vweird.f32 %v3070
      %vm3077 = vweird.f32 %v3071
      %vm3078 = vmor %vm3076, %vm3077
      %v3079 = vsel %vm3078, %v3071, %v3075
      %v3080 = vand.u32 2147483647, %v3070
      %vm3081 = vcmp.eq.f32.partialorder %v3080, 8.507059e+37
      %v3082 = vand.u32 %v3070, 2147483648
      %v3083 = vor.u32 1.1754944e-38, %v3082
      %v3084 = vsel %vm3081, %v3083, %v3079
      %v3085 = vmul.f32 1.0, %v3084
      %v3086 = vperm.slane %v3085, 0
      %v3087 = vmul.f32 %v2887, %v3086
      %v3088 = vmul.f32 %v2888, %v3086
      %v3089 = vmul.f32 %v2889, %v3086
      %v3090 = vmul.f32 %v2890, %v3086
      %v3091 = vmul.f32 %v2891, %v3086
      %v3092 = vmul.f32 %v2892, %v3086
      %v3093 = vmul.f32 %v2893, %v3086
      %v3094 = vmul.f32 %v2894, %v3086
      %v3095 = vmul.f32 %v2895, %v3086
      %v3096 = vmul.f32 %v2896, %v3086
      %v3097 = vmul.f32 %v2897, %v3086
      %v3098 = vmul.f32 %v2898, %v3086
      %v3099 = vmul.f32 %v2899, %v3086
      %v3100 = vmul.f32 %v2900, %v3086
      %v3101 = vmul.f32 %v2901, %v3086
      %v3102 = vmul.f32 %v2902, %v3086
      %v3103 = vmul.f32 %v2903, %v3086
      %v3104 = vmul.f32 %v2904, %v3086
      %v3105 = vmul.f32 %v2905, %v3086
      %v3106 = vmul.f32 %v2906, %v3086
      %v3107 = vmul.f32 %v2907, %v3086
      %v3108 = vmul.f32 %v2908, %v3086
      %v3109 = vmul.f32 %v2909, %v3086
      %v3110 = vmul.f32 %v2910, %v3086
      %v3111 = vmul.f32 %v2911, %v3086
      %v3112 = vmul.f32 %v2912, %v3086
      %v3113 = vmul.f32 %v2913, %v3086
      %v3114 = vmul.f32 %v2914, %v3086
      %v3115 = vmul.f32 %v2915, %v3086
      %v3116 = vmul.f32 %v2916, %v3086
      %v3117 = vmul.f32 %v2917, %v3086
      %v3118 = vmul.f32 %v2918, %v3086
      %v3119 = vld [vmem:[%s9] sm:$0xff]
      %v3120 = vld [vmem:[%s9 + $0x8] sm:$0xff]
      %v3121 = vld [vmem:[%s9 + $0x10] sm:$0xff]
      %v3122 = vld [vmem:[%s9 + $0x18] sm:$0xff]
      %v3123 = vld [vmem:[%s10] sm:$0x1]
      %v3125 = vperm.slane %v3123, 0
      %v3128 = vsel %vm1277, %v3087, 0
      %v3131 = vsel %vm1277, %v3088, 0
      %v3134 = vsel %vm1277, %v3089, 0
      %v3137 = vsel %vm1277, %v3090, 0
      %v3140 = vsel %vm1277, %v3091, 0
      %v3143 = vsel %vm1277, %v3092, 0
      %v3146 = vsel %vm1277, %v3093, 0
      %v3149 = vsel %vm1277, %v3094, 0
      %v3152 = vsel %vm1277, %v3095, 0
      %v3155 = vsel %vm1277, %v3096, 0
      %v3158 = vsel %vm1277, %v3097, 0
      %v3161 = vsel %vm1277, %v3098, 0
      %v3164 = vsel %vm1277, %v3099, 0
      %v3167 = vsel %vm1277, %v3100, 0
      %v3170 = vsel %vm1277, %v3101, 0
      %v3173 = vsel %vm1277, %v3102, 0
      %v3176 = vsel %vm1277, %v3103, 0
      %v3179 = vsel %vm1277, %v3104, 0
      %v3182 = vsel %vm1277, %v3105, 0
      %v3185 = vsel %vm1277, %v3106, 0
      %v3188 = vsel %vm1277, %v3107, 0
      %v3191 = vsel %vm1277, %v3108, 0
      %v3194 = vsel %vm1277, %v3109, 0
      %v3197 = vsel %vm1277, %v3110, 0
      %v3200 = vsel %vm1277, %v3111, 0
      %v3203 = vsel %vm1277, %v3112, 0
      %v3206 = vsel %vm1277, %v3113, 0
      %v3209 = vsel %vm1277, %v3114, 0
      %v3212 = vsel %vm1277, %v3115, 0
      %v3215 = vsel %vm1277, %v3116, 0
      %v3218 = vsel %vm1277, %v3117, 0
      %v3221 = vsel %vm1277, %v3118, 0
      %3223 = vmatpush.msra.mxu0 0.0
      %3224 = vmatpush.msra.mxu0 0.0
      %3225 = vmatpush.msra.mxu0 0.0
      %3226 = vmatpush.msra.mxu0 0.0
      %3227 = vmatpush.msra.mxu0 0.0
      %3228 = vmatpush.msra.mxu0 0.0
      %3229 = vmatpush.msra.mxu0 0.0
      %3230 = vmatpush.msra.mxu0 0.0
      %3231 = vmatpush.msra.mxu0 0.0
      %3232 = vmatpush.msra.mxu0 0.0
      %3233 = vmatpush.msra.mxu0 0.0
      %3234 = vmatpush.msra.mxu0 0.0
      %3235 = vmatpush.msra.mxu0 %v3122
      %3236 = vmatpush.msra.mxu0 %v3121
      %3237 = vmatpush.msra.mxu0 %v3120
      %3238 = vmatpush.msra.mxu0 %v3119
      %3239 = vmatmul.f32.gmra.mxu0 %v3128
      %v3240 = vpop.f32.mrf.mxu0
      %v3241 = vadd.f32 %v3125, %v3240
      %3242 = vmatmul.f32.gmra.mxu0 %v3131
      %v3243 = vpop.f32.mrf.mxu0
      %v3244 = vadd.f32 %v3125, %v3243
      %3245 = vmatmul.f32.gmra.mxu0 %v3134
      %v3246 = vpop.f32.mrf.mxu0
      %v3247 = vadd.f32 %v3125, %v3246
      %3248 = vmatmul.f32.gmra.mxu0 %v3137
      %v3249 = vpop.f32.mrf.mxu0
      %v3250 = vadd.f32 %v3125, %v3249
      %3251 = vmatmul.f32.gmra.mxu0 %v3140
      %v3252 = vpop.f32.mrf.mxu0
      %v3253 = vadd.f32 %v3125, %v3252
      %3254 = vmatmul.f32.gmra.mxu0 %v3143
      %v3255 = vpop.f32.mrf.mxu0
      %v3256 = vadd.f32 %v3125, %v3255
      %3257 = vmatmul.f32.gmra.mxu0 %v3146
      %v3258 = vpop.f32.mrf.mxu0
      %v3259 = vadd.f32 %v3125, %v3258
      %3260 = vmatmul.f32.gmra.mxu0 %v3149
      %v3261 = vpop.f32.mrf.mxu0
      %v3262 = vadd.f32 %v3125, %v3261
      %3263 = vmatmul.f32.gmra.mxu0 %v3152
      %v3264 = vpop.f32.mrf.mxu0
      %v3265 = vadd.f32 %v3125, %v3264
      %3266 = vmatmul.f32.gmra.mxu0 %v3155
      %v3267 = vpop.f32.mrf.mxu0
      %v3268 = vadd.f32 %v3125, %v3267
      %3269 = vmatmul.f32.gmra.mxu0 %v3158
      %v3270 = vpop.f32.mrf.mxu0
      %v3271 = vadd.f32 %v3125, %v3270
      %3272 = vmatmul.f32.gmra.mxu0 %v3161
      %v3273 = vpop.f32.mrf.mxu0
      %v3274 = vadd.f32 %v3125, %v3273
      %3275 = vmatmul.f32.gmra.mxu0 %v3164
      %v3276 = vpop.f32.mrf.mxu0
      %v3277 = vadd.f32 %v3125, %v3276
      %3278 = vmatmul.f32.gmra.mxu0 %v3167
      %v3279 = vpop.f32.mrf.mxu0
      %v3280 = vadd.f32 %v3125, %v3279
      %3281 = vmatmul.f32.gmra.mxu0 %v3170
      %v3282 = vpop.f32.mrf.mxu0
      %v3283 = vadd.f32 %v3125, %v3282
      %3284 = vmatmul.f32.gmra.mxu0 %v3173
      %v3285 = vpop.f32.mrf.mxu0
      %v3286 = vadd.f32 %v3125, %v3285
      %3287 = vmatmul.f32.gmra.mxu0 %v3176
      %v3288 = vpop.f32.mrf.mxu0
      %v3289 = vadd.f32 %v3125, %v3288
      %3290 = vmatmul.f32.gmra.mxu0 %v3179
      %v3291 = vpop.f32.mrf.mxu0
      %v3292 = vadd.f32 %v3125, %v3291
      %3293 = vmatmul.f32.gmra.mxu0 %v3182
      %v3294 = vpop.f32.mrf.mxu0
      %v3295 = vadd.f32 %v3125, %v3294
      %3296 = vmatmul.f32.gmra.mxu0 %v3185
      %v3297 = vpop.f32.mrf.mxu0
      %v3298 = vadd.f32 %v3125, %v3297
      %3299 = vmatmul.f32.gmra.mxu0 %v3188
      %v3300 = vpop.f32.mrf.mxu0
      %v3301 = vadd.f32 %v3125, %v3300
      %3302 = vmatmul.f32.gmra.mxu0 %v3191
      %v3303 = vpop.f32.mrf.mxu0
      %v3304 = vadd.f32 %v3125, %v3303
      %3305 = vmatmul.f32.gmra.mxu0 %v3194
      %v3306 = vpop.f32.mrf.mxu0
      %v3307 = vadd.f32 %v3125, %v3306
      %3308 = vmatmul.f32.gmra.mxu0 %v3197
      %v3309 = vpop.f32.mrf.mxu0
      %v3310 = vadd.f32 %v3125, %v3309
      %3311 = vmatmul.f32.gmra.mxu0 %v3200
      %v3312 = vpop.f32.mrf.mxu0
      %v3313 = vadd.f32 %v3125, %v3312
      %3314 = vmatmul.f32.gmra.mxu0 %v3203
      %v3315 = vpop.f32.mrf.mxu0
      %v3316 = vadd.f32 %v3125, %v3315
      %3317 = vmatmul.f32.gmra.mxu0 %v3206
      %v3318 = vpop.f32.mrf.mxu0
      %v3319 = vadd.f32 %v3125, %v3318
      %3320 = vmatmul.f32.gmra.mxu0 %v3209
      %v3321 = vpop.f32.mrf.mxu0
      %v3322 = vadd.f32 %v3125, %v3321
      %3323 = vmatmul.f32.gmra.mxu0 %v3212
      %v3324 = vpop.f32.mrf.mxu0
      %v3325 = vadd.f32 %v3125, %v3324
      %3326 = vmatmul.f32.gmra.mxu0 %v3215
      %v3327 = vpop.f32.mrf.mxu0
      %v3328 = vadd.f32 %v3125, %v3327
      %3329 = vmatmul.f32.gmra.mxu0 %v3218
      %v3330 = vpop.f32.mrf.mxu0
      %v3331 = vadd.f32 %v3125, %v3330
      %3332 = vmatmul.f32.gmra.mxu0 %v3221
      %v3333 = vpop.f32.mrf.mxu0
      %v3334 = vadd.f32 %v3125, %v3333
      %3335 = vdwg.mxu0
      %v3336 = vadd.f32 %v3241, %v390
      %v3337 = vadd.f32 %v3244, %v391
      %v3338 = vadd.f32 %v3247, %v392
      %v3339 = vadd.f32 %v3250, %v393
      %v3340 = vadd.f32 %v3253, %v394
      %v3341 = vadd.f32 %v3256, %v395
      %v3342 = vadd.f32 %v3259, %v396
      %v3343 = vadd.f32 %v3262, %v397
      %v3344 = vadd.f32 %v3265, %v398
      %v3345 = vadd.f32 %v3268, %v399
      %v3346 = vadd.f32 %v3271, %v400
      %v3347 = vadd.f32 %v3274, %v401
      %v3348 = vadd.f32 %v3277, %v402
      %v3349 = vadd.f32 %v3280, %v403
      %v3350 = vadd.f32 %v3283, %v404
      %v3351 = vadd.f32 %v3286, %v405
      %v3352 = vadd.f32 %v3289, %v406
      %v3353 = vadd.f32 %v3292, %v407
      %v3354 = vadd.f32 %v3295, %v408
      %v3355 = vadd.f32 %v3298, %v409
      %v3356 = vadd.f32 %v3301, %v410
      %v3357 = vadd.f32 %v3304, %v411
      %v3358 = vadd.f32 %v3307, %v412
      %v3359 = vadd.f32 %v3310, %v413
      %v3360 = vadd.f32 %v3313, %v414
      %v3361 = vadd.f32 %v3316, %v415
      %v3362 = vadd.f32 %v3319, %v416
      %v3363 = vadd.f32 %v3322, %v417
      %v3364 = vadd.f32 %v3325, %v418
      %v3365 = vadd.f32 %v3328, %v419
      %v3366 = vadd.f32 %v3331, %v420
      %v3367 = vadd.f32 %v3334, %v421
      %3368 = vst.msk [vmem:[%s388] sm:$0xff] %vm427, %v3336
      %3369 = vst.msk [vmem:[%s388 + $0x8] sm:$0xff] %vm427, %v3337
      %3370 = vst.msk [vmem:[%s388 + $0x10] sm:$0xff] %vm427, %v3338
      %3371 = vst.msk [vmem:[%s388 + $0x18] sm:$0xff] %vm427, %v3339
      %3372 = vst.msk [vmem:[%s388 + $0x20] sm:$0xff] %vm427, %v3340
      %3373 = vst.msk [vmem:[%s388 + $0x28] sm:$0xff] %vm427, %v3341
      %3374 = vst.msk [vmem:[%s388 + $0x30] sm:$0xff] %vm427, %v3342
      %3375 = vst.msk [vmem:[%s388 + $0x38] sm:$0xff] %vm427, %v3343
      %3376 = vst.msk [vmem:[%s388 + $0x40] sm:$0xff] %vm427, %v3344
      %3377 = vst.msk [vmem:[%s388 + $0x48] sm:$0xff] %vm427, %v3345
      %3378 = vst.msk [vmem:[%s388 + $0x50] sm:$0xff] %vm427, %v3346
      %3379 = vst.msk [vmem:[%s388 + $0x58] sm:$0xff] %vm427, %v3347
      %3380 = vst.msk [vmem:[%s388 + $0x60] sm:$0xff] %vm427, %v3348
      %3381 = vst.msk [vmem:[%s388 + $0x68] sm:$0xff] %vm427, %v3349
      %3382 = vst.msk [vmem:[%s388 + $0x70] sm:$0xff] %vm427, %v3350
      %3383 = vst.msk [vmem:[%s388 + $0x78] sm:$0xff] %vm427, %v3351
      %3384 = vst.msk [vmem:[%s388 + $0x80] sm:$0xff] %vm427, %v3352
      %3385 = vst.msk [vmem:[%s388 + $0x88] sm:$0xff] %vm427, %v3353
      %3386 = vst.msk [vmem:[%s388 + $0x90] sm:$0xff] %vm427, %v3354
      %3387 = vst.msk [vmem:[%s388 + $0x98] sm:$0xff] %vm427, %v3355
      %3388 = vst.msk [vmem:[%s388 + $0xa0] sm:$0xff] %vm427, %v3356
      %3389 = vst.msk [vmem:[%s388 + $0xa8] sm:$0xff] %vm427, %v3357
      %3390 = vst.msk [vmem:[%s388 + $0xb0] sm:$0xff] %vm427, %v3358
      %3391 = vst.msk [vmem:[%s388 + $0xb8] sm:$0xff] %vm427, %v3359
      %3392 = vst.msk [vmem:[%s388 + $0xc0] sm:$0xff] %vm427, %v3360
      %3393 = vst.msk [vmem:[%s388 + $0xc8] sm:$0xff] %vm427, %v3361
      %3394 = vst.msk [vmem:[%s388 + $0xd0] sm:$0xff] %vm427, %v3362
      %3395 = vst.msk [vmem:[%s388 + $0xd8] sm:$0xff] %vm427, %v3363
      %3396 = vst.msk [vmem:[%s388 + $0xe0] sm:$0xff] %vm427, %v3364
      %3397 = vst.msk [vmem:[%s388 + $0xe8] sm:$0xff] %vm427, %v3365
      %3398 = vst.msk [vmem:[%s388 + $0xf0] sm:$0xff] %vm427, %v3366
      %3399 = vst.msk [vmem:[%s388 + $0xf8] sm:$0xff] %vm427, %v3367
      %s3400 = smul.u32 32, %s22
      %p3401 = scmp.lt.s32.totalorder %s3400, 63
      %s3402 = scalar_select %p3401, %s3400, 63
      %s3403 = smul.addr %s3402, 8
      %s3404 = scalar_lea.vmem %s11, %s3403
      // Predicated region
      $region65: #{mbconv_forward.1} parent=63 // pred_check
        %p3405 = pneg %p276
      $region66: #{mbconv_forward.1} parent=63 // pred_check_branch
        %3407 = sbr.rel (%p3405) target = $region68
      $region67: #{mbconv_forward.1} parent=63 // pred_region
        %s3408 = smul.u32 32, %s22
      $region68: #{mbconv_forward.1} parent=63 // pred_fallthru
        _
    $region64: #{mbconv_forward.1} parent=5 // pred_fallthru
      _
    %p3409 = scmp.le.s32.totalorder 2, %s17
    // Predicated region
    $region69: #{mbconv_forward.1} parent=5 // pred_check
      %p3410 = pneg %p3409
    $region70: #{mbconv_forward.1} parent=5 // pred_check_branch
      %3412 = sbr.rel (%p3410) target = $region72
    $region71: #{mbconv_forward.1} parent=5 // pred_region
      %s3413 = ssub.s32 %s17, 2
      // Predicated region
      $region73: #{mbconv_forward.1} parent=71 // pred_check
        %p3414 = pneg %p282
      $region74: #{mbconv_forward.1} parent=71 // pred_check_branch
        %3416 = sbr.rel (%p3414) target = $region76
      $region75: #{mbconv_forward.1} parent=71 // pred_region
        %s3417 = smul.u32 32, %s23
        %p3418 = scmp.lt.s32.totalorder %s3417, 63
        %s3419 = scalar_select %p3418, %s3417, 63
        %s3420 = smul.addr %s3419, 8
        %s3421 = scalar_lea.vmem %s11, %s3420
      $region76: #{mbconv_forward.1} parent=71 // pred_fallthru
        _
    $region72: #{mbconv_forward.1} parent=5 // pred_fallthru
      _
  $region6: #{mbconv_forward.1} parent=0 // loop_footer
    %s21 = sadd.s32 1, %s17
  $region7: #{mbconv_forward.1} parent=0 // loop_footer_branch
    %16 = sbr.rel target = $region3
  $region8: #{mbconv_forward.1} parent=0 // loop_exit
    _

</llo_original>
